<compile_context>
chip_gen: v7x
topology: tpu7x:2x2x1
jax: 0.10.0
libtpu: 0.0.40
codegen_flags: <defaults>
</compile_context>

<pallas_src>
import functools

import numpy as np

import jax
import jax.numpy as jnp
from jax import lax
from jax.experimental import pallas as pl
from jax.experimental.pallas import tpu as pltpu


# ----------------------------------------------------------------------------
# In-kernel helpers (operate on values, not refs)
# ----------------------------------------------------------------------------

def _rms(x, w, eps):
    ms = jnp.mean(x * x, axis=-1, keepdims=True)
    return x * lax.rsqrt(ms + eps) * w


# ----------------------------------------------------------------------------
# Fused per-block kernel: cross-attn + convhydra + row0 swap + self-attn + MLP
# ----------------------------------------------------------------------------

def _block_kernel(x_ref,
                  grep_ref, hsum_ref, hbrd_ref,
                  ca_nw_ref, ca_wq_ref, ca_bq_ref, ca_wkv_ref, ca_bkv_ref,
                  ca_wo_ref, ca_bo_ref,
                  ch_wi_ref, ch_bi_ref, ch_cw_ref, ch_cb_ref, ch_wo_ref,
                  ch_bo_ref, n1_ref,
                  sa_nw_ref, sa_wqkv_ref, sa_bqkv_ref, sa_wo_ref, sa_bo_ref,
                  mlp_w1_ref, mlp_b1_ref, mlp_w2_ref, mlp_b2_ref, n2_ref,
                  o_ref, *, n_q, n_kv, dh, conv_k, conv_c, eps):
    f32 = jnp.float32
    bf16 = jnp.bfloat16
    N, L, D = x_ref.shape
    d_attn = n_q * dh
    kv_dim = n_kv * dh
    scale = 1.0 / (dh ** 0.5)

    x = x_ref[...]                                   # (N, L, D) f32
    xf = x.reshape(N * L, D)                         # layout-preserving merge

    # ---- MSA cross attention (column attention over the N alignment rows) ---
    h = _rms(xf, ca_nw_ref[...], eps)                # (N*L, D)
    kv = jnp.dot(h.astype(bf16), ca_wkv_ref[...],
                 preferred_element_type=f32) + ca_bkv_ref[...]      # (N*L, 2*kv)
    q = jnp.dot(h[0:L, :].astype(bf16), ca_wq_ref[...],
                preferred_element_type=f32) + ca_bq_ref[...]        # (L, d_attn)
    q = q * scale
    # GQA group -> per-head lane replication via a 0/1 matrix (exact, MXU).
    grep = grep_ref[...]                             # (kv_dim, d_attn)
    k_rep = jnp.dot(kv[:, :kv_dim], grep, preferred_element_type=f32)
    v_rep = jnp.dot(kv[:, kv_dim:], grep, preferred_element_type=f32)
    # all-head scores in one pass: per-head dh segment sum via hsum (d_attn,n_q)
    prod = (k_rep.reshape(N, L, d_attn) * q[None, :, :]).reshape(N * L, d_attn)
    s = jnp.dot(prod, hsum_ref[...], preferred_element_type=f32)    # (N*L, n_q)
    s3 = s.reshape(N, L, n_q)
    s3 = s3 - jnp.max(s3, axis=0, keepdims=True)     # softmax over the N rows
    p3 = jnp.exp(s3)
    p3 = p3 / jnp.sum(p3, axis=0, keepdims=True)     # exact division
    # broadcast per-head probs back to per-lane width via hbrd (n_q, d_attn)
    p_rep = jnp.dot(p3.reshape(N * L, n_q), hbrd_ref[...],
                    preferred_element_type=f32)      # (N*L, d_attn)
    attn = jnp.sum((p_rep * v_rep).reshape(N, L, d_attn), axis=0)   # (L, d_attn)
    ca_out = jnp.dot(attn.astype(bf16), ca_wo_ref[...],
                     preferred_element_type=f32) + ca_bo_ref[...]   # (L, D)
    x_main = ca_out + xf[0:L, :]                     # residual with row 0

    # ---- ConvHydra on the consensus row (stays in VMEM) ----------------------
    uz = jnp.dot(x_main.astype(bf16), ch_wi_ref[...],
                 preferred_element_type=f32) + ch_bi_ref[...]       # (L, 2C)
    u = uz[:, :conv_c]
    z = uz[:, conv_c:]
    cw = ch_cw_ref[...]                              # (K, C)
    row_idx = lax.broadcasted_iota(jnp.int32, (L, 1), 0)
    acc = ch_cb_ref[...]                             # (1, C), broadcasts up
    for k in range(conv_k):                          # static unroll over taps
        shift = conv_k - 1 - k
        if shift == 0:
            tap = u
        else:
            tap = pltpu.roll(u, shift, axis=0)       # XLU sublane rotate
            tap = jnp.where(row_idx >= shift, tap, 0.0)   # causal zero fill
        acc = acc + tap * cw[k:k + 1, :]
    u_act = acc * jax.nn.sigmoid(acc)                # SiLU(conv(u))
    y = u_act * (z * jax.nn.sigmoid(z))              # gate with SiLU(z)
    ch_out = jnp.dot(y.astype(bf16), ch_wo_ref[...],
                     preferred_element_type=f32) + ch_bo_ref[...]
    x_row0 = _rms(ch_out + x_main, n1_ref[...], eps)                # (L, D)

    # ---- row-0 swap (torch: x[:, 0] = x_out_main) + MSA self attention -------
    if N > 1:
        x_in = jnp.concatenate([x_row0, xf[L:, :]], axis=0)         # (N*L, D)
    else:
        x_in = x_row0
    h2 = _rms(x_in, sa_nw_ref[...], eps)
    qkv = jnp.dot(h2.astype(bf16), sa_wqkv_ref[...],
                  preferred_element_type=f32) + sa_bqkv_ref[...]    # (N*L, q+2kv)
    rep = n_q // n_kv
    head_outs = []
    for hq in range(n_q):                            # static unroll, N-batched
        g = hq // rep
        q_h = (qkv[:, hq * dh:(hq + 1) * dh] * scale).astype(bf16).reshape(N, L, dh)
        k_h = qkv[:, d_attn + g * dh:
                  d_attn + (g + 1) * dh].astype(bf16).reshape(N, L, dh)
        v_h = qkv[:, d_attn + kv_dim + g * dh:
                  d_attn + kv_dim + (g + 1) * dh].astype(bf16).reshape(N, L, dh)
        sc = lax.dot_general(q_h, k_h, (((2,), (2,)), ((0,), (0,))),
                             preferred_element_type=f32)            # (N, L, L)
        sc = sc - jnp.max(sc, axis=-1, keepdims=True)
        pr = jnp.exp(sc)
        pr = pr / jnp.sum(pr, axis=-1, keepdims=True)               # exact div
        head_outs.append(lax.dot_general(pr.astype(bf16), v_h,
                                         (((2,), (1,)), ((0,), (0,))),
                                         preferred_element_type=f32))
    o_attn = jnp.concatenate(head_outs, axis=-1).reshape(N * L, d_attn)
    sa_out = jnp.dot(o_attn.astype(bf16), sa_wo_ref[...],
                     preferred_element_type=f32) + sa_bo_ref[...]
    x_sa = sa_out + x_in                             # (N*L, D)

    # ---- MLP + residual + norm2 ----------------------------------------------
    m1 = jnp.dot(x_sa.astype(bf16), mlp_w1_ref[...],
                 preferred_element_type=f32) + mlp_b1_ref[...]
    m1 = m1 * jax.nn.sigmoid(m1)
    m2 = jnp.dot(m1.astype(bf16), mlp_w2_ref[...],
                 preferred_element_type=f32) + mlp_b2_ref[...]
    out = _rms(m2 + x_sa, n2_ref[...], eps)
    o_ref[...] = out.reshape(N, L, D)


def _lm_head_kernel(x_ref, w_ref, b_ref, o_ref):
    o_ref[...] = jnp.dot(x_ref[...].astype(jnp.bfloat16), w_ref[...],
                         preferred_element_type=jnp.float32) + b_ref[...]


# ----------------------------------------------------------------------------
# Tile picker: bounded, >=2 grid steps where possible, tail handled by padding
# ----------------------------------------------------------------------------

def _pick_tile(m, unit, target, min_steps):
    if m <= unit:
        return m
    cap = min(target, max(unit, -(-m // min_steps)))   # ceil(m / min_steps)
    return max(unit, (cap // unit) * unit)


# ----------------------------------------------------------------------------
# Wrappers
# ----------------------------------------------------------------------------

def _gqa_mats(n_q, n_kv, dh):
    """Constant 0/1 matrices: GQA lane replication, head segment-sum, and its
    transpose (prob broadcast).  Built once at trace time (tiny)."""
    rep = n_q // n_kv
    sel = np.repeat(np.eye(n_kv, dtype=np.float32), rep, axis=1)    # (n_kv, n_q)
    grep = np.kron(sel, np.eye(dh, dtype=np.float32))               # (kv, d_attn)
    hsum = np.kron(np.eye(n_q, dtype=np.float32),
                   np.ones((dh, 1), np.float32))                    # (d_attn, n_q)
    return jnp.asarray(grep), jnp.asarray(hsum), jnp.asarray(hsum.T)


def msa_block(p, x, cfg):
    """One fused pallas_call per MSAMambaV2Block, grid over the batch."""
    B, N, L, D = x.shape
    d_attn = cfg["d_attn"] or D
    n_q, n_kv = cfg["n_query"], cfg["n_kv"]
    dh = d_attn // n_q
    C = cfg["expand"] * D
    K = cfg["d_conv"]
    grep, hsum, hbrd = _gqa_mats(n_q, n_kv, dh)

    def bf(a):  # f32 master weights, bf16 at the kernel boundary
        return a.astype(jnp.bfloat16)

    ca, sa, ch, mlp = p["ca"], p["sa"], p["ch"], p["mlp"]
    weights = [
        grep, hsum, hbrd,
        ca["norm_w"], bf(ca["wq"]), ca["bq"], bf(ca["wkv"]), ca["bkv"],
        bf(ca["wo"]), ca["bo"],
        bf(ch["w_in"]), ch["b_in"], ch["conv_w"], ch["conv_b"],
        bf(ch["w_out"]), ch["b_out"], p["norm1_w"],
        sa["norm_w"], bf(sa["wqkv"]), sa["bqkv"], bf(sa["wo"]), sa["bo"],
        bf(mlp["w1"]), mlp["b1"], bf(mlp["w2"]), mlp["b2"], p["norm2_w"],
    ]
    in_specs = [pl.BlockSpec((None, N, L, D), lambda b: (b, 0, 0, 0))]
    in_specs += [pl.BlockSpec(w.shape, lambda b: (0, 0)) for w in weights]

    kern = functools.partial(_block_kernel, n_q=n_q, n_kv=n_kv, dh=dh,
                             conv_k=K, conv_c=C, eps=cfg["norm_eps"])
    return pl.pallas_call(
        kern,
        grid=(B,),
        in_specs=in_specs,
        out_specs=pl.BlockSpec((None, N, L, D), lambda b: (b, 0, 0, 0)),
        out_shape=jax.ShapeDtypeStruct((B, N, L, D), jnp.float32),
        compiler_params=pltpu.CompilerParams(dimension_semantics=("parallel",)),
    )(x, *weights)


def lm_head(x, w, b):
    B, N, L, D = x.shape
    V = w.shape[1]
    M = B * N * L
    x2 = x.reshape(M, D)
    tm = _pick_tile(M, 8, 512, 2)      # >=2 parallel steps (both v7x cores)
    tv = _pick_tile(V, 128, 512, 1)
    Mp = pl.cdiv(M, tm) * tm
    Vp = pl.cdiv(V, tv) * tv
    if Mp != M:
        x2 = jnp.pad(x2, ((0, Mp - M), (0, 0)))
    wb = w.astype(jnp.bfloat16)
    bb = b
    if Vp != V:
        wb = jnp.pad(wb, ((0, 0), (0, Vp - V)))
        bb = jnp.pad(b, ((0, 0), (0, Vp - V)))
    out = pl.pallas_call(
        _lm_head_kernel,
        grid=(Mp // tm, Vp // tv),
        in_specs=[pl.BlockSpec((tm, D), lambda i, j: (i, 0)),
                  pl.BlockSpec((D, tv), lambda i, j: (0, j)),
                  pl.BlockSpec((1, tv), lambda i, j: (0, j))],
        out_specs=pl.BlockSpec((tm, tv), lambda i, j: (i, j)),
        out_shape=jax.ShapeDtypeStruct((Mp, Vp), jnp.float32),
        compiler_params=pltpu.CompilerParams(
            dimension_semantics=("parallel", "parallel")),
    )(x2, wb, bb)
    return out[:M, :V].reshape(B, N, L, V)


def model_forward(params, tokens, cfg):
    # tokens: int32 (B, N, L); embedding gather is glue outside Pallas.
    x = jnp.take(params["embed"], tokens, axis=0)    # (B, N, L, D)
    # classification=False in the MLM path -> cls-token write is skipped.
    for bp in params["blocks"]:
        x = msa_block(bp, x, cfg)
    return lm_head(x, params["lm_w"], params["lm_b"])   # (B, N, L, vocab)


# ----------------------------------------------------------------------------
# Deterministic parameter init (synthetic; f32 masters, not a checkpoint load)
# ----------------------------------------------------------------------------

def _init_linear(key, din, dout, scale=0.05):
    w = scale * jax.random.normal(key, (din, dout), jnp.float32)
    b = jnp.zeros((1, dout), jnp.float32)
    return w, b


def init_params(key, cfg):
    D = cfg["d_model"]
    V = cfg["vocab_size"]
    d_attn = cfg["d_attn"] or D
    n_q, n_kv = cfg["n_query"], cfg["n_kv"]
    dh = d_attn // n_q
    kv_dim = n_kv * dh
    C = cfg["expand"] * D
    H = cfg["mlp_expand"] * D
    K = cfg["d_conv"]

    top = jax.random.split(key, 4 + cfg["n_layers"])
    params = {
        "embed": 0.05 * jax.random.normal(top[0], (V, D), jnp.float32),
        "cls": jax.random.normal(top[1], (D,), jnp.float32),  # unused (MLM path)
    }
    params["lm_w"], params["lm_b"] = _init_linear(top[2], D, V)

    def init_cross(k):
        ks = jax.random.split(k, 4)
        wq, bq = _init_linear(ks[0], D, d_attn)
        wk, bk = _init_linear(ks[1], D, kv_dim)
        wv, bv = _init_linear(ks[2], D, kv_dim)
        wo, bo = _init_linear(ks[3], d_attn, D)
        return {"norm_w": jnp.ones((1, D), jnp.float32),
                "wq": wq, "bq": bq,
                "wkv": jnp.concatenate([wk, wv], axis=1),
                "bkv": jnp.concatenate([bk, bv], axis=1),
                "wo": wo, "bo": bo}

    def init_self(k):
        ks = jax.random.split(k, 4)
        wq, bq = _init_linear(ks[0], D, d_attn)
        wk, bk = _init_linear(ks[1], D, kv_dim)
        wv, bv = _init_linear(ks[2], D, kv_dim)
        wo, bo = _init_linear(ks[3], d_attn, D)
        return {"norm_w": jnp.ones((1, D), jnp.float32),
                "wqkv": jnp.concatenate([wq, wk, wv], axis=1),
                "bqkv": jnp.concatenate([bq, bk, bv], axis=1),
                "wo": wo, "bo": bo}

    blocks = []
    for li in range(cfg["n_layers"]):
        ks = jax.random.split(top[4 + li], 8)
        ca = init_cross(ks[0])
        sa = init_self(ks[1])
        w_in, b_in = _init_linear(ks[2], D, 2 * C)
        w_out, b_out = _init_linear(ks[3], C, D)
        ch = {"w_in": w_in, "b_in": b_in,
              "conv_w": 0.1 * jax.random.normal(ks[4], (K, C), jnp.float32),
              "conv_b": jnp.zeros((1, C), jnp.float32),
              "w_out": w_out, "b_out": b_out}
        w1, b1 = _init_linear(ks[5], D, H)
        w2, b2 = _init_linear(ks[6], H, D)
        blocks.append({"ca": ca, "sa": sa, "ch": ch,
                       "mlp": {"w1": w1, "b1": b1, "w2": w2, "b2": b2},
                       "norm1_w": jnp.ones((1, D), jnp.float32),
                       "norm2_w": jnp.ones((1, D), jnp.float32)})
    params["blocks"] = blocks
    return params


# ----------------------------------------------------------------------------
# Main
# ----------------------------------------------------------------------------

if __name__ == "__main__":
    cfg = dict(
        n_layers=2, vocab_size=64, d_model=32, n_query=4, n_kv=2, d_attn=32,
        norm_eps=1e-6, dropout_p=0.0, n_channels=4, kernel_size=3, expand=2,
        d_conv=4, mlp_expand=4, act="silu",
    )
    B, N_rows, L = 2, 4, 16

    key = jax.random.PRNGKey(0)
    pkey, tkey = jax.random.split(key)
    params = init_params(pkey, cfg)
    tokens = jax.random.randint(tkey, (B, N_rows, L), 0, cfg["vocab_size"],
                                dtype=jnp.int32)

    fwd = jax.jit(functools.partial(model_forward, cfg=cfg))
    logits = fwd(params, tokens)
    jax.block_until_ready(logits)

    assert logits.shape == (B, N_rows, L, cfg["vocab_size"]), logits.shape
    assert bool(jnp.all(jnp.isfinite(logits)))
    print("KERNEL_OK")
</pallas_src>

<mosaic_0001>
module attributes {stable_mosaic.version = 11 : i64} {
  func.func @_lm_head_kernel(%arg0: i32, %arg1: i32, %arg2: memref<64x32xf32, #tpu.memory_space<vmem>>, %arg3: memref<32x64xbf16, #tpu.memory_space<vmem>>, %arg4: memref<1x64xf32, #tpu.memory_space<vmem>>, %arg5: memref<64x64xf32, #tpu.memory_space<vmem>>) attributes {dimension_semantics = [#tpu.dimension_semantics<parallel>, #tpu.dimension_semantics<parallel>], iteration_bounds = array<i64: 2, 1>, scalar_prefetch = 0 : i64, scratch_operands = 0 : i64, tpu.core_type = #tpu.core_type<tc>, window_params = [{transform_indices = @transform_0, window_bounds = array<i64: 64, 32>}, {transform_indices = @transform_1, window_bounds = array<i64: 32, 64>}, {transform_indices = @transform_2, window_bounds = array<i64: 1, 64>}, {transform_indices = @transform_3, window_bounds = array<i64: 64, 64>}]} {
    %c0 = arith.constant 0 : index
    %c0_0 = arith.constant 0 : index
    %0 = vector.load %arg2[%c0, %c0_0] : memref<64x32xf32, #tpu.memory_space<vmem>>, vector<64x32xf32>
    %1 = arith.truncf %0 : vector<64x32xf32> to vector<64x32xbf16>
    %c0_1 = arith.constant 0 : index
    %c0_2 = arith.constant 0 : index
    %2 = vector.load %arg3[%c0_1, %c0_2] : memref<32x64xbf16, #tpu.memory_space<vmem>>, vector<32x64xbf16>
    %cst = arith.constant dense<0.000000e+00> : vector<64x64xf32>
    %3 = tpu.matmul %1, %2, %cst {dimension_numbers = #tpu.dot_dimension_numbers<[1], [0], [0], [1], [0, 0, 1, 1], [], []>} : vector<64x32xbf16>, vector<32x64xbf16>, vector<64x64xf32> -> vector<64x64xf32>
    %c0_3 = arith.constant 0 : index
    %c0_4 = arith.constant 0 : index
    %4 = vector.load %arg4[%c0_3, %c0_4] : memref<1x64xf32, #tpu.memory_space<vmem>>, vector<1x64xf32>
    %5 = vector.broadcast %4 : vector<1x64xf32> to vector<64x64xf32>
    %6 = arith.addf %3, %5 : vector<64x64xf32>
    %c0_5 = arith.constant 0 : index
    %c0_6 = arith.constant 0 : index
    %7 = vector.load %arg5[%c0_5, %c0_6] : memref<64x64xf32, #tpu.memory_space<vmem>>, vector<64x64xf32>
    tpu.vector_store %arg5[%c0_5, %c0_6], %6 {strides = array<i32>} : memref<64x64xf32, #tpu.memory_space<vmem>>, vector<64x64xf32>,
    return
  }
  func.func @transform_0(%arg0: i32, %arg1: i32) -> (i32, i32) {
    %c0_i32 = arith.constant 0 : i32
    %c0_i32_0 = arith.constant 0 : i32
    return %arg0, %c0_i32 : i32, i32
  }
  func.func @transform_1(%arg0: i32, %arg1: i32) -> (i32, i32) {
    %c0_i32 = arith.constant 0 : i32
    %c0_i32_0 = arith.constant 0 : i32
    return %c0_i32, %arg1 : i32, i32
  }
  func.func @transform_2(%arg0: i32, %arg1: i32) -> (i32, i32) {
    %c0_i32 = arith.constant 0 : i32
    %c0_i32_0 = arith.constant 0 : i32
    return %c0_i32, %arg1 : i32, i32
  }
  func.func @transform_3(%arg0: i32, %arg1: i32) -> (i32, i32) {
    %c0_i32 = arith.constant 0 : i32
    return %arg0, %arg1 : i32, i32
  }
}

module attributes {stable_mosaic.version = 11 : i64} {
  func.func @_block_kernel(%arg0: i32, %arg1: memref<1x4x16x32xf32, #tpu.memory_space<vmem>>, %arg2: memref<16x32xf32, #tpu.memory_space<vmem>>, %arg3: memref<32x4xf32, #tpu.memory_space<vmem>>, %arg4: memref<4x32xf32, #tpu.memory_space<vmem>>, %arg5: memref<1x32xf32, #tpu.memory_space<vmem>>, %arg6: memref<32x32xbf16, #tpu.memory_space<vmem>>, %arg7: memref<1x32xf32, #tpu.memory_space<vmem>>, %arg8: memref<32x32xbf16, #tpu.memory_space<vmem>>, %arg9: memref<1x32xf32, #tpu.memory_space<vmem>>, %arg10: memref<32x32xbf16, #tpu.memory_space<vmem>>, %arg11: memref<1x32xf32, #tpu.memory_space<vmem>>, %arg12: memref<32x128xbf16, #tpu.memory_space<vmem>>, %arg13: memref<1x128xf32, #tpu.memory_space<vmem>>, %arg14: memref<4x64xf32, #tpu.memory_space<vmem>>, %arg15: memref<1x64xf32, #tpu.memory_space<vmem>>, %arg16: memref<64x32xbf16, #tpu.memory_space<vmem>>, %arg17: memref<1x32xf32, #tpu.memory_space<vmem>>, %arg18: memref<1x32xf32, #tpu.memory_space<vmem>>, %arg19: memref<1x32xf32, #tpu.memory_space<vmem>>, %arg20: memref<32x64xbf16, #tpu.memory_space<vmem>>, %arg21: memref<1x64xf32, #tpu.memory_space<vmem>>, %arg22: memref<32x32xbf16, #tpu.memory_space<vmem>>, %arg23: memref<1x32xf32, #tpu.memory_space<vmem>>, %arg24: memref<32x128xbf16, #tpu.memory_space<vmem>>, %arg25: memref<1x128xf32, #tpu.memory_space<vmem>>, %arg26: memref<128x32xbf16, #tpu.memory_space<vmem>>, %arg27: memref<1x32xf32, #tpu.memory_space<vmem>>, %arg28: memref<1x32xf32, #tpu.memory_space<vmem>>, %arg29: memref<1x4x16x32xf32, #tpu.memory_space<vmem>>) attributes {dimension_semantics = [#tpu.dimension_semantics<parallel>], iteration_bounds = array<i64: 2>, scalar_prefetch = 0 : i64, scratch_operands = 0 : i64, tpu.core_type = #tpu.core_type<tc>, window_params = [{transform_indices = @transform_0, window_bounds = array<i64: 1, 4, 16, 32>}, {pipeline_mode = #tpu.pipeline_mode<synchronous>, transform_indices = @transform_1, window_bounds = array<i64: 16, 32>}, {pipeline_mode = #tpu.pipeline_mode<synchronous>, transform_indices = @transform_2, window_bounds = array<i64: 32, 4>}, {pipeline_mode = #tpu.pipeline_mode<synchronous>, transform_indices = @transform_3, window_bounds = array<i64: 4, 32>}, {pipeline_mode = #tpu.pipeline_mode<synchronous>, transform_indices = @transform_4, window_bounds = array<i64: 1, 32>}, {pipeline_mode = #tpu.pipeline_mode<synchronous>, transform_indices = @transform_5, window_bounds = array<i64: 32, 32>}, {pipeline_mode = #tpu.pipeline_mode<synchronous>, transform_indices = @transform_6, window_bounds = array<i64: 1, 32>}, {pipeline_mode = #tpu.pipeline_mode<synchronous>, transform_indices = @transform_7, window_bounds = array<i64: 32, 32>}, {pipeline_mode = #tpu.pipeline_mode<synchronous>, transform_indices = @transform_8, window_bounds = array<i64: 1, 32>}, {pipeline_mode = #tpu.pipeline_mode<synchronous>, transform_indices = @transform_9, window_bounds = array<i64: 32, 32>}, {pipeline_mode = #tpu.pipeline_mode<synchronous>, transform_indices = @transform_10, window_bounds = array<i64: 1, 32>}, {pipeline_mode = #tpu.pipeline_mode<synchronous>, transform_indices = @transform_11, window_bounds = array<i64: 32, 128>}, {pipeline_mode = #tpu.pipeline_mode<synchronous>, transform_indices = @transform_12, window_bounds = array<i64: 1, 128>}, {pipeline_mode = #tpu.pipeline_mode<synchronous>, transform_indices = @transform_13, window_bounds = array<i64: 4, 64>}, {pipeline_mode = #tpu.pipeline_mode<synchronous>, transform_indices = @transform_14, window_bounds = array<i64: 1, 64>}, {pipeline_mode = #tpu.pipeline_mode<synchronous>, transform_indices = @transform_15, window_bounds = array<i64: 64, 32>}, {pipeline_mode = #tpu.pipeline_mode<synchronous>, transform_indices = @transform_16, window_bounds = array<i64: 1, 32>}, {pipeline_mode = #tpu.pipeline_mode<synchronous>, transform_indices = @transform_17, window_bounds = array<i64: 1, 32>}, {pipeline_mode = #tpu.pipeline_mode<synchronous>, transform_indices = @transform_18, window_bounds = array<i64: 1, 32>}, {pipeline_mode = #tpu.pipeline_mode<synchronous>, transform_indices = @transform_19, window_bounds = array<i64: 32, 64>}, {pipeline_mode = #tpu.pipeline_mode<synchronous>, transform_indices = @transform_20, window_bounds = array<i64: 1, 64>}, {pipeline_mode = #tpu.pipeline_mode<synchronous>, transform_indices = @transform_21, window_bounds = array<i64: 32, 32>}, {pipeline_mode = #tpu.pipeline_mode<synchronous>, transform_indices = @transform_22, window_bounds = array<i64: 1, 32>}, {pipeline_mode = #tpu.pipeline_mode<synchronous>, transform_indices = @transform_23, window_bounds = array<i64: 32, 128>}, {pipeline_mode = #tpu.pipeline_mode<synchronous>, transform_indices = @transform_24, window_bounds = array<i64: 1, 128>}, {pipeline_mode = #tpu.pipeline_mode<synchronous>, transform_indices = @transform_25, window_bounds = array<i64: 128, 32>}, {pipeline_mode = #tpu.pipeline_mode<synchronous>, transform_indices = @transform_26, window_bounds = array<i64: 1, 32>}, {pipeline_mode = #tpu.pipeline_mode<synchronous>, transform_indices = @transform_27, window_bounds = array<i64: 1, 32>}, {transform_indices = @transform_28, window_bounds = array<i64: 1, 4, 16, 32>}]} {
    %c0 = arith.constant 0 : index
    %c0_0 = arith.constant 0 : index
    %c0_1 = arith.constant 0 : index
    %c0_2 = arith.constant 0 : index
    %0 = vector.load %arg1[%c0, %c0_0, %c0_1, %c0_2] : memref<1x4x16x32xf32, #tpu.memory_space<vmem>>, vector<1x4x16x32xf32>
    %1 = vector.shape_cast %0 : vector<1x4x16x32xf32> to vector<4x16x32xf32>
    %2 = vector.shape_cast %1 : vector<4x16x32xf32> to vector<64x32xf32>
    %c0_3 = arith.constant 0 : index
    %c0_4 = arith.constant 0 : index
    %3 = vector.load %arg5[%c0_3, %c0_4] : memref<1x32xf32, #tpu.memory_space<vmem>>, vector<1x32xf32>
    %4 = arith.mulf %2, %2 : vector<64x32xf32>
    %cst = arith.constant dense<0.000000e+00> : vector<64xf32>
    %5 = vector.multi_reduction <add>, %4, %cst [1] : vector<64x32xf32> to vector<64xf32>
    %6 = vector.shape_cast %5 : vector<64xf32> to vector<64x1xf32>
    %cst_5 = arith.constant 3.200000e+01 : f32
    %7 = vector.broadcast %cst_5 : f32 to vector<64x1xf32>
    %8 = arith.divf %6, %7 : vector<64x1xf32>
    %cst_6 = arith.constant 9.99999997E-7 : f32
    %9 = vector.broadcast %cst_6 : f32 to vector<64x1xf32>
    %10 = arith.addf %8, %9 : vector<64x1xf32>
    %11 = math.rsqrt %10 : vector<64x1xf32>
    %12 = vector.broadcast %11 : vector<64x1xf32> to vector<64x32xf32>
    %13 = arith.mulf %2, %12 : vector<64x32xf32>
    %14 = vector.broadcast %3 : vector<1x32xf32> to vector<64x32xf32>
    %15 = arith.mulf %13, %14 : vector<64x32xf32>
    %16 = arith.truncf %15 : vector<64x32xf32> to vector<64x32xbf16>
    %c0_7 = arith.constant 0 : index
    %c0_8 = arith.constant 0 : index
    %17 = vector.load %arg8[%c0_7, %c0_8] : memref<32x32xbf16, #tpu.memory_space<vmem>>, vector<32x32xbf16>
    %cst_9 = arith.constant dense<0.000000e+00> : vector<64x32xf32>
    %18 = tpu.matmul %16, %17, %cst_9 {dimension_numbers = #tpu.dot_dimension_numbers<[1], [0], [0], [1], [0, 0, 1, 1], [], []>} : vector<64x32xbf16>, vector<32x32xbf16>, vector<64x32xf32> -> vector<64x32xf32>
    %c0_10 = arith.constant 0 : index
    %c0_11 = arith.constant 0 : index
    %19 = vector.load %arg9[%c0_10, %c0_11] : memref<1x32xf32, #tpu.memory_space<vmem>>, vector<1x32xf32>
    %20 = vector.broadcast %19 : vector<1x32xf32> to vector<64x32xf32>
    %21 = arith.addf %18, %20 : vector<64x32xf32>
    %22 = vector.extract_strided_slice %15 {offsets = [0, 0], sizes = [16, 32], strides = [1, 1]} : vector<64x32xf32> to vector<16x32xf32>
    %23 = arith.truncf %22 : vector<16x32xf32> to vector<16x32xbf16>
    %c0_12 = arith.constant 0 : index
    %c0_13 = arith.constant 0 : index
    %24 = vector.load %arg6[%c0_12, %c0_13] : memref<32x32xbf16, #tpu.memory_space<vmem>>, vector<32x32xbf16>
    %cst_14 = arith.constant dense<0.000000e+00> : vector<16x32xf32>
    %25 = tpu.matmul %23, %24, %cst_14 {dimension_numbers = #tpu.dot_dimension_numbers<[1], [0], [0], [1], [0, 0, 1, 1], [], []>} : vector<16x32xbf16>, vector<32x32xbf16>, vector<16x32xf32> -> vector<16x32xf32>
    %c0_15 = arith.constant 0 : index
    %c0_16 = arith.constant 0 : index
    %26 = vector.load %arg7[%c0_15, %c0_16] : memref<1x32xf32, #tpu.memory_space<vmem>>, vector<1x32xf32>
    %27 = vector.broadcast %26 : vector<1x32xf32> to vector<16x32xf32>
    %28 = arith.addf %25, %27 : vector<16x32xf32>
    %cst_17 = arith.constant 0.353553385 : f32
    %29 = vector.broadcast %cst_17 : f32 to vector<16x32xf32>
    %30 = arith.mulf %28, %29 : vector<16x32xf32>
    %c0_18 = arith.constant 0 : index
    %c0_19 = arith.constant 0 : index
    %31 = vector.load %arg2[%c0_18, %c0_19] : memref<16x32xf32, #tpu.memory_space<vmem>>, vector<16x32xf32>
    %32 = vector.extract_strided_slice %21 {offsets = [0, 0], sizes = [64, 16], strides = [1, 1]} : vector<64x32xf32> to vector<64x16xf32>
    %cst_20 = arith.constant dense<0.000000e+00> : vector<64x32xf32>
    %33 = tpu.matmul %32, %31, %cst_20 {dimension_numbers = #tpu.dot_dimension_numbers<[1], [0], [0], [1], [0, 0, 1, 1], [], []>} : vector<64x16xf32>, vector<16x32xf32>, vector<64x32xf32> -> vector<64x32xf32>
    %34 = vector.extract_strided_slice %21 {offsets = [0, 16], sizes = [64, 16], strides = [1, 1]} : vector<64x32xf32> to vector<64x16xf32>
    %cst_21 = arith.constant dense<0.000000e+00> : vector<64x32xf32>
    %35 = tpu.matmul %34, %31, %cst_21 {dimension_numbers = #tpu.dot_dimension_numbers<[1], [0], [0], [1], [0, 0, 1, 1], [], []>} : vector<64x16xf32>, vector<16x32xf32>, vector<64x32xf32> -> vector<64x32xf32>
    %36 = vector.shape_cast %33 : vector<64x32xf32> to vector<4x16x32xf32>
    %37 = vector.shape_cast %30 : vector<16x32xf32> to vector<1x16x32xf32>
    %38 = vector.broadcast %37 : vector<1x16x32xf32> to vector<4x16x32xf32>
    %39 = arith.mulf %36, %38 : vector<4x16x32xf32>
    %40 = vector.shape_cast %39 : vector<4x16x32xf32> to vector<64x32xf32>
    %c0_22 = arith.constant 0 : index
    %c0_23 = arith.constant 0 : index
    %41 = vector.load %arg3[%c0_22, %c0_23] : memref<32x4xf32, #tpu.memory_space<vmem>>, vector<32x4xf32>
    %cst_24 = arith.constant dense<0.000000e+00> : vector<64x4xf32>
    %42 = tpu.matmul %40, %41, %cst_24 {dimension_numbers = #tpu.dot_dimension_numbers<[1], [0], [0], [1], [0, 0, 1, 1], [], []>} : vector<64x32xf32>, vector<32x4xf32>, vector<64x4xf32> -> vector<64x4xf32>
    %43 = vector.shape_cast %42 : vector<64x4xf32> to vector<4x16x4xf32>
    %cst_25 = arith.constant dense<0xFF800000> : vector<16x4xf32>
    %44 = vector.multi_reduction <maximumf>, %43, %cst_25 [0] : vector<4x16x4xf32> to vector<16x4xf32>
    %45 = vector.shape_cast %44 : vector<16x4xf32> to vector<1x16x4xf32>
    %46 = vector.broadcast %45 : vector<1x16x4xf32> to vector<4x16x4xf32>
    %47 = arith.subf %43, %46 : vector<4x16x4xf32>
    %48 = math.exp %47 : vector<4x16x4xf32>
    %cst_26 = arith.constant dense<0.000000e+00> : vector<16x4xf32>
    %49 = vector.multi_reduction <add>, %48, %cst_26 [0] : vector<4x16x4xf32> to vector<16x4xf32>
    %50 = vector.shape_cast %49 : vector<16x4xf32> to vector<1x16x4xf32>
    %51 = vector.broadcast %50 : vector<1x16x4xf32> to vector<4x16x4xf32>
    %52 = arith.divf %48, %51 : vector<4x16x4xf32>
    %53 = vector.shape_cast %52 : vector<4x16x4xf32> to vector<64x4xf32>
    %c0_27 = arith.constant 0 : index
    %c0_28 = arith.constant 0 : index
    %54 = vector.load %arg4[%c0_27, %c0_28] : memref<4x32xf32, #tpu.memory_space<vmem>>, vector<4x32xf32>
    %cst_29 = arith.constant dense<0.000000e+00> : vector<64x32xf32>
    %55 = tpu.matmul %53, %54, %cst_29 {dimension_numbers = #tpu.dot_dimension_numbers<[1], [0], [0], [1], [0, 0, 1, 1], [], []>} : vector<64x4xf32>, vector<4x32xf32>, vector<64x32xf32> -> vector<64x32xf32>
    %56 = arith.mulf %55, %35 : vector<64x32xf32>
    %57 = vector.shape_cast %56 : vector<64x32xf32> to vector<4x16x32xf32>
    %cst_30 = arith.constant dense<0.000000e+00> : vector<16x32xf32>
    %58 = vector.multi_reduction <add>, %57, %cst_30 [0] : vector<4x16x32xf32> to vector<16x32xf32>
    %59 = arith.truncf %58 : vector<16x32xf32> to vector<16x32xbf16>
    %c0_31 = arith.constant 0 : index
    %c0_32 = arith.constant 0 : index
    %60 = vector.load %arg10[%c0_31, %c0_32] : memref<32x32xbf16, #tpu.memory_space<vmem>>, vector<32x32xbf16>
    %cst_33 = arith.constant dense<0.000000e+00> : vector<16x32xf32>
    %61 = tpu.matmul %59, %60, %cst_33 {dimension_numbers = #tpu.dot_dimension_numbers<[1], [0], [0], [1], [0, 0, 1, 1], [], []>} : vector<16x32xbf16>, vector<32x32xbf16>, vector<16x32xf32> -> vector<16x32xf32>
    %c0_34 = arith.constant 0 : index
    %c0_35 = arith.constant 0 : index
    %62 = vector.load %arg11[%c0_34, %c0_35] : memref<1x32xf32, #tpu.memory_space<vmem>>, vector<1x32xf32>
    %63 = vector.broadcast %62 : vector<1x32xf32> to vector<16x32xf32>
    %64 = arith.addf %61, %63 : vector<16x32xf32>
    %65 = vector.extract_strided_slice %2 {offsets = [0, 0], sizes = [16, 32], strides = [1, 1]} : vector<64x32xf32> to vector<16x32xf32>
    %66 = arith.addf %64, %65 : vector<16x32xf32>
    %67 = arith.truncf %66 : vector<16x32xf32> to vector<16x32xbf16>
    %c0_36 = arith.constant 0 : index
    %c0_37 = arith.constant 0 : index
    %68 = vector.load %arg12[%c0_36, %c0_37] : memref<32x128xbf16, #tpu.memory_space<vmem>>, vector<32x128xbf16>
    %cst_38 = arith.constant dense<0.000000e+00> : vector<16x128xf32>
    %69 = tpu.matmul %67, %68, %cst_38 {dimension_numbers = #tpu.dot_dimension_numbers<[1], [0], [0], [1], [0, 0, 1, 1], [], []>} : vector<16x32xbf16>, vector<32x128xbf16>, vector<16x128xf32> -> vector<16x128xf32>
    %c0_39 = arith.constant 0 : index
    %c0_40 = arith.constant 0 : index
    %70 = vector.load %arg13[%c0_39, %c0_40] : memref<1x128xf32, #tpu.memory_space<vmem>>, vector<1x128xf32>
    %71 = vector.broadcast %70 : vector<1x128xf32> to vector<16x128xf32>
    %72 = arith.addf %69, %71 : vector<16x128xf32>
    %73 = vector.extract_strided_slice %72 {offsets = [0, 0], sizes = [16, 64], strides = [1, 1]} : vector<16x128xf32> to vector<16x64xf32>
    %74 = vector.extract_strided_slice %72 {offsets = [0, 64], sizes = [16, 64], strides = [1, 1]} : vector<16x128xf32> to vector<16x64xf32>
    %c0_41 = arith.constant 0 : index
    %c0_42 = arith.constant 0 : index
    %75 = vector.load %arg14[%c0_41, %c0_42] : memref<4x64xf32, #tpu.memory_space<vmem>>, vector<4x64xf32>
    %76 = tpu.iota {dimensions = array<i32: 0>} : vector<16x1xi32>
    %c0_43 = arith.constant 0 : index
    %c0_44 = arith.constant 0 : index
    %77 = vector.load %arg15[%c0_43, %c0_44] : memref<1x64xf32, #tpu.memory_space<vmem>>, vector<1x64xf32>
    %c3_i32 = arith.constant 3 : i32
    %78 = tpu.dynamic_rotate %73 by %c3_i32 dim 0 : vector<16x64xf32>, i32 -> vector<16x64xf32>
    %c3_i32_45 = arith.constant 3 : i32
    %79 = vector.broadcast %c3_i32_45 : i32 to vector<16x1xi32>
    %80 = arith.cmpi sge, %76, %79 : vector<16x1xi32>
    %cst_46 = arith.constant 0.000000e+00 : f32
    %81 = vector.shape_cast %80 : vector<16x1xi1> to vector<16x1xi1>
    %82 = vector.broadcast %81 : vector<16x1xi1> to vector<16x64xi1>
    %83 = vector.broadcast %cst_46 : f32 to vector<16x64xf32>
    %84 = arith.select %82, %78, %83 : vector<16x64xi1>, vector<16x64xf32>
    %85 = vector.extract_strided_slice %75 {offsets = [0, 0], sizes = [1, 64], strides = [1, 1]} : vector<4x64xf32> to vector<1x64xf32>
    %86 = vector.broadcast %85 : vector<1x64xf32> to vector<16x64xf32>
    %87 = arith.mulf %84, %86 : vector<16x64xf32>
    %88 = vector.broadcast %77 : vector<1x64xf32> to vector<16x64xf32>
    %89 = arith.addf %88, %87 : vector<16x64xf32>
    %c2_i32 = arith.constant 2 : i32
    %90 = tpu.dynamic_rotate %73 by %c2_i32 dim 0 : vector<16x64xf32>, i32 -> vector<16x64xf32>
    %c2_i32_47 = arith.constant 2 : i32
    %91 = vector.broadcast %c2_i32_47 : i32 to vector<16x1xi32>
    %92 = arith.cmpi sge, %76, %91 : vector<16x1xi32>
    %cst_48 = arith.constant 0.000000e+00 : f32
    %93 = vector.shape_cast %92 : vector<16x1xi1> to vector<16x1xi1>
    %94 = vector.broadcast %93 : vector<16x1xi1> to vector<16x64xi1>
    %95 = vector.broadcast %cst_48 : f32 to vector<16x64xf32>
    %96 = arith.select %94, %90, %95 : vector<16x64xi1>, vector<16x64xf32>
    %97 = vector.extract_strided_slice %75 {offsets = [1, 0], sizes = [1, 64], strides = [1, 1]} : vector<4x64xf32> to vector<1x64xf32>
    %98 = vector.broadcast %97 : vector<1x64xf32> to vector<16x64xf32>
    %99 = arith.mulf %96, %98 : vector<16x64xf32>
    %100 = arith.addf %89, %99 : vector<16x64xf32>
    %c1_i32 = arith.constant 1 : i32
    %101 = tpu.dynamic_rotate %73 by %c1_i32 dim 0 : vector<16x64xf32>, i32 -> vector<16x64xf32>
    %c1_i32_49 = arith.constant 1 : i32
    %102 = vector.broadcast %c1_i32_49 : i32 to vector<16x1xi32>
    %103 = arith.cmpi sge, %76, %102 : vector<16x1xi32>
    %cst_50 = arith.constant 0.000000e+00 : f32
    %104 = vector.shape_cast %103 : vector<16x1xi1> to vector<16x1xi1>
    %105 = vector.broadcast %104 : vector<16x1xi1> to vector<16x64xi1>
    %106 = vector.broadcast %cst_50 : f32 to vector<16x64xf32>
    %107 = arith.select %105, %101, %106 : vector<16x64xi1>, vector<16x64xf32>
    %108 = vector.extract_strided_slice %75 {offsets = [2, 0], sizes = [1, 64], strides = [1, 1]} : vector<4x64xf32> to vector<1x64xf32>
    %109 = vector.broadcast %108 : vector<1x64xf32> to vector<16x64xf32>
    %110 = arith.mulf %107, %109 : vector<16x64xf32>
    %111 = arith.addf %100, %110 : vector<16x64xf32>
    %112 = vector.extract_strided_slice %75 {offsets = [3, 0], sizes = [1, 64], strides = [1, 1]} : vector<4x64xf32> to vector<1x64xf32>
    %113 = vector.broadcast %112 : vector<1x64xf32> to vector<16x64xf32>
    %114 = arith.mulf %73, %113 : vector<16x64xf32>
    %115 = arith.addf %111, %114 : vector<16x64xf32>
    %116 = arith.negf %115 : vector<16x64xf32>
    %117 = math.exp %116 : vector<16x64xf32>
    %cst_51 = arith.constant 1.000000e+00 : f32
    %118 = vector.broadcast %cst_51 : f32 to vector<16x64xf32>
    %119 = arith.addf %118, %117 : vector<16x64xf32>
    %120 = arith.divf %118, %119 : vector<16x64xf32>
    %121 = arith.mulf %115, %120 : vector<16x64xf32>
    %122 = arith.negf %74 : vector<16x64xf32>
    %123 = math.exp %122 : vector<16x64xf32>
    %cst_52 = arith.constant 1.000000e+00 : f32
    %124 = vector.broadcast %cst_52 : f32 to vector<16x64xf32>
    %125 = arith.addf %124, %123 : vector<16x64xf32>
    %126 = arith.divf %124, %125 : vector<16x64xf32>
    %127 = arith.mulf %74, %126 : vector<16x64xf32>
    %128 = arith.mulf %121, %127 : vector<16x64xf32>
    %129 = arith.truncf %128 : vector<16x64xf32> to vector<16x64xbf16>
    %c0_53 = arith.constant 0 : index
    %c0_54 = arith.constant 0 : index
    %130 = vector.load %arg16[%c0_53, %c0_54] : memref<64x32xbf16, #tpu.memory_space<vmem>>, vector<64x32xbf16>
    %cst_55 = arith.constant dense<0.000000e+00> : vector<16x32xf32>
    %131 = tpu.matmul %129, %130, %cst_55 {dimension_numbers = #tpu.dot_dimension_numbers<[1], [0], [0], [1], [0, 0, 1, 1], [], []>} : vector<16x64xbf16>, vector<64x32xbf16>, vector<16x32xf32> -> vector<16x32xf32>
    %c0_56 = arith.constant 0 : index
    %c0_57 = arith.constant 0 : index
    %132 = vector.load %arg17[%c0_56, %c0_57] : memref<1x32xf32, #tpu.memory_space<vmem>>, vector<1x32xf32>
    %133 = vector.broadcast %132 : vector<1x32xf32> to vector<16x32xf32>
    %134 = arith.addf %131, %133 : vector<16x32xf32>
    %135 = arith.addf %134, %66 : vector<16x32xf32>
    %c0_58 = arith.constant 0 : index
    %c0_59 = arith.constant 0 : index
    %136 = vector.load %arg18[%c0_58, %c0_59] : memref<1x32xf32, #tpu.memory_space<vmem>>, vector<1x32xf32>
    %137 = arith.mulf %135, %135 : vector<16x32xf32>
    %cst_60 = arith.constant dense<0.000000e+00> : vector<16xf32>
    %138 = vector.multi_reduction <add>, %137, %cst_60 [1] : vector<16x32xf32> to vector<16xf32>
    %139 = vector.shape_cast %138 : vector<16xf32> to vector<16x1xf32>
    %cst_61 = arith.constant 3.200000e+01 : f32
    %140 = vector.broadcast %cst_61 : f32 to vector<16x1xf32>
    %141 = arith.divf %139, %140 : vector<16x1xf32>
    %cst_62 = arith.constant 9.99999997E-7 : f32
    %142 = vector.broadcast %cst_62 : f32 to vector<16x1xf32>
    %143 = arith.addf %141, %142 : vector<16x1xf32>
    %144 = math.rsqrt %143 : vector<16x1xf32>
    %145 = vector.broadcast %144 : vector<16x1xf32> to vector<16x32xf32>
    %146 = arith.mulf %135, %145 : vector<16x32xf32>
    %147 = vector.broadcast %136 : vector<1x32xf32> to vector<16x32xf32>
    %148 = arith.mulf %146, %147 : vector<16x32xf32>
    %149 = vector.extract_strided_slice %2 {offsets = [16, 0], sizes = [48, 32], strides = [1, 1]} : vector<64x32xf32> to vector<48x32xf32>
    %150 = tpu.concatenate %148, %149 in 0 : vector<16x32xf32>, vector<48x32xf32> -> vector<64x32xf32>
    %c0_63 = arith.constant 0 : index
    %c0_64 = arith.constant 0 : index
    %151 = vector.load %arg19[%c0_63, %c0_64] : memref<1x32xf32, #tpu.memory_space<vmem>>, vector<1x32xf32>
    %152 = arith.mulf %150, %150 : vector<64x32xf32>
    %cst_65 = arith.constant dense<0.000000e+00> : vector<64xf32>
    %153 = vector.multi_reduction <add>, %152, %cst_65 [1] : vector<64x32xf32> to vector<64xf32>
    %154 = vector.shape_cast %153 : vector<64xf32> to vector<64x1xf32>
    %cst_66 = arith.constant 3.200000e+01 : f32
    %155 = vector.broadcast %cst_66 : f32 to vector<64x1xf32>
    %156 = arith.divf %154, %155 : vector<64x1xf32>
    %cst_67 = arith.constant 9.99999997E-7 : f32
    %157 = vector.broadcast %cst_67 : f32 to vector<64x1xf32>
    %158 = arith.addf %156, %157 : vector<64x1xf32>
    %159 = math.rsqrt %158 : vector<64x1xf32>
    %160 = vector.broadcast %159 : vector<64x1xf32> to vector<64x32xf32>
    %161 = arith.mulf %150, %160 : vector<64x32xf32>
    %162 = vector.broadcast %151 : vector<1x32xf32> to vector<64x32xf32>
    %163 = arith.mulf %161, %162 : vector<64x32xf32>
    %164 = arith.truncf %163 : vector<64x32xf32> to vector<64x32xbf16>
    %c0_68 = arith.constant 0 : index
    %c0_69 = arith.constant 0 : index
    %165 = vector.load %arg20[%c0_68, %c0_69] : memref<32x64xbf16, #tpu.memory_space<vmem>>, vector<32x64xbf16>
    %cst_70 = arith.constant dense<0.000000e+00> : vector<64x64xf32>
    %166 = tpu.matmul %164, %165, %cst_70 {dimension_numbers = #tpu.dot_dimension_numbers<[1], [0], [0], [1], [0, 0, 1, 1], [], []>} : vector<64x32xbf16>, vector<32x64xbf16>, vector<64x64xf32> -> vector<64x64xf32>
    %c0_71 = arith.constant 0 : index
    %c0_72 = arith.constant 0 : index
    %167 = vector.load %arg21[%c0_71, %c0_72] : memref<1x64xf32, #tpu.memory_space<vmem>>, vector<1x64xf32>
    %168 = vector.broadcast %167 : vector<1x64xf32> to vector<64x64xf32>
    %169 = arith.addf %166, %168 : vector<64x64xf32>
    %170 = vector.extract_strided_slice %169 {offsets = [0, 0], sizes = [64, 8], strides = [1, 1]} : vector<64x64xf32> to vector<64x8xf32>
    %cst_73 = arith.constant 0.353553385 : f32
    %171 = vector.broadcast %cst_73 : f32 to vector<64x8xf32>
    %172 = arith.mulf %170, %171 : vector<64x8xf32>
    %173 = arith.truncf %172 : vector<64x8xf32> to vector<64x8xbf16>
    %174 = vector.shape_cast %173 : vector<64x8xbf16> to vector<4x16x8xbf16>
    %175 = vector.extract_strided_slice %169 {offsets = [0, 32], sizes = [64, 8], strides = [1, 1]} : vector<64x64xf32> to vector<64x8xf32>
    %176 = arith.truncf %175 : vector<64x8xf32> to vector<64x8xbf16>
    %177 = vector.shape_cast %176 : vector<64x8xbf16> to vector<4x16x8xbf16>
    %178 = vector.extract_strided_slice %169 {offsets = [0, 48], sizes = [64, 8], strides = [1, 1]} : vector<64x64xf32> to vector<64x8xf32>
    %179 = arith.truncf %178 : vector<64x8xf32> to vector<64x8xbf16>
    %180 = vector.shape_cast %179 : vector<64x8xbf16> to vector<4x16x8xbf16>
    %cst_74 = arith.constant dense<0.000000e+00> : vector<4x16x16xf32>
    %181 = tpu.matmul %174, %177, %cst_74 {dimension_numbers = #tpu.dot_dimension_numbers<[2], [2], [1], [1], [0, 0, 0, 1, 1, 1], [0], [0]>} : vector<4x16x8xbf16>, vector<4x16x8xbf16>, vector<4x16x16xf32> -> vector<4x16x16xf32>
    %cst_75 = arith.constant dense<0xFF800000> : vector<4x16xf32>
    %182 = vector.multi_reduction <maximumf>, %181, %cst_75 [2] : vector<4x16x16xf32> to vector<4x16xf32>
    %183 = vector.shape_cast %182 : vector<4x16xf32> to vector<4x16x1xf32>
    %184 = vector.broadcast %183 : vector<4x16x1xf32> to vector<4x16x16xf32>
    %185 = arith.subf %181, %184 : vector<4x16x16xf32>
    %186 = math.exp %185 : vector<4x16x16xf32>
    %cst_76 = arith.constant dense<0.000000e+00> : vector<4x16xf32>
    %187 = vector.multi_reduction <add>, %186, %cst_76 [2] : vector<4x16x16xf32> to vector<4x16xf32>
    %188 = vector.shape_cast %187 : vector<4x16xf32> to vector<4x16x1xf32>
    %189 = vector.broadcast %188 : vector<4x16x1xf32> to vector<4x16x16xf32>
    %190 = arith.divf %186, %189 : vector<4x16x16xf32>
    %191 = arith.truncf %190 : vector<4x16x16xf32> to vector<4x16x16xbf16>
    %cst_77 = arith.constant dense<0.000000e+00> : vector<4x16x8xf32>
    %192 = tpu.matmul %191, %180, %cst_77 {dimension_numbers = #tpu.dot_dimension_numbers<[2], [1], [1], [2], [0, 0, 0, 1, 1, 2], [0], [0]>} : vector<4x16x16xbf16>, vector<4x16x8xbf16>, vector<4x16x8xf32> -> vector<4x16x8xf32>
    %193 = vector.extract_strided_slice %169 {offsets = [0, 8], sizes = [64, 8], strides = [1, 1]} : vector<64x64xf32> to vector<64x8xf32>
    %cst_78 = arith.constant 0.353553385 : f32
    %194 = vector.broadcast %cst_78 : f32 to vector<64x8xf32>
    %195 = arith.mulf %193, %194 : vector<64x8xf32>
    %196 = arith.truncf %195 : vector<64x8xf32> to vector<64x8xbf16>
    %197 = vector.shape_cast %196 : vector<64x8xbf16> to vector<4x16x8xbf16>
    %198 = vector.extract_strided_slice %169 {offsets = [0, 32], sizes = [64, 8], strides = [1, 1]} : vector<64x64xf32> to vector<64x8xf32>
    %199 = arith.truncf %198 : vector<64x8xf32> to vector<64x8xbf16>
    %200 = vector.shape_cast %199 : vector<64x8xbf16> to vector<4x16x8xbf16>
    %201 = vector.extract_strided_slice %169 {offsets = [0, 48], sizes = [64, 8], strides = [1, 1]} : vector<64x64xf32> to vector<64x8xf32>
    %202 = arith.truncf %201 : vector<64x8xf32> to vector<64x8xbf16>
    %203 = vector.shape_cast %202 : vector<64x8xbf16> to vector<4x16x8xbf16>
    %cst_79 = arith.constant dense<0.000000e+00> : vector<4x16x16xf32>
    %204 = tpu.matmul %197, %200, %cst_79 {dimension_numbers = #tpu.dot_dimension_numbers<[2], [2], [1], [1], [0, 0, 0, 1, 1, 1], [0], [0]>} : vector<4x16x8xbf16>, vector<4x16x8xbf16>, vector<4x16x16xf32> -> vector<4x16x16xf32>
    %cst_80 = arith.constant dense<0xFF800000> : vector<4x16xf32>
    %205 = vector.multi_reduction <maximumf>, %204, %cst_80 [2] : vector<4x16x16xf32> to vector<4x16xf32>
    %206 = vector.shape_cast %205 : vector<4x16xf32> to vector<4x16x1xf32>
    %207 = vector.broadcast %206 : vector<4x16x1xf32> to vector<4x16x16xf32>
    %208 = arith.subf %204, %207 : vector<4x16x16xf32>
    %209 = math.exp %208 : vector<4x16x16xf32>
    %cst_81 = arith.constant dense<0.000000e+00> : vector<4x16xf32>
    %210 = vector.multi_reduction <add>, %209, %cst_81 [2] : vector<4x16x16xf32> to vector<4x16xf32>
    %211 = vector.shape_cast %210 : vector<4x16xf32> to vector<4x16x1xf32>
    %212 = vector.broadcast %211 : vector<4x16x1xf32> to vector<4x16x16xf32>
    %213 = arith.divf %209, %212 : vector<4x16x16xf32>
    %214 = arith.truncf %213 : vector<4x16x16xf32> to vector<4x16x16xbf16>
    %cst_82 = arith.constant dense<0.000000e+00> : vector<4x16x8xf32>
    %215 = tpu.matmul %214, %203, %cst_82 {dimension_numbers = #tpu.dot_dimension_numbers<[2], [1], [1], [2], [0, 0, 0, 1, 1, 2], [0], [0]>} : vector<4x16x16xbf16>, vector<4x16x8xbf16>, vector<4x16x8xf32> -> vector<4x16x8xf32>
    %216 = vector.extract_strided_slice %169 {offsets = [0, 16], sizes = [64, 8], strides = [1, 1]} : vector<64x64xf32> to vector<64x8xf32>
    %cst_83 = arith.constant 0.353553385 : f32
    %217 = vector.broadcast %cst_83 : f32 to vector<64x8xf32>
    %218 = arith.mulf %216, %217 : vector<64x8xf32>
    %219 = arith.truncf %218 : vector<64x8xf32> to vector<64x8xbf16>
    %220 = vector.shape_cast %219 : vector<64x8xbf16> to vector<4x16x8xbf16>
    %221 = vector.extract_strided_slice %169 {offsets = [0, 40], sizes = [64, 8], strides = [1, 1]} : vector<64x64xf32> to vector<64x8xf32>
    %222 = arith.truncf %221 : vector<64x8xf32> to vector<64x8xbf16>
    %223 = vector.shape_cast %222 : vector<64x8xbf16> to vector<4x16x8xbf16>
    %224 = vector.extract_strided_slice %169 {offsets = [0, 56], sizes = [64, 8], strides = [1, 1]} : vector<64x64xf32> to vector<64x8xf32>
    %225 = arith.truncf %224 : vector<64x8xf32> to vector<64x8xbf16>
    %226 = vector.shape_cast %225 : vector<64x8xbf16> to vector<4x16x8xbf16>
    %cst_84 = arith.constant dense<0.000000e+00> : vector<4x16x16xf32>
    %227 = tpu.matmul %220, %223, %cst_84 {dimension_numbers = #tpu.dot_dimension_numbers<[2], [2], [1], [1], [0, 0, 0, 1, 1, 1], [0], [0]>} : vector<4x16x8xbf16>, vector<4x16x8xbf16>, vector<4x16x16xf32> -> vector<4x16x16xf32>
    %cst_85 = arith.constant dense<0xFF800000> : vector<4x16xf32>
    %228 = vector.multi_reduction <maximumf>, %227, %cst_85 [2] : vector<4x16x16xf32> to vector<4x16xf32>
    %229 = vector.shape_cast %228 : vector<4x16xf32> to vector<4x16x1xf32>
    %230 = vector.broadcast %229 : vector<4x16x1xf32> to vector<4x16x16xf32>
    %231 = arith.subf %227, %230 : vector<4x16x16xf32>
    %232 = math.exp %231 : vector<4x16x16xf32>
    %cst_86 = arith.constant dense<0.000000e+00> : vector<4x16xf32>
    %233 = vector.multi_reduction <add>, %232, %cst_86 [2] : vector<4x16x16xf32> to vector<4x16xf32>
    %234 = vector.shape_cast %233 : vector<4x16xf32> to vector<4x16x1xf32>
    %235 = vector.broadcast %234 : vector<4x16x1xf32> to vector<4x16x16xf32>
    %236 = arith.divf %232, %235 : vector<4x16x16xf32>
    %237 = arith.truncf %236 : vector<4x16x16xf32> to vector<4x16x16xbf16>
    %cst_87 = arith.constant dense<0.000000e+00> : vector<4x16x8xf32>
    %238 = tpu.matmul %237, %226, %cst_87 {dimension_numbers = #tpu.dot_dimension_numbers<[2], [1], [1], [2], [0, 0, 0, 1, 1, 2], [0], [0]>} : vector<4x16x16xbf16>, vector<4x16x8xbf16>, vector<4x16x8xf32> -> vector<4x16x8xf32>
    %239 = vector.extract_strided_slice %169 {offsets = [0, 24], sizes = [64, 8], strides = [1, 1]} : vector<64x64xf32> to vector<64x8xf32>
    %cst_88 = arith.constant 0.353553385 : f32
    %240 = vector.broadcast %cst_88 : f32 to vector<64x8xf32>
    %241 = arith.mulf %239, %240 : vector<64x8xf32>
    %242 = arith.truncf %241 : vector<64x8xf32> to vector<64x8xbf16>
    %243 = vector.shape_cast %242 : vector<64x8xbf16> to vector<4x16x8xbf16>
    %244 = vector.extract_strided_slice %169 {offsets = [0, 40], sizes = [64, 8], strides = [1, 1]} : vector<64x64xf32> to vector<64x8xf32>
    %245 = arith.truncf %244 : vector<64x8xf32> to vector<64x8xbf16>
    %246 = vector.shape_cast %245 : vector<64x8xbf16> to vector<4x16x8xbf16>
    %247 = vector.extract_strided_slice %169 {offsets = [0, 56], sizes = [64, 8], strides = [1, 1]} : vector<64x64xf32> to vector<64x8xf32>
    %248 = arith.truncf %247 : vector<64x8xf32> to vector<64x8xbf16>
    %249 = vector.shape_cast %248 : vector<64x8xbf16> to vector<4x16x8xbf16>
    %cst_89 = arith.constant dense<0.000000e+00> : vector<4x16x16xf32>
    %250 = tpu.matmul %243, %246, %cst_89 {dimension_numbers = #tpu.dot_dimension_numbers<[2], [2], [1], [1], [0, 0, 0, 1, 1, 1], [0], [0]>} : vector<4x16x8xbf16>, vector<4x16x8xbf16>, vector<4x16x16xf32> -> vector<4x16x16xf32>
    %cst_90 = arith.constant dense<0xFF800000> : vector<4x16xf32>
    %251 = vector.multi_reduction <maximumf>, %250, %cst_90 [2] : vector<4x16x16xf32> to vector<4x16xf32>
    %252 = vector.shape_cast %251 : vector<4x16xf32> to vector<4x16x1xf32>
    %253 = vector.broadcast %252 : vector<4x16x1xf32> to vector<4x16x16xf32>
    %254 = arith.subf %250, %253 : vector<4x16x16xf32>
    %255 = math.exp %254 : vector<4x16x16xf32>
    %cst_91 = arith.constant dense<0.000000e+00> : vector<4x16xf32>
    %256 = vector.multi_reduction <add>, %255, %cst_91 [2] : vector<4x16x16xf32> to vector<4x16xf32>
    %257 = vector.shape_cast %256 : vector<4x16xf32> to vector<4x16x1xf32>
    %258 = vector.broadcast %257 : vector<4x16x1xf32> to vector<4x16x16xf32>
    %259 = arith.divf %255, %258 : vector<4x16x16xf32>
    %260 = arith.truncf %259 : vector<4x16x16xf32> to vector<4x16x16xbf16>
    %cst_92 = arith.constant dense<0.000000e+00> : vector<4x16x8xf32>
    %261 = tpu.matmul %260, %249, %cst_92 {dimension_numbers = #tpu.dot_dimension_numbers<[2], [1], [1], [2], [0, 0, 0, 1, 1, 2], [0], [0]>} : vector<4x16x16xbf16>, vector<4x16x8xbf16>, vector<4x16x8xf32> -> vector<4x16x8xf32>
    %262 = tpu.concatenate %192, %215, %238, %261 in 2 : vector<4x16x8xf32>, vector<4x16x8xf32>, vector<4x16x8xf32>, vector<4x16x8xf32> -> vector<4x16x32xf32>
    %263 = vector.shape_cast %262 : vector<4x16x32xf32> to vector<64x32xf32>
    %264 = arith.truncf %263 : vector<64x32xf32> to vector<64x32xbf16>
    %c0_93 = arith.constant 0 : index
    %c0_94 = arith.constant 0 : index
    %265 = vector.load %arg22[%c0_93, %c0_94] : memref<32x32xbf16, #tpu.memory_space<vmem>>, vector<32x32xbf16>
    %cst_95 = arith.constant dense<0.000000e+00> : vector<64x32xf32>
    %266 = tpu.matmul %264, %265, %cst_95 {dimension_numbers = #tpu.dot_dimension_numbers<[1], [0], [0], [1], [0, 0, 1, 1], [], []>} : vector<64x32xbf16>, vector<32x32xbf16>, vector<64x32xf32> -> vector<64x32xf32>
    %c0_96 = arith.constant 0 : index
    %c0_97 = arith.constant 0 : index
    %267 = vector.load %arg23[%c0_96, %c0_97] : memref<1x32xf32, #tpu.memory_space<vmem>>, vector<1x32xf32>
    %268 = vector.broadcast %267 : vector<1x32xf32> to vector<64x32xf32>
    %269 = arith.addf %266, %268 : vector<64x32xf32>
    %270 = arith.addf %269, %150 : vector<64x32xf32>
    %271 = arith.truncf %270 : vector<64x32xf32> to vector<64x32xbf16>
    %c0_98 = arith.constant 0 : index
    %c0_99 = arith.constant 0 : index
    %272 = vector.load %arg24[%c0_98, %c0_99] : memref<32x128xbf16, #tpu.memory_space<vmem>>, vector<32x128xbf16>
    %cst_100 = arith.constant dense<0.000000e+00> : vector<64x128xf32>
    %273 = tpu.matmul %271, %272, %cst_100 {dimension_numbers = #tpu.dot_dimension_numbers<[1], [0], [0], [1], [0, 0, 1, 1], [], []>} : vector<64x32xbf16>, vector<32x128xbf16>, vector<64x128xf32> -> vector<64x128xf32>
    %c0_101 = arith.constant 0 : index
    %c0_102 = arith.constant 0 : index
    %274 = vector.load %arg25[%c0_101, %c0_102] : memref<1x128xf32, #tpu.memory_space<vmem>>, vector<1x128xf32>
    %275 = vector.broadcast %274 : vector<1x128xf32> to vector<64x128xf32>
    %276 = arith.addf %273, %275 : vector<64x128xf32>
    %277 = arith.negf %276 : vector<64x128xf32>
    %278 = math.exp %277 : vector<64x128xf32>
    %cst_103 = arith.constant 1.000000e+00 : f32
    %279 = vector.broadcast %cst_103 : f32 to vector<64x128xf32>
    %280 = arith.addf %279, %278 : vector<64x128xf32>
    %281 = arith.divf %279, %280 : vector<64x128xf32>
    %282 = arith.mulf %276, %281 : vector<64x128xf32>
    %283 = arith.truncf %282 : vector<64x128xf32> to vector<64x128xbf16>
    %c0_104 = arith.constant 0 : index
    %c0_105 = arith.constant 0 : index
    %284 = vector.load %arg26[%c0_104, %c0_105] : memref<128x32xbf16, #tpu.memory_space<vmem>>, vector<128x32xbf16>
    %cst_106 = arith.constant dense<0.000000e+00> : vector<64x32xf32>
    %285 = tpu.matmul %283, %284, %cst_106 {dimension_numbers = #tpu.dot_dimension_numbers<[1], [0], [0], [1], [0, 0, 1, 1], [], []>} : vector<64x128xbf16>, vector<128x32xbf16>, vector<64x32xf32> -> vector<64x32xf32>
    %c0_107 = arith.constant 0 : index
    %c0_108 = arith.constant 0 : index
    %286 = vector.load %arg27[%c0_107, %c0_108] : memref<1x32xf32, #tpu.memory_space<vmem>>, vector<1x32xf32>
    %287 = vector.broadcast %286 : vector<1x32xf32> to vector<64x32xf32>
    %288 = arith.addf %285, %287 : vector<64x32xf32>
    %289 = arith.addf %288, %270 : vector<64x32xf32>
    %c0_109 = arith.constant 0 : index
    %c0_110 = arith.constant 0 : index
    %290 = vector.load %arg28[%c0_109, %c0_110] : memref<1x32xf32, #tpu.memory_space<vmem>>, vector<1x32xf32>
    %291 = arith.mulf %289, %289 : vector<64x32xf32>
    %cst_111 = arith.constant dense<0.000000e+00> : vector<64xf32>
    %292 = vector.multi_reduction <add>, %291, %cst_111 [1] : vector<64x32xf32> to vector<64xf32>
    %293 = vector.shape_cast %292 : vector<64xf32> to vector<64x1xf32>
    %cst_112 = arith.constant 3.200000e+01 : f32
    %294 = vector.broadcast %cst_112 : f32 to vector<64x1xf32>
    %295 = arith.divf %293, %294 : vector<64x1xf32>
    %cst_113 = arith.constant 9.99999997E-7 : f32
    %296 = vector.broadcast %cst_113 : f32 to vector<64x1xf32>
    %297 = arith.addf %295, %296 : vector<64x1xf32>
    %298 = math.rsqrt %297 : vector<64x1xf32>
    %299 = vector.broadcast %298 : vector<64x1xf32> to vector<64x32xf32>
    %300 = arith.mulf %289, %299 : vector<64x32xf32>
    %301 = vector.broadcast %290 : vector<1x32xf32> to vector<64x32xf32>
    %302 = arith.mulf %300, %301 : vector<64x32xf32>
    %303 = vector.shape_cast %302 : vector<64x32xf32> to vector<4x16x32xf32>
    %c0_114 = arith.constant 0 : index
    %c0_115 = arith.constant 0 : index
    %c0_116 = arith.constant 0 : index
    %c0_117 = arith.constant 0 : index
    %304 = vector.load %arg29[%c0_114, %c0_115, %c0_116, %c0_117] : memref<1x4x16x32xf32, #tpu.memory_space<vmem>>, vector<1x4x16x32xf32>
    %305 = vector.shape_cast %304 : vector<1x4x16x32xf32> to vector<4x16x32xf32>
    %306 = vector.shape_cast %303 : vector<4x16x32xf32> to vector<1x4x16x32xf32>
    tpu.vector_store %arg29[%c0_114, %c0_115, %c0_116, %c0_117], %306 {strides = array<i32>} : memref<1x4x16x32xf32, #tpu.memory_space<vmem>>, vector<1x4x16x32xf32>,
    return
  }
  func.func @transform_0(%arg0: i32) -> (i32, i32, i32, i32) {
    %c0_i32 = arith.constant 0 : i32
    %c0_i32_0 = arith.constant 0 : i32
    %c0_i32_1 = arith.constant 0 : i32
    %c0_i32_2 = arith.constant 0 : i32
    return %arg0, %c0_i32, %c0_i32_0, %c0_i32_1 : i32, i32, i32, i32
  }
  func.func @transform_1(%arg0: i32) -> (i32, i32) {
    %c0_i32 = arith.constant 0 : i32
    %c0_i32_0 = arith.constant 0 : i32
    %c0_i32_1 = arith.constant 0 : i32
    return %c0_i32, %c0_i32_0 : i32, i32
  }
  func.func @transform_2(%arg0: i32) -> (i32, i32) {
    %c0_i32 = arith.constant 0 : i32
    %c0_i32_0 = arith.constant 0 : i32
    %c0_i32_1 = arith.constant 0 : i32
    return %c0_i32, %c0_i32_0 : i32, i32
  }
  func.func @transform_3(%arg0: i32) -> (i32, i32) {
    %c0_i32 = arith.constant 0 : i32
    %c0_i32_0 = arith.constant 0 : i32
    %c0_i32_1 = arith.constant 0 : i32
    return %c0_i32, %c0_i32_0 : i32, i32
  }
  func.func @transform_4(%arg0: i32) -> (i32, i32) {
    %c0_i32 = arith.constant 0 : i32
    %c0_i32_0 = arith.constant 0 : i32
    %c0_i32_1 = arith.constant 0 : i32
    return %c0_i32, %c0_i32_0 : i32, i32
  }
  func.func @transform_5(%arg0: i32) -> (i32, i32) {
    %c0_i32 = arith.constant 0 : i32
    %c0_i32_0 = arith.constant 0 : i32
    %c0_i32_1 = arith.constant 0 : i32
    return %c0_i32, %c0_i32_0 : i32, i32
  }
  func.func @transform_6(%arg0: i32) -> (i32, i32) {
    %c0_i32 = arith.constant 0 : i32
    %c0_i32_0 = arith.constant 0 : i32
    %c0_i32_1 = arith.constant 0 : i32
    return %c0_i32, %c0_i32_0 : i32, i32
  }
  func.func @transform_7(%arg0: i32) -> (i32, i32) {
    %c0_i32 = arith.constant 0 : i32
    %c0_i32_0 = arith.constant 0 : i32
    %c0_i32_1 = arith.constant 0 : i32
    return %c0_i32, %c0_i32_0 : i32, i32
  }
  func.func @transform_8(%arg0: i32) -> (i32, i32) {
    %c0_i32 = arith.constant 0 : i32
    %c0_i32_0 = arith.constant 0 : i32
    %c0_i32_1 = arith.constant 0 : i32
    return %c0_i32, %c0_i32_0 : i32, i32
  }
  func.func @transform_9(%arg0: i32) -> (i32, i32) {
    %c0_i32 = arith.constant 0 : i32
    %c0_i32_0 = arith.constant 0 : i32
    %c0_i32_1 = arith.constant 0 : i32
    return %c0_i32, %c0_i32_0 : i32, i32
  }
  func.func @transform_10(%arg0: i32) -> (i32, i32) {
    %c0_i32 = arith.constant 0 : i32
    %c0_i32_0 = arith.constant 0 : i32
    %c0_i32_1 = arith.constant 0 : i32
    return %c0_i32, %c0_i32_0 : i32, i32
  }
  func.func @transform_11(%arg0: i32) -> (i32, i32) {
    %c0_i32 = arith.constant 0 : i32
    %c0_i32_0 = arith.constant 0 : i32
    %c0_i32_1 = arith.constant 0 : i32
    return %c0_i32, %c0_i32_0 : i32, i32
  }
  func.func @transform_12(%arg0: i32) -> (i32, i32) {
    %c0_i32 = arith.constant 0 : i32
    %c0_i32_0 = arith.constant 0 : i32
    %c0_i32_1 = arith.constant 0 : i32
    return %c0_i32, %c0_i32_0 : i32, i32
  }
  func.func @transform_13(%arg0: i32) -> (i32, i32) {
    %c0_i32 = arith.constant 0 : i32
    %c0_i32_0 = arith.constant 0 : i32
    %c0_i32_1 = arith.constant 0 : i32
    return %c0_i32, %c0_i32_0 : i32, i32
  }
  func.func @transform_14(%arg0: i32) -> (i32, i32) {
    %c0_i32 = arith.constant 0 : i32
    %c0_i32_0 = arith.constant 0 : i32
    %c0_i32_1 = arith.constant 0 : i32
    return %c0_i32, %c0_i32_0 : i32, i32
  }
  func.func @transform_15(%arg0: i32) -> (i32, i32) {
    %c0_i32 = arith.constant 0 : i32
    %c0_i32_0 = arith.constant 0 : i32
    %c0_i32_1 = arith.constant 0 : i32
    return %c0_i32, %c0_i32_0 : i32, i32
  }
  func.func @transform_16(%arg0: i32) -> (i32, i32) {
    %c0_i32 = arith.constant 0 : i32
    %c0_i32_0 = arith.constant 0 : i32
    %c0_i32_1 = arith.constant 0 : i32
    return %c0_i32, %c0_i32_0 : i32, i32
  }
  func.func @transform_17(%arg0: i32) -> (i32, i32) {
    %c0_i32 = arith.constant 0 : i32
    %c0_i32_0 = arith.constant 0 : i32
    %c0_i32_1 = arith.constant 0 : i32
    return %c0_i32, %c0_i32_0 : i32, i32
  }
  func.func @transform_18(%arg0: i32) -> (i32, i32) {
    %c0_i32 = arith.constant 0 : i32
    %c0_i32_0 = arith.constant 0 : i32
    %c0_i32_1 = arith.constant 0 : i32
    return %c0_i32, %c0_i32_0 : i32, i32
  }
  func.func @transform_19(%arg0: i32) -> (i32, i32) {
    %c0_i32 = arith.constant 0 : i32
    %c0_i32_0 = arith.constant 0 : i32
    %c0_i32_1 = arith.constant 0 : i32
    return %c0_i32, %c0_i32_0 : i32, i32
  }
  func.func @transform_20(%arg0: i32) -> (i32, i32) {
    %c0_i32 = arith.constant 0 : i32
    %c0_i32_0 = arith.constant 0 : i32
    %c0_i32_1 = arith.constant 0 : i32
    return %c0_i32, %c0_i32_0 : i32, i32
  }
  func.func @transform_21(%arg0: i32) -> (i32, i32) {
    %c0_i32 = arith.constant 0 : i32
    %c0_i32_0 = arith.constant 0 : i32
    %c0_i32_1 = arith.constant 0 : i32
    return %c0_i32, %c0_i32_0 : i32, i32
  }
  func.func @transform_22(%arg0: i32) -> (i32, i32) {
    %c0_i32 = arith.constant 0 : i32
    %c0_i32_0 = arith.constant 0 : i32
    %c0_i32_1 = arith.constant 0 : i32
    return %c0_i32, %c0_i32_0 : i32, i32
  }
  func.func @transform_23(%arg0: i32) -> (i32, i32) {
    %c0_i32 = arith.constant 0 : i32
    %c0_i32_0 = arith.constant 0 : i32
    %c0_i32_1 = arith.constant 0 : i32
    return %c0_i32, %c0_i32_0 : i32, i32
  }
  func.func @transform_24(%arg0: i32) -> (i32, i32) {
    %c0_i32 = arith.constant 0 : i32
    %c0_i32_0 = arith.constant 0 : i32
    %c0_i32_1 = arith.constant 0 : i32
    return %c0_i32, %c0_i32_0 : i32, i32
  }
  func.func @transform_25(%arg0: i32) -> (i32, i32) {
    %c0_i32 = arith.constant 0 : i32
    %c0_i32_0 = arith.constant 0 : i32
    %c0_i32_1 = arith.constant 0 : i32
    return %c0_i32, %c0_i32_0 : i32, i32
  }
  func.func @transform_26(%arg0: i32) -> (i32, i32) {
    %c0_i32 = arith.constant 0 : i32
    %c0_i32_0 = arith.constant 0 : i32
    %c0_i32_1 = arith.constant 0 : i32
    return %c0_i32, %c0_i32_0 : i32, i32
  }
  func.func @transform_27(%arg0: i32) -> (i32, i32) {
    %c0_i32 = arith.constant 0 : i32
    %c0_i32_0 = arith.constant 0 : i32
    %c0_i32_1 = arith.constant 0 : i32
    return %c0_i32, %c0_i32_0 : i32, i32
  }
  func.func @transform_28(%arg0: i32) -> (i32, i32, i32, i32) {
    %c0_i32 = arith.constant 0 : i32
    %c0_i32_0 = arith.constant 0 : i32
    %c0_i32_1 = arith.constant 0 : i32
    %c0_i32_2 = arith.constant 0 : i32
    return %arg0, %c0_i32, %c0_i32_0, %c0_i32_1 : i32, i32, i32, i32
  }
}

</mosaic_0001>

<llo_original>
// kernel: model_forward.5
$region0: #{model_forward.5}
  #allocation0 [shape = 'u32[]', space=smem, size = 0x4, offset = 0x4, fixed_abs, tag = 'smem constant byte address 0x4 - core index']
  #allocation1 [shape = 'u32[144,128]{1,0:T(1,128)}', space=vmem, size = 0x12000, scoped, tag = 'internal scratch']
  %s0 = inlined_call_operand.vmem [shape: f32[128,32], index: 0, kind: input, shape index: {}]
  %s1 = inlined_call_operand.vmem [shape: bf16[32,64], index: 1, kind: input, shape index: {}]
  %s2 = inlined_call_operand.vmem [shape: f32[1,64], index: 2, kind: input, shape index: {}]
  %s3 = inlined_call_operand.hbm [shape: f32[128,64], index: 3, kind: output, shape index: {}]
  %s4 = sld [smem:[#allocation0]]
  $region45: #{model_forward.5} parent=0
    _
  %s6 = ssub.s32 1, %s4
  %s7 = scalar_select 0, %s6, %s4
  $region1: #{model_forward.5} parent=0
    #allocation2 [shape = 'u8[65536]{0}', space=vmem, size = 0x10000, scoped, tag = 'output window, operand 0']
    #allocation3 [shape = 's32[2]{0}', space=sflag, size = 0x8, scoped, tag = 'scoped memory for model_forward.5']
    %8 = vsyncpa [#allocation3], 0
    %s9 = scalar_lea.sflag [#allocation3], 1
    %10 = vsyncpa %s9, 0
    loop: start=0, step=1, limit=4
    $region2: #{model_forward.5} parent=1 // loop_pre_header
      _
    $region3: #{model_forward.5} parent=1 // loop_header
      %s12 = sphi 0, %s16
      %p13 = scmp.ge.s32.totalorder %s12, 4
      %s19 = sphi 0, %s31
      %s20 = sphi 0, %s27
      %s21 = sphi 0, %s19
      %s22 = sphi 0, %s20
      %s23 = sphi 0, %s21
      %s24 = sphi 0, %s22
      %s34 = sphi 0, %s36
      %s37 = sphi 0, %s34
      %s38 = sphi 0, %s37
      %s54 = sphi 0, %s38
      %s60 = sphi 0, %s62
      %s63 = sphi 0, %s60
      %s64 = sphi 0, %s63
      %s80 = sphi 0, %s64
      %s86 = sphi 0, %s88
      %s89 = sphi 0, %s86
      %s90 = sphi 0, %s89
      %s106 = sphi 0, %s90
      %s114 = sphi 0, %s116
      %s117 = sphi 0, %s114
      %s118 = sphi 0, %s117
      %s134 = sphi 0, %s118
    $region4: #{model_forward.5} parent=1 // loop_header_branch
      %15 = sbr.rel (%p13) target = $region8
    $region5: #{model_forward.5} parent=1 // loop_body
      %s17 = ssub.s32 %s12, 1
      %s18 = ssub.s32 %s12, 2
      %s25 = sadd.s32 1, %s20
      %p26 = scmp.ge.s32.totalorder %s25, 1
      %s27 = scalar_select %p26, 0, %s25
      %s28 = sadd.s32 1, %s19
      %s29 = scalar_select %p26, %s28, %s19
      %p30 = scmp.ge.s32.totalorder %s29, 2
      %s31 = scalar_select %p30, 0, %s29
      %s32 = ssub.s32 %s19, %s31
      %p33 = scmp.eq.s32.totalorder %s32, 0
      %s35 = sadd.s32 %s34, 1
      %s36 = scalar_select %p33, %s34, %s35
      %p39 = pneg %p33
      %p40 = scmp.eq.s32.totalorder %s12, 1
      %p41 = por %p39, %p40
      %p42 = scmp.ne.s32.totalorder %s34, %s37
      %p43 = scmp.eq.s32.totalorder %s12, 0
      %p44 = por %p42, %p43
      %p45 = scmp.ne.s32.totalorder %s34, %s37
      %p46 = scmp.eq.s32.totalorder %s17, 1
      %p47 = por %p45, %p46
      %p48 = scmp.ne.s32.totalorder %s37, %s38
      %p49 = scmp.eq.s32.totalorder %s17, 0
      %p50 = por %p48, %p49
      %p51 = scmp.ne.s32.totalorder %s37, %s38
      %p52 = scmp.eq.s32.totalorder %s18, 1
      %p53 = por %p51, %p52
      %p55 = scmp.ne.s32.totalorder %s38, %s54
      %p56 = scmp.eq.s32.totalorder %s18, 0
      %p57 = por %p55, %p56
      %s58 = ssub.s32 %s20, %s27
      %p59 = scmp.eq.s32.totalorder %s58, 0
      %s61 = sadd.s32 %s60, 1
      %s62 = scalar_select %p59, %s60, %s61
      %p65 = pneg %p59
      %p66 = scmp.eq.s32.totalorder %s12, 1
      %p67 = por %p65, %p66
      %p68 = scmp.ne.s32.totalorder %s60, %s63
      %p69 = scmp.eq.s32.totalorder %s12, 0
      %p70 = por %p68, %p69
      %p71 = scmp.ne.s32.totalorder %s60, %s63
      %p72 = scmp.eq.s32.totalorder %s17, 1
      %p73 = por %p71, %p72
      %p74 = scmp.ne.s32.totalorder %s63, %s64
      %p75 = scmp.eq.s32.totalorder %s17, 0
      %p76 = por %p74, %p75
      %p77 = scmp.ne.s32.totalorder %s63, %s64
      %p78 = scmp.eq.s32.totalorder %s18, 1
      %p79 = por %p77, %p78
      %p81 = scmp.ne.s32.totalorder %s64, %s80
      %p82 = scmp.eq.s32.totalorder %s18, 0
      %p83 = por %p81, %p82
      %s84 = ssub.s32 %s20, %s27
      %p85 = scmp.eq.s32.totalorder %s84, 0
      %s87 = sadd.s32 %s86, 1
      %s88 = scalar_select %p85, %s86, %s87
      %p91 = pneg %p85
      %p92 = scmp.eq.s32.totalorder %s12, 1
      %p93 = por %p91, %p92
      %p94 = scmp.ne.s32.totalorder %s86, %s89
      %p95 = scmp.eq.s32.totalorder %s12, 0
      %p96 = por %p94, %p95
      %p97 = scmp.ne.s32.totalorder %s86, %s89
      %p98 = scmp.eq.s32.totalorder %s17, 1
      %p99 = por %p97, %p98
      %p100 = scmp.ne.s32.totalorder %s89, %s90
      %p101 = scmp.eq.s32.totalorder %s17, 0
      %p102 = por %p100, %p101
      %p103 = scmp.ne.s32.totalorder %s89, %s90
      %p104 = scmp.eq.s32.totalorder %s18, 1
      %p105 = por %p103, %p104
      %p107 = scmp.ne.s32.totalorder %s90, %s106
      %p108 = scmp.eq.s32.totalorder %s18, 0
      %p109 = por %p107, %p108
      %s110 = ssub.s32 %s19, %s31
      %s111 = ssub.s32 %s20, %s27
      %s112 = sor.u32 %s110, %s111
      %p113 = scmp.eq.s32.totalorder %s112, 0
      %s115 = sadd.s32 %s114, 1
      %s116 = scalar_select %p113, %s114, %s115
      %p119 = pneg %p113
      %p120 = scmp.eq.s32.totalorder %s12, 1
      %p121 = por %p119, %p120
      %p122 = scmp.ne.s32.totalorder %s114, %s117
      %p123 = scmp.eq.s32.totalorder %s12, 0
      %p124 = por %p122, %p123
      %p125 = scmp.ne.s32.totalorder %s114, %s117
      %p126 = scmp.eq.s32.totalorder %s17, 1
      %p127 = por %p125, %p126
      %p128 = scmp.ne.s32.totalorder %s117, %s118
      %p129 = scmp.eq.s32.totalorder %s17, 0
      %p130 = por %p128, %p129
      %p131 = scmp.ne.s32.totalorder %s117, %s118
      %p132 = scmp.eq.s32.totalorder %s18, 1
      %p133 = por %p131, %p132
      %p135 = scmp.ne.s32.totalorder %s118, %s134
      %p136 = scmp.eq.s32.totalorder %s18, 0
      %p137 = por %p135, %p136
      %p138 = scmp.le.s32.totalorder 1, %s12
      %p139 = scmp.lt.s32.totalorder %s12, 3
      %p140 = pnand %p138, %p139
      %p141 = pneg %p140
      // Predicated region
      $region9: #{model_forward.5} parent=5 // pred_check
        _
      $region10: #{model_forward.5} parent=5 // pred_check_branch
        %143 = sbr.rel (%p140) target = $region12
      $region11: #{model_forward.5} parent=5 // pred_region
        %s144 = ssub.s32 %s12, 1
        // Predicated region
        $region13: #{model_forward.5} parent=11 // pred_check
          %p145 = pneg %p76
        $region14: #{model_forward.5} parent=11 // pred_check_branch
          %147 = sbr.rel (%p145) target = $region16
        $region15: #{model_forward.5} parent=11 // pred_region
          %p148 = scmp.lt.s32.totalorder %s22, 0
          %s149 = scalar_select %p148, %s22, 0
          %s150 = smul.addr %s149, 4
          %s151 = scalar_lea.vmem %s1, %s150
        $region16: #{model_forward.5} parent=11 // pred_fallthru
          _
        // Predicated region
        $region17: #{model_forward.5} parent=11 // pred_check
          %p152 = pneg %p102
        $region18: #{model_forward.5} parent=11 // pred_check_branch
          %154 = sbr.rel (%p152) target = $region20
        $region19: #{model_forward.5} parent=11 // pred_region
          %p155 = scmp.lt.s32.totalorder %s22, 0
          %s156 = scalar_select %p155, %s22, 0
          %s157 = scalar_lea.vmem %s2, %s156
        $region20: #{model_forward.5} parent=11 // pred_fallthru
          _
      $region12: #{model_forward.5} parent=5 // pred_fallthru
        _
      %p158 = scmp.lt.s32.totalorder %s12, 2
      // Predicated region
      $region21: #{model_forward.5} parent=5 // pred_check
        %p159 = pneg %p158
      $region22: #{model_forward.5} parent=5 // pred_check_branch
        %161 = sbr.rel (%p159) target = $region24
      $region23: #{model_forward.5} parent=5 // pred_region
        // Predicated region
        $region25: #{model_forward.5} parent=23 // pred_check
          %p162 = pneg %p44
        $region26: #{model_forward.5} parent=23 // pred_check_branch
          %164 = sbr.rel (%p162) target = $region28
        $region27: #{model_forward.5} parent=23 // pred_region
          %s165 = smul.u32 8, %s19
          %p166 = scmp.lt.s32.totalorder %s165, 15
          %s167 = scalar_select %p166, %s165, 15
          %s168 = smul.addr %s167, 8
          %s169 = scalar_lea.vmem %s0, %s168
          %s170 = smul.u32 8, %s19
        $region28: #{model_forward.5} parent=23 // pred_fallthru
          _
      $region24: #{model_forward.5} parent=5 // pred_fallthru
        _
      %p171 = scmp.le.s32.totalorder 1, %s12
      %p172 = scmp.lt.s32.totalorder %s12, 3
      %p173 = pnand %p171, %p172
      %p174 = pneg %p173
      // Predicated region
      $region29: #{model_forward.5} parent=5 // pred_check
        _
      $region30: #{model_forward.5} parent=5 // pred_check_branch
        %176 = sbr.rel (%p173) target = $region32
      $region31: #{model_forward.5} parent=5 // pred_region
        %s177 = ssub.s32 %s12, 1
        %s178 = smul.u32 8, %s21
        %p179 = scmp.lt.s32.totalorder %s178, 15
        %s180 = scalar_select %p179, %s178, 15
        %s181 = smul.addr %s180, 8
        %s182 = scalar_lea.vmem %s0, %s181
        %p183 = pneg %p50
        %p184 = pneg %p47
        %p185 = scmp.lt.s32.totalorder %s22, 0
        %s186 = scalar_select %p185, %s22, 0
        %s187 = smul.addr %s186, 4
        %s188 = scalar_lea.vmem %s1, %s187
        %p189 = pneg %p76
        %p190 = pneg %p73
        %p191 = scmp.lt.s32.totalorder %s22, 0
        %s192 = scalar_select %p191, %s22, 0
        %s193 = scalar_lea.vmem %s2, %s192
        %p194 = pneg %p102
        %p195 = pneg %p99
        %p196 = pneg %p130
        %p197 = pneg %p127
        %s198 = sand.u32 %s117, 1
        %s199 = scalar_lea.sflag [#allocation3], %s198
        %s200 = sand.u32 %s117, 1
        %s201 = smul.addr %s200, 64
        %s202 = scalar_lea.vmem [#allocation2], %s201
        %s203 = smul.u32 8, %s21
        %p204 = scmp.lt.s32.totalorder %s203, 15
        %s205 = scalar_select %p204, %s203, 15
        %s206 = smul.addr %s205, 8
        %s207 = scalar_lea.vmem %s0, %s206
        %s208 = smul.u32 8, %s21
        %p209 = scmp.lt.s32.totalorder %s22, 0
        %s210 = scalar_select %p209, %s22, 0
        %s211 = smul.addr %s210, 4
        %s212 = scalar_lea.vmem %s1, %s211
        %p213 = scmp.lt.s32.totalorder %s22, 0
        %s214 = scalar_select %p213, %s22, 0
        %s215 = scalar_lea.vmem %s2, %s214
        %s216 = smul.u32 8, %s21
        %v218 = vld [vmem:[%s207] sm:$0xff]
        %v219 = vld [vmem:[%s207 + $0x8] sm:$0xff]
        %v220 = vld [vmem:[%s207 + $0x10] sm:$0xff]
        %v221 = vld [vmem:[%s207 + $0x18] sm:$0xff]
        %v222 = vld [vmem:[%s207 + $0x20] sm:$0xff]
        %v223 = vld [vmem:[%s207 + $0x28] sm:$0xff]
        %v224 = vld [vmem:[%s207 + $0x30] sm:$0xff]
        %v225 = vld [vmem:[%s207 + $0x38] sm:$0xff]
        %v226 = vpack.c.bf16 %v219, %v218
        %v227 = vpack.c.bf16 %v221, %v220
        %v228 = vpack.c.bf16 %v223, %v222
        %v229 = vpack.c.bf16 %v225, %v224
        %v230 = vld [vmem:[%s212] sm:$0xf]
        %v231 = vld [vmem:[%s212 + $0x4] sm:$0xf]
        %v232 = vld [vmem:[%s212 + $0x8] sm:$0xf]
        %v233 = vld [vmem:[%s212 + $0xc] sm:$0xf]
        %v234 = vld [vmem:[%s215] sm:$0x1]
        %v236 = vlaneseq
        %v237 = vshrl.u32 %v236, 7
        %v238 = vsub.s32 0, %v237
        %v239 = vrot.slane %v234, %v238
        %v245 = vunpack.c.l.b16 %v230
        %v246 = vunpack.c.l.b16 %v231
        %v247 = vunpack.c.l.b16 %v232
        %v248 = vunpack.c.l.b16 %v233
        %v249 = vpack.c.b16 %v246, %v245
        %v250 = vpack.c.b16 %v248, %v247
        %vm253 = vcmask 261120
        %v255 = vsel %vm253, %v226, 0
        %v258 = vsel %vm253, %v227, 0
        %v261 = vsel %vm253, %v228, 0
        %v264 = vsel %vm253, %v229, 0
        %266 = vmatprep.subr.bf16.mxu0 0
        %267 = vmatpush1.bf16.msra.mxu0 %v249
        %268 = vmatprep.subr.bf16.mxu0 0
        %269 = vmatpush1.bf16.msra.mxu0 %v250
        %270 = vmatprep.subr.bf16.mxu0 0
        %271 = vmatpush1.bf16.msra.mxu0 0
        %272 = vmatprep.subr.bf16.mxu0 0
        %273 = vmatpush1.bf16.msra.mxu0 0
        %274 = vmatprep.subr.bf16.mxu0 0
        %275 = vmatpush1.bf16.msra.mxu0 0
        %276 = vmatprep.subr.bf16.mxu0 0
        %277 = vmatpush1.bf16.msra.mxu0 0
        %278 = vmatprep.subr.bf16.mxu0 0
        %279 = vmatpush1.bf16.msra.mxu0 0
        %280 = vmatprep.subr.bf16.mxu0 0
        %281 = vmatpush1.bf16.msra.mxu0 0
        %282 = vmatprep.subr.bf16.mxu0 0
        %283 = vmatpush1.bf16.msra.mxu0 0
        %284 = vmatprep.subr.bf16.mxu0 0
        %285 = vmatpush1.bf16.msra.mxu0 0
        %286 = vmatprep.subr.bf16.mxu0 0
        %287 = vmatpush1.bf16.msra.mxu0 0
        %288 = vmatprep.subr.bf16.mxu0 0
        %289 = vmatpush1.bf16.msra.mxu0 0
        %290 = vmatprep.subr.bf16.mxu0 0
        %291 = vmatpush1.bf16.msra.mxu0 0
        %292 = vmatprep.subr.bf16.mxu0 0
        %293 = vmatpush1.bf16.msra.mxu0 0
        %294 = vmatprep.subr.bf16.mxu0 0
        %295 = vmatpush1.bf16.msra.mxu0 0
        %296 = vmatprep.subr.bf16.mxu0 0
        %297 = vmatpush1.bf16.msra.mxu0 0
        %298 = vmatprep.mubr.bf16.mxu0 0
        %299 = vmatmul.mubr.bf16.gmra.mrb[0].mxu0 %v255
        %v300 = vpop.f32.mrb[0].mxu0
        %v301 = vadd.f32 %v239, %v300
        %v302 = vpop.f32.mrb[0].mxu0
        %v303 = vpop.f32.mrb[0].mxu0
        %v304 = vadd.f32 %v239, %v303
        %v305 = vpop.f32.mrb[0].mxu0
        %306 = vmatprep.mubr.bf16.mxu0 0
        %307 = vmatmul.mubr.bf16.gmra.mrb[0].mxu0 %v258
        %v308 = vpop.f32.mrb[0].mxu0
        %v309 = vadd.f32 %v239, %v308
        %v310 = vpop.f32.mrb[0].mxu0
        %v311 = vpop.f32.mrb[0].mxu0
        %v312 = vadd.f32 %v239, %v311
        %v313 = vpop.f32.mrb[0].mxu0
        %314 = vmatprep.mubr.bf16.mxu0 0
        %315 = vmatmul.mubr.bf16.gmra.mrb[0].mxu0 %v261
        %v316 = vpop.f32.mrb[0].mxu0
        %v317 = vadd.f32 %v239, %v316
        %v318 = vpop.f32.mrb[0].mxu0
        %v319 = vpop.f32.mrb[0].mxu0
        %v320 = vadd.f32 %v239, %v319
        %v321 = vpop.f32.mrb[0].mxu0
        %322 = vmatprep.mubr.bf16.mxu0 0
        %323 = vmatmul.mubr.bf16.gmra.mrb[0].mxu0 %v264
        %v324 = vpop.f32.mrb[0].mxu0
        %v325 = vadd.f32 %v239, %v324
        %v326 = vpop.f32.mrb[0].mxu0
        %v327 = vpop.f32.mrb[0].mxu0
        %v328 = vadd.f32 %v239, %v327
        %v329 = vpop.f32.mrb[0].mxu0
        %330 = vdwg.mxu0
        %vm331 = vcmask 523264
        %332 = vst.msk [vmem:[%s202] sm:$0xff] %vm331, %v301
        %333 = vst.msk [vmem:[%s202 + $0x8] sm:$0xff] %vm331, %v304
        %334 = vst.msk [vmem:[%s202 + $0x10] sm:$0xff] %vm331, %v309
        %335 = vst.msk [vmem:[%s202 + $0x18] sm:$0xff] %vm331, %v312
        %336 = vst.msk [vmem:[%s202 + $0x20] sm:$0xff] %vm331, %v317
        %337 = vst.msk [vmem:[%s202 + $0x28] sm:$0xff] %vm331, %v320
        %338 = vst.msk [vmem:[%s202 + $0x30] sm:$0xff] %vm331, %v325
        %339 = vst.msk [vmem:[%s202 + $0x38] sm:$0xff] %vm331, %v328
        %s340 = sand.u32 %s117, 1
        %s341 = scalar_lea.sflag [#allocation3], %s340
        %s342 = sand.u32 %s117, 1
        %s343 = smul.addr %s342, 64
        %s344 = scalar_lea.vmem [#allocation2], %s343
        // Predicated region
        $region33: #{model_forward.5} parent=31 // pred_check
          %p345 = pneg %p127
        $region34: #{model_forward.5} parent=31 // pred_check_branch
          %347 = sbr.rel (%p345) target = $region36
        $region35: #{model_forward.5} parent=31 // pred_region
          %s348 = smul.u32 8, %s21
          %s350 = ssub.s32 1024, 1024
          %351 = vsyncadd %s341, %s350
          %s352 = sadd.s32 %s22, %s348
          %s353 = smul.addr %s352, 128
          %s354 = scalar_lea.hbm %s3, %s353
          %s355 = sshll.u32 %s344, 4
          %s356 = int_to_ptr.vmem [resolvable:$true] %s355
          %361 = dma.vmem_to_hbm [thread:$0]  %s356, 1024, %s354, %s341, 128, 128, 8
        $region36: #{model_forward.5} parent=31 // pred_fallthru
          _
      $region32: #{model_forward.5} parent=5 // pred_fallthru
        _
      %p362 = scmp.le.s32.totalorder 2, %s12
      // Predicated region
      $region37: #{model_forward.5} parent=5 // pred_check
        %p363 = pneg %p362
      $region38: #{model_forward.5} parent=5 // pred_check_branch
        %365 = sbr.rel (%p363) target = $region40
      $region39: #{model_forward.5} parent=5 // pred_region
        %s366 = ssub.s32 %s12, 2
        // Predicated region
        $region41: #{model_forward.5} parent=39 // pred_check
          %p367 = pneg %p133
        $region42: #{model_forward.5} parent=39 // pred_check_branch
          %369 = sbr.rel (%p367) target = $region44
        $region43: #{model_forward.5} parent=39 // pred_region
          %s370 = sand.u32 %s118, 1
          %s371 = scalar_lea.sflag [#allocation3], %s370
          %s372 = sand.u32 %s118, 1
          %s373 = smul.addr %s372, 64
          %s374 = scalar_lea.vmem [#allocation2], %s373
          %375 = dma.done %s371, 1024
        $region44: #{model_forward.5} parent=39 // pred_fallthru
          _
      $region40: #{model_forward.5} parent=5 // pred_fallthru
        _
    $region6: #{model_forward.5} parent=1 // loop_footer
      %s16 = sadd.s32 1, %s12
    $region7: #{model_forward.5} parent=1 // loop_footer_branch
      %11 = sbr.rel target = $region3
    $region8: #{model_forward.5} parent=1 // loop_exit
      _
    %376 = vsyncpa [#allocation3], 1
    %s377 = scalar_lea.sflag [#allocation3], 1
    %378 = vsyncpa %s377, 1

// kernel: model_forward.3
$region0: #{model_forward.3}
  #allocation0 [shape = 'u32[]', space=smem, size = 0x4, offset = 0x4, fixed_abs, tag = 'smem constant byte address 0x4 - core index']
  #allocation1 [shape = 'u32[144,128]{1,0:T(1,128)}', space=vmem, size = 0x12000, scoped, tag = 'internal scratch']
  %s0 = inlined_call_operand.vmem [shape: f32[2,4,16,32], index: 0, kind: input, shape index: {}]
  %s1 = inlined_call_operand.vmem [shape: f32[16,32], index: 1, kind: input, shape index: {}]
  %s2 = inlined_call_operand.vmem [shape: f32[32,4], index: 2, kind: input, shape index: {}]
  %s3 = inlined_call_operand.vmem [shape: f32[4,32], index: 3, kind: input, shape index: {}]
  %s4 = inlined_call_operand.vmem [shape: f32[1,32], index: 4, kind: input, shape index: {}]
  %s5 = inlined_call_operand.vmem [shape: bf16[32,32], index: 5, kind: input, shape index: {}]
  %s6 = inlined_call_operand.vmem [shape: f32[1,32], index: 6, kind: input, shape index: {}]
  %s7 = inlined_call_operand.vmem [shape: bf16[32,32], index: 7, kind: input, shape index: {}]
  %s8 = inlined_call_operand.vmem [shape: f32[1,32], index: 8, kind: input, shape index: {}]
  %s9 = inlined_call_operand.vmem [shape: bf16[32,32], index: 9, kind: input, shape index: {}]
  %s10 = inlined_call_operand.vmem [shape: f32[1,32], index: 10, kind: input, shape index: {}]
  %s11 = inlined_call_operand.vmem [shape: bf16[32,128], index: 11, kind: input, shape index: {}]
  %s12 = inlined_call_operand.vmem [shape: f32[1,128], index: 12, kind: input, shape index: {}]
  %s13 = inlined_call_operand.vmem [shape: f32[4,64], index: 13, kind: input, shape index: {}]
  %s14 = inlined_call_operand.vmem [shape: f32[1,64], index: 14, kind: input, shape index: {}]
  %s15 = inlined_call_operand.vmem [shape: bf16[64,32], index: 15, kind: input, shape index: {}]
  %s16 = inlined_call_operand.vmem [shape: f32[1,32], index: 16, kind: input, shape index: {}]
  %s17 = inlined_call_operand.vmem [shape: f32[1,32], index: 17, kind: input, shape index: {}]
  %s18 = inlined_call_operand.vmem [shape: f32[1,32], index: 18, kind: input, shape index: {}]
  %s19 = inlined_call_operand.vmem [shape: bf16[32,64], index: 19, kind: input, shape index: {}]
  %s20 = inlined_call_operand.vmem [shape: f32[1,64], index: 20, kind: input, shape index: {}]
  %s21 = inlined_call_operand.vmem [shape: bf16[32,32], index: 21, kind: input, shape index: {}]
  %s22 = inlined_call_operand.vmem [shape: f32[1,32], index: 22, kind: input, shape index: {}]
  %s23 = inlined_call_operand.vmem [shape: bf16[32,128], index: 23, kind: input, shape index: {}]
  %s24 = inlined_call_operand.vmem [shape: f32[1,128], index: 24, kind: input, shape index: {}]
  %s25 = inlined_call_operand.vmem [shape: bf16[128,32], index: 25, kind: input, shape index: {}]
  %s26 = inlined_call_operand.vmem [shape: f32[1,32], index: 26, kind: input, shape index: {}]
  %s27 = inlined_call_operand.vmem [shape: f32[1,32], index: 27, kind: input, shape index: {}]
  %s28 = inlined_call_operand.vmem [shape: f32[2,4,16,32], index: 28, kind: output, shape index: {}]
  %s29 = sld [smem:[#allocation0]]
  $region145: #{model_forward.3} parent=0
    _
  %s31 = ssub.s32 1, %s29
  %s32 = scalar_select 0, %s31, %s29
  loop: start=0, step=1, limit=4
  $region2: #{model_forward.3} parent=0 // loop_pre_header
    _
  $region3: #{model_forward.3} parent=0 // loop_header
    %s34 = sphi 0, %s38
    %p35 = scmp.ge.s32.totalorder %s34, 4
    %s44 = sphi 0, %s46
    %s47 = sphi 0, %s44
    %s48 = sphi 0, %s47
    %s64 = sphi 0, %s48
    %s68 = sphi 0, %s68
    %s70 = sphi 0, %s68
    %s71 = sphi 0, %s70
    %s85 = sphi 0, %s71
    %s89 = sphi 0, %s89
    %s91 = sphi 0, %s89
    %s92 = sphi 0, %s91
    %s106 = sphi 0, %s92
    %s110 = sphi 0, %s110
    %s112 = sphi 0, %s110
    %s113 = sphi 0, %s112
    %s127 = sphi 0, %s113
    %s131 = sphi 0, %s131
    %s133 = sphi 0, %s131
    %s134 = sphi 0, %s133
    %s148 = sphi 0, %s134
    %s152 = sphi 0, %s152
    %s154 = sphi 0, %s152
    %s155 = sphi 0, %s154
    %s169 = sphi 0, %s155
    %s173 = sphi 0, %s173
    %s175 = sphi 0, %s173
    %s176 = sphi 0, %s175
    %s190 = sphi 0, %s176
    %s194 = sphi 0, %s194
    %s196 = sphi 0, %s194
    %s197 = sphi 0, %s196
    %s211 = sphi 0, %s197
    %s215 = sphi 0, %s215
    %s217 = sphi 0, %s215
    %s218 = sphi 0, %s217
    %s232 = sphi 0, %s218
    %s236 = sphi 0, %s236
    %s238 = sphi 0, %s236
    %s239 = sphi 0, %s238
    %s253 = sphi 0, %s239
    %s257 = sphi 0, %s257
    %s259 = sphi 0, %s257
    %s260 = sphi 0, %s259
    %s274 = sphi 0, %s260
    %s278 = sphi 0, %s278
    %s280 = sphi 0, %s278
    %s281 = sphi 0, %s280
    %s295 = sphi 0, %s281
    %s299 = sphi 0, %s299
    %s301 = sphi 0, %s299
    %s302 = sphi 0, %s301
    %s316 = sphi 0, %s302
    %s320 = sphi 0, %s320
    %s322 = sphi 0, %s320
    %s323 = sphi 0, %s322
    %s337 = sphi 0, %s323
    %s341 = sphi 0, %s341
    %s343 = sphi 0, %s341
    %s344 = sphi 0, %s343
    %s358 = sphi 0, %s344
    %s362 = sphi 0, %s362
    %s364 = sphi 0, %s362
    %s365 = sphi 0, %s364
    %s379 = sphi 0, %s365
    %s383 = sphi 0, %s383
    %s385 = sphi 0, %s383
    %s386 = sphi 0, %s385
    %s400 = sphi 0, %s386
    %s404 = sphi 0, %s404
    %s406 = sphi 0, %s404
    %s407 = sphi 0, %s406
    %s421 = sphi 0, %s407
    %s425 = sphi 0, %s425
    %s427 = sphi 0, %s425
    %s428 = sphi 0, %s427
    %s442 = sphi 0, %s428
    %s446 = sphi 0, %s446
    %s448 = sphi 0, %s446
    %s449 = sphi 0, %s448
    %s463 = sphi 0, %s449
    %s467 = sphi 0, %s467
    %s469 = sphi 0, %s467
    %s470 = sphi 0, %s469
    %s484 = sphi 0, %s470
    %s488 = sphi 0, %s488
    %s490 = sphi 0, %s488
    %s491 = sphi 0, %s490
    %s505 = sphi 0, %s491
    %s509 = sphi 0, %s509
    %s511 = sphi 0, %s509
    %s512 = sphi 0, %s511
    %s526 = sphi 0, %s512
    %s530 = sphi 0, %s530
    %s532 = sphi 0, %s530
    %s533 = sphi 0, %s532
    %s547 = sphi 0, %s533
    %s551 = sphi 0, %s551
    %s553 = sphi 0, %s551
    %s554 = sphi 0, %s553
    %s568 = sphi 0, %s554
    %s572 = sphi 0, %s572
    %s574 = sphi 0, %s572
    %s575 = sphi 0, %s574
    %s589 = sphi 0, %s575
    %s593 = sphi 0, %s593
    %s595 = sphi 0, %s593
    %s596 = sphi 0, %s595
    %s610 = sphi 0, %s596
    %s614 = sphi 0, %s614
    %s616 = sphi 0, %s614
    %s617 = sphi 0, %s616
    %s631 = sphi 0, %s617
    %s637 = sphi 0, %s639
    %s640 = sphi 0, %s637
    %s641 = sphi 0, %s640
    %s657 = sphi 0, %s641
  $region4: #{model_forward.3} parent=0 // loop_header_branch
    %37 = sbr.rel (%p35) target = $region8
  $region5: #{model_forward.3} parent=0 // loop_body
    %s39 = ssub.s32 %s34, 1
    %s40 = ssub.s32 %s34, 2
    %s41 = sadd.s32 %s34, 1
    %s42 = ssub.s32 %s34, %s41
    %p43 = scmp.eq.s32.totalorder %s42, 0
    %s45 = sadd.s32 %s44, 1
    %s46 = scalar_select %p43, %s44, %s45
    %p49 = pneg %p43
    %p50 = scmp.eq.s32.totalorder %s34, 1
    %p51 = por %p49, %p50
    %p52 = scmp.ne.s32.totalorder %s44, %s47
    %p53 = scmp.eq.s32.totalorder %s34, 0
    %p54 = por %p52, %p53
    %p55 = scmp.ne.s32.totalorder %s44, %s47
    %p56 = scmp.eq.s32.totalorder %s39, 1
    %p57 = por %p55, %p56
    %p58 = scmp.ne.s32.totalorder %s47, %s48
    %p59 = scmp.eq.s32.totalorder %s39, 0
    %p60 = por %p58, %p59
    %p61 = scmp.ne.s32.totalorder %s47, %s48
    %p62 = scmp.eq.s32.totalorder %s40, 1
    %p63 = por %p61, %p62
    %p65 = scmp.ne.s32.totalorder %s48, %s64
    %p66 = scmp.eq.s32.totalorder %s40, 0
    %p67 = por %p65, %p66
    %s69 = sadd.s32 %s68, 1
    %p72 = scmp.eq.s32.totalorder %s34, 1
    %p73 = scmp.ne.s32.totalorder %s68, %s70
    %p74 = scmp.eq.s32.totalorder %s34, 0
    %p75 = por %p73, %p74
    %p76 = scmp.ne.s32.totalorder %s68, %s70
    %p77 = scmp.eq.s32.totalorder %s39, 1
    %p78 = por %p76, %p77
    %p79 = scmp.ne.s32.totalorder %s70, %s71
    %p80 = scmp.eq.s32.totalorder %s39, 0
    %p81 = por %p79, %p80
    %p82 = scmp.ne.s32.totalorder %s70, %s71
    %p83 = scmp.eq.s32.totalorder %s40, 1
    %p84 = por %p82, %p83
    %p86 = scmp.ne.s32.totalorder %s71, %s85
    %p87 = scmp.eq.s32.totalorder %s40, 0
    %p88 = por %p86, %p87
    %s90 = sadd.s32 %s89, 1
    %p93 = scmp.eq.s32.totalorder %s34, 1
    %p94 = scmp.ne.s32.totalorder %s89, %s91
    %p95 = scmp.eq.s32.totalorder %s34, 0
    %p96 = por %p94, %p95
    %p97 = scmp.ne.s32.totalorder %s89, %s91
    %p98 = scmp.eq.s32.totalorder %s39, 1
    %p99 = por %p97, %p98
    %p100 = scmp.ne.s32.totalorder %s91, %s92
    %p101 = scmp.eq.s32.totalorder %s39, 0
    %p102 = por %p100, %p101
    %p103 = scmp.ne.s32.totalorder %s91, %s92
    %p104 = scmp.eq.s32.totalorder %s40, 1
    %p105 = por %p103, %p104
    %p107 = scmp.ne.s32.totalorder %s92, %s106
    %p108 = scmp.eq.s32.totalorder %s40, 0
    %p109 = por %p107, %p108
    %s111 = sadd.s32 %s110, 1
    %p114 = scmp.eq.s32.totalorder %s34, 1
    %p115 = scmp.ne.s32.totalorder %s110, %s112
    %p116 = scmp.eq.s32.totalorder %s34, 0
    %p117 = por %p115, %p116
    %p118 = scmp.ne.s32.totalorder %s110, %s112
    %p119 = scmp.eq.s32.totalorder %s39, 1
    %p120 = por %p118, %p119
    %p121 = scmp.ne.s32.totalorder %s112, %s113
    %p122 = scmp.eq.s32.totalorder %s39, 0
    %p123 = por %p121, %p122
    %p124 = scmp.ne.s32.totalorder %s112, %s113
    %p125 = scmp.eq.s32.totalorder %s40, 1
    %p126 = por %p124, %p125
    %p128 = scmp.ne.s32.totalorder %s113, %s127
    %p129 = scmp.eq.s32.totalorder %s40, 0
    %p130 = por %p128, %p129
    %s132 = sadd.s32 %s131, 1
    %p135 = scmp.eq.s32.totalorder %s34, 1
    %p136 = scmp.ne.s32.totalorder %s131, %s133
    %p137 = scmp.eq.s32.totalorder %s34, 0
    %p138 = por %p136, %p137
    %p139 = scmp.ne.s32.totalorder %s131, %s133
    %p140 = scmp.eq.s32.totalorder %s39, 1
    %p141 = por %p139, %p140
    %p142 = scmp.ne.s32.totalorder %s133, %s134
    %p143 = scmp.eq.s32.totalorder %s39, 0
    %p144 = por %p142, %p143
    %p145 = scmp.ne.s32.totalorder %s133, %s134
    %p146 = scmp.eq.s32.totalorder %s40, 1
    %p147 = por %p145, %p146
    %p149 = scmp.ne.s32.totalorder %s134, %s148
    %p150 = scmp.eq.s32.totalorder %s40, 0
    %p151 = por %p149, %p150
    %s153 = sadd.s32 %s152, 1
    %p156 = scmp.eq.s32.totalorder %s34, 1
    %p157 = scmp.ne.s32.totalorder %s152, %s154
    %p158 = scmp.eq.s32.totalorder %s34, 0
    %p159 = por %p157, %p158
    %p160 = scmp.ne.s32.totalorder %s152, %s154
    %p161 = scmp.eq.s32.totalorder %s39, 1
    %p162 = por %p160, %p161
    %p163 = scmp.ne.s32.totalorder %s154, %s155
    %p164 = scmp.eq.s32.totalorder %s39, 0
    %p165 = por %p163, %p164
    %p166 = scmp.ne.s32.totalorder %s154, %s155
    %p167 = scmp.eq.s32.totalorder %s40, 1
    %p168 = por %p166, %p167
    %p170 = scmp.ne.s32.totalorder %s155, %s169
    %p171 = scmp.eq.s32.totalorder %s40, 0
    %p172 = por %p170, %p171
    %s174 = sadd.s32 %s173, 1
    %p177 = scmp.eq.s32.totalorder %s34, 1
    %p178 = scmp.ne.s32.totalorder %s173, %s175
    %p179 = scmp.eq.s32.totalorder %s34, 0
    %p180 = por %p178, %p179
    %p181 = scmp.ne.s32.totalorder %s173, %s175
    %p182 = scmp.eq.s32.totalorder %s39, 1
    %p183 = por %p181, %p182
    %p184 = scmp.ne.s32.totalorder %s175, %s176
    %p185 = scmp.eq.s32.totalorder %s39, 0
    %p186 = por %p184, %p185
    %p187 = scmp.ne.s32.totalorder %s175, %s176
    %p188 = scmp.eq.s32.totalorder %s40, 1
    %p189 = por %p187, %p188
    %p191 = scmp.ne.s32.totalorder %s176, %s190
    %p192 = scmp.eq.s32.totalorder %s40, 0
    %p193 = por %p191, %p192
    %s195 = sadd.s32 %s194, 1
    %p198 = scmp.eq.s32.totalorder %s34, 1
    %p199 = scmp.ne.s32.totalorder %s194, %s196
    %p200 = scmp.eq.s32.totalorder %s34, 0
    %p201 = por %p199, %p200
    %p202 = scmp.ne.s32.totalorder %s194, %s196
    %p203 = scmp.eq.s32.totalorder %s39, 1
    %p204 = por %p202, %p203
    %p205 = scmp.ne.s32.totalorder %s196, %s197
    %p206 = scmp.eq.s32.totalorder %s39, 0
    %p207 = por %p205, %p206
    %p208 = scmp.ne.s32.totalorder %s196, %s197
    %p209 = scmp.eq.s32.totalorder %s40, 1
    %p210 = por %p208, %p209
    %p212 = scmp.ne.s32.totalorder %s197, %s211
    %p213 = scmp.eq.s32.totalorder %s40, 0
    %p214 = por %p212, %p213
    %s216 = sadd.s32 %s215, 1
    %p219 = scmp.eq.s32.totalorder %s34, 1
    %p220 = scmp.ne.s32.totalorder %s215, %s217
    %p221 = scmp.eq.s32.totalorder %s34, 0
    %p222 = por %p220, %p221
    %p223 = scmp.ne.s32.totalorder %s215, %s217
    %p224 = scmp.eq.s32.totalorder %s39, 1
    %p225 = por %p223, %p224
    %p226 = scmp.ne.s32.totalorder %s217, %s218
    %p227 = scmp.eq.s32.totalorder %s39, 0
    %p228 = por %p226, %p227
    %p229 = scmp.ne.s32.totalorder %s217, %s218
    %p230 = scmp.eq.s32.totalorder %s40, 1
    %p231 = por %p229, %p230
    %p233 = scmp.ne.s32.totalorder %s218, %s232
    %p234 = scmp.eq.s32.totalorder %s40, 0
    %p235 = por %p233, %p234
    %s237 = sadd.s32 %s236, 1
    %p240 = scmp.eq.s32.totalorder %s34, 1
    %p241 = scmp.ne.s32.totalorder %s236, %s238
    %p242 = scmp.eq.s32.totalorder %s34, 0
    %p243 = por %p241, %p242
    %p244 = scmp.ne.s32.totalorder %s236, %s238
    %p245 = scmp.eq.s32.totalorder %s39, 1
    %p246 = por %p244, %p245
    %p247 = scmp.ne.s32.totalorder %s238, %s239
    %p248 = scmp.eq.s32.totalorder %s39, 0
    %p249 = por %p247, %p248
    %p250 = scmp.ne.s32.totalorder %s238, %s239
    %p251 = scmp.eq.s32.totalorder %s40, 1
    %p252 = por %p250, %p251
    %p254 = scmp.ne.s32.totalorder %s239, %s253
    %p255 = scmp.eq.s32.totalorder %s40, 0
    %p256 = por %p254, %p255
    %s258 = sadd.s32 %s257, 1
    %p261 = scmp.eq.s32.totalorder %s34, 1
    %p262 = scmp.ne.s32.totalorder %s257, %s259
    %p263 = scmp.eq.s32.totalorder %s34, 0
    %p264 = por %p262, %p263
    %p265 = scmp.ne.s32.totalorder %s257, %s259
    %p266 = scmp.eq.s32.totalorder %s39, 1
    %p267 = por %p265, %p266
    %p268 = scmp.ne.s32.totalorder %s259, %s260
    %p269 = scmp.eq.s32.totalorder %s39, 0
    %p270 = por %p268, %p269
    %p271 = scmp.ne.s32.totalorder %s259, %s260
    %p272 = scmp.eq.s32.totalorder %s40, 1
    %p273 = por %p271, %p272
    %p275 = scmp.ne.s32.totalorder %s260, %s274
    %p276 = scmp.eq.s32.totalorder %s40, 0
    %p277 = por %p275, %p276
    %s279 = sadd.s32 %s278, 1
    %p282 = scmp.eq.s32.totalorder %s34, 1
    %p283 = scmp.ne.s32.totalorder %s278, %s280
    %p284 = scmp.eq.s32.totalorder %s34, 0
    %p285 = por %p283, %p284
    %p286 = scmp.ne.s32.totalorder %s278, %s280
    %p287 = scmp.eq.s32.totalorder %s39, 1
    %p288 = por %p286, %p287
    %p289 = scmp.ne.s32.totalorder %s280, %s281
    %p290 = scmp.eq.s32.totalorder %s39, 0
    %p291 = por %p289, %p290
    %p292 = scmp.ne.s32.totalorder %s280, %s281
    %p293 = scmp.eq.s32.totalorder %s40, 1
    %p294 = por %p292, %p293
    %p296 = scmp.ne.s32.totalorder %s281, %s295
    %p297 = scmp.eq.s32.totalorder %s40, 0
    %p298 = por %p296, %p297
    %s300 = sadd.s32 %s299, 1
    %p303 = scmp.eq.s32.totalorder %s34, 1
    %p304 = scmp.ne.s32.totalorder %s299, %s301
    %p305 = scmp.eq.s32.totalorder %s34, 0
    %p306 = por %p304, %p305
    %p307 = scmp.ne.s32.totalorder %s299, %s301
    %p308 = scmp.eq.s32.totalorder %s39, 1
    %p309 = por %p307, %p308
    %p310 = scmp.ne.s32.totalorder %s301, %s302
    %p311 = scmp.eq.s32.totalorder %s39, 0
    %p312 = por %p310, %p311
    %p313 = scmp.ne.s32.totalorder %s301, %s302
    %p314 = scmp.eq.s32.totalorder %s40, 1
    %p315 = por %p313, %p314
    %p317 = scmp.ne.s32.totalorder %s302, %s316
    %p318 = scmp.eq.s32.totalorder %s40, 0
    %p319 = por %p317, %p318
    %s321 = sadd.s32 %s320, 1
    %p324 = scmp.eq.s32.totalorder %s34, 1
    %p325 = scmp.ne.s32.totalorder %s320, %s322
    %p326 = scmp.eq.s32.totalorder %s34, 0
    %p327 = por %p325, %p326
    %p328 = scmp.ne.s32.totalorder %s320, %s322
    %p329 = scmp.eq.s32.totalorder %s39, 1
    %p330 = por %p328, %p329
    %p331 = scmp.ne.s32.totalorder %s322, %s323
    %p332 = scmp.eq.s32.totalorder %s39, 0
    %p333 = por %p331, %p332
    %p334 = scmp.ne.s32.totalorder %s322, %s323
    %p335 = scmp.eq.s32.totalorder %s40, 1
    %p336 = por %p334, %p335
    %p338 = scmp.ne.s32.totalorder %s323, %s337
    %p339 = scmp.eq.s32.totalorder %s40, 0
    %p340 = por %p338, %p339
    %s342 = sadd.s32 %s341, 1
    %p345 = scmp.eq.s32.totalorder %s34, 1
    %p346 = scmp.ne.s32.totalorder %s341, %s343
    %p347 = scmp.eq.s32.totalorder %s34, 0
    %p348 = por %p346, %p347
    %p349 = scmp.ne.s32.totalorder %s341, %s343
    %p350 = scmp.eq.s32.totalorder %s39, 1
    %p351 = por %p349, %p350
    %p352 = scmp.ne.s32.totalorder %s343, %s344
    %p353 = scmp.eq.s32.totalorder %s39, 0
    %p354 = por %p352, %p353
    %p355 = scmp.ne.s32.totalorder %s343, %s344
    %p356 = scmp.eq.s32.totalorder %s40, 1
    %p357 = por %p355, %p356
    %p359 = scmp.ne.s32.totalorder %s344, %s358
    %p360 = scmp.eq.s32.totalorder %s40, 0
    %p361 = por %p359, %p360
    %s363 = sadd.s32 %s362, 1
    %p366 = scmp.eq.s32.totalorder %s34, 1
    %p367 = scmp.ne.s32.totalorder %s362, %s364
    %p368 = scmp.eq.s32.totalorder %s34, 0
    %p369 = por %p367, %p368
    %p370 = scmp.ne.s32.totalorder %s362, %s364
    %p371 = scmp.eq.s32.totalorder %s39, 1
    %p372 = por %p370, %p371
    %p373 = scmp.ne.s32.totalorder %s364, %s365
    %p374 = scmp.eq.s32.totalorder %s39, 0
    %p375 = por %p373, %p374
    %p376 = scmp.ne.s32.totalorder %s364, %s365
    %p377 = scmp.eq.s32.totalorder %s40, 1
    %p378 = por %p376, %p377
    %p380 = scmp.ne.s32.totalorder %s365, %s379
    %p381 = scmp.eq.s32.totalorder %s40, 0
    %p382 = por %p380, %p381
    %s384 = sadd.s32 %s383, 1
    %p387 = scmp.eq.s32.totalorder %s34, 1
    %p388 = scmp.ne.s32.totalorder %s383, %s385
    %p389 = scmp.eq.s32.totalorder %s34, 0
    %p390 = por %p388, %p389
    %p391 = scmp.ne.s32.totalorder %s383, %s385
    %p392 = scmp.eq.s32.totalorder %s39, 1
    %p393 = por %p391, %p392
    %p394 = scmp.ne.s32.totalorder %s385, %s386
    %p395 = scmp.eq.s32.totalorder %s39, 0
    %p396 = por %p394, %p395
    %p397 = scmp.ne.s32.totalorder %s385, %s386
    %p398 = scmp.eq.s32.totalorder %s40, 1
    %p399 = por %p397, %p398
    %p401 = scmp.ne.s32.totalorder %s386, %s400
    %p402 = scmp.eq.s32.totalorder %s40, 0
    %p403 = por %p401, %p402
    %s405 = sadd.s32 %s404, 1
    %p408 = scmp.eq.s32.totalorder %s34, 1
    %p409 = scmp.ne.s32.totalorder %s404, %s406
    %p410 = scmp.eq.s32.totalorder %s34, 0
    %p411 = por %p409, %p410
    %p412 = scmp.ne.s32.totalorder %s404, %s406
    %p413 = scmp.eq.s32.totalorder %s39, 1
    %p414 = por %p412, %p413
    %p415 = scmp.ne.s32.totalorder %s406, %s407
    %p416 = scmp.eq.s32.totalorder %s39, 0
    %p417 = por %p415, %p416
    %p418 = scmp.ne.s32.totalorder %s406, %s407
    %p419 = scmp.eq.s32.totalorder %s40, 1
    %p420 = por %p418, %p419
    %p422 = scmp.ne.s32.totalorder %s407, %s421
    %p423 = scmp.eq.s32.totalorder %s40, 0
    %p424 = por %p422, %p423
    %s426 = sadd.s32 %s425, 1
    %p429 = scmp.eq.s32.totalorder %s34, 1
    %p430 = scmp.ne.s32.totalorder %s425, %s427
    %p431 = scmp.eq.s32.totalorder %s34, 0
    %p432 = por %p430, %p431
    %p433 = scmp.ne.s32.totalorder %s425, %s427
    %p434 = scmp.eq.s32.totalorder %s39, 1
    %p435 = por %p433, %p434
    %p436 = scmp.ne.s32.totalorder %s427, %s428
    %p437 = scmp.eq.s32.totalorder %s39, 0
    %p438 = por %p436, %p437
    %p439 = scmp.ne.s32.totalorder %s427, %s428
    %p440 = scmp.eq.s32.totalorder %s40, 1
    %p441 = por %p439, %p440
    %p443 = scmp.ne.s32.totalorder %s428, %s442
    %p444 = scmp.eq.s32.totalorder %s40, 0
    %p445 = por %p443, %p444
    %s447 = sadd.s32 %s446, 1
    %p450 = scmp.eq.s32.totalorder %s34, 1
    %p451 = scmp.ne.s32.totalorder %s446, %s448
    %p452 = scmp.eq.s32.totalorder %s34, 0
    %p453 = por %p451, %p452
    %p454 = scmp.ne.s32.totalorder %s446, %s448
    %p455 = scmp.eq.s32.totalorder %s39, 1
    %p456 = por %p454, %p455
    %p457 = scmp.ne.s32.totalorder %s448, %s449
    %p458 = scmp.eq.s32.totalorder %s39, 0
    %p459 = por %p457, %p458
    %p460 = scmp.ne.s32.totalorder %s448, %s449
    %p461 = scmp.eq.s32.totalorder %s40, 1
    %p462 = por %p460, %p461
    %p464 = scmp.ne.s32.totalorder %s449, %s463
    %p465 = scmp.eq.s32.totalorder %s40, 0
    %p466 = por %p464, %p465
    %s468 = sadd.s32 %s467, 1
    %p471 = scmp.eq.s32.totalorder %s34, 1
    %p472 = scmp.ne.s32.totalorder %s467, %s469
    %p473 = scmp.eq.s32.totalorder %s34, 0
    %p474 = por %p472, %p473
    %p475 = scmp.ne.s32.totalorder %s467, %s469
    %p476 = scmp.eq.s32.totalorder %s39, 1
    %p477 = por %p475, %p476
    %p478 = scmp.ne.s32.totalorder %s469, %s470
    %p479 = scmp.eq.s32.totalorder %s39, 0
    %p480 = por %p478, %p479
    %p481 = scmp.ne.s32.totalorder %s469, %s470
    %p482 = scmp.eq.s32.totalorder %s40, 1
    %p483 = por %p481, %p482
    %p485 = scmp.ne.s32.totalorder %s470, %s484
    %p486 = scmp.eq.s32.totalorder %s40, 0
    %p487 = por %p485, %p486
    %s489 = sadd.s32 %s488, 1
    %p492 = scmp.eq.s32.totalorder %s34, 1
    %p493 = scmp.ne.s32.totalorder %s488, %s490
    %p494 = scmp.eq.s32.totalorder %s34, 0
    %p495 = por %p493, %p494
    %p496 = scmp.ne.s32.totalorder %s488, %s490
    %p497 = scmp.eq.s32.totalorder %s39, 1
    %p498 = por %p496, %p497
    %p499 = scmp.ne.s32.totalorder %s490, %s491
    %p500 = scmp.eq.s32.totalorder %s39, 0
    %p501 = por %p499, %p500
    %p502 = scmp.ne.s32.totalorder %s490, %s491
    %p503 = scmp.eq.s32.totalorder %s40, 1
    %p504 = por %p502, %p503
    %p506 = scmp.ne.s32.totalorder %s491, %s505
    %p507 = scmp.eq.s32.totalorder %s40, 0
    %p508 = por %p506, %p507
    %s510 = sadd.s32 %s509, 1
    %p513 = scmp.eq.s32.totalorder %s34, 1
    %p514 = scmp.ne.s32.totalorder %s509, %s511
    %p515 = scmp.eq.s32.totalorder %s34, 0
    %p516 = por %p514, %p515
    %p517 = scmp.ne.s32.totalorder %s509, %s511
    %p518 = scmp.eq.s32.totalorder %s39, 1
    %p519 = por %p517, %p518
    %p520 = scmp.ne.s32.totalorder %s511, %s512
    %p521 = scmp.eq.s32.totalorder %s39, 0
    %p522 = por %p520, %p521
    %p523 = scmp.ne.s32.totalorder %s511, %s512
    %p524 = scmp.eq.s32.totalorder %s40, 1
    %p525 = por %p523, %p524
    %p527 = scmp.ne.s32.totalorder %s512, %s526
    %p528 = scmp.eq.s32.totalorder %s40, 0
    %p529 = por %p527, %p528
    %s531 = sadd.s32 %s530, 1
    %p534 = scmp.eq.s32.totalorder %s34, 1
    %p535 = scmp.ne.s32.totalorder %s530, %s532
    %p536 = scmp.eq.s32.totalorder %s34, 0
    %p537 = por %p535, %p536
    %p538 = scmp.ne.s32.totalorder %s530, %s532
    %p539 = scmp.eq.s32.totalorder %s39, 1
    %p540 = por %p538, %p539
    %p541 = scmp.ne.s32.totalorder %s532, %s533
    %p542 = scmp.eq.s32.totalorder %s39, 0
    %p543 = por %p541, %p542
    %p544 = scmp.ne.s32.totalorder %s532, %s533
    %p545 = scmp.eq.s32.totalorder %s40, 1
    %p546 = por %p544, %p545
    %p548 = scmp.ne.s32.totalorder %s533, %s547
    %p549 = scmp.eq.s32.totalorder %s40, 0
    %p550 = por %p548, %p549
    %s552 = sadd.s32 %s551, 1
    %p555 = scmp.eq.s32.totalorder %s34, 1
    %p556 = scmp.ne.s32.totalorder %s551, %s553
    %p557 = scmp.eq.s32.totalorder %s34, 0
    %p558 = por %p556, %p557
    %p559 = scmp.ne.s32.totalorder %s551, %s553
    %p560 = scmp.eq.s32.totalorder %s39, 1
    %p561 = por %p559, %p560
    %p562 = scmp.ne.s32.totalorder %s553, %s554
    %p563 = scmp.eq.s32.totalorder %s39, 0
    %p564 = por %p562, %p563
    %p565 = scmp.ne.s32.totalorder %s553, %s554
    %p566 = scmp.eq.s32.totalorder %s40, 1
    %p567 = por %p565, %p566
    %p569 = scmp.ne.s32.totalorder %s554, %s568
    %p570 = scmp.eq.s32.totalorder %s40, 0
    %p571 = por %p569, %p570
    %s573 = sadd.s32 %s572, 1
    %p576 = scmp.eq.s32.totalorder %s34, 1
    %p577 = scmp.ne.s32.totalorder %s572, %s574
    %p578 = scmp.eq.s32.totalorder %s34, 0
    %p579 = por %p577, %p578
    %p580 = scmp.ne.s32.totalorder %s572, %s574
    %p581 = scmp.eq.s32.totalorder %s39, 1
    %p582 = por %p580, %p581
    %p583 = scmp.ne.s32.totalorder %s574, %s575
    %p584 = scmp.eq.s32.totalorder %s39, 0
    %p585 = por %p583, %p584
    %p586 = scmp.ne.s32.totalorder %s574, %s575
    %p587 = scmp.eq.s32.totalorder %s40, 1
    %p588 = por %p586, %p587
    %p590 = scmp.ne.s32.totalorder %s575, %s589
    %p591 = scmp.eq.s32.totalorder %s40, 0
    %p592 = por %p590, %p591
    %s594 = sadd.s32 %s593, 1
    %p597 = scmp.eq.s32.totalorder %s34, 1
    %p598 = scmp.ne.s32.totalorder %s593, %s595
    %p599 = scmp.eq.s32.totalorder %s34, 0
    %p600 = por %p598, %p599
    %p601 = scmp.ne.s32.totalorder %s593, %s595
    %p602 = scmp.eq.s32.totalorder %s39, 1
    %p603 = por %p601, %p602
    %p604 = scmp.ne.s32.totalorder %s595, %s596
    %p605 = scmp.eq.s32.totalorder %s39, 0
    %p606 = por %p604, %p605
    %p607 = scmp.ne.s32.totalorder %s595, %s596
    %p608 = scmp.eq.s32.totalorder %s40, 1
    %p609 = por %p607, %p608
    %p611 = scmp.ne.s32.totalorder %s596, %s610
    %p612 = scmp.eq.s32.totalorder %s40, 0
    %p613 = por %p611, %p612
    %s615 = sadd.s32 %s614, 1
    %p618 = scmp.eq.s32.totalorder %s34, 1
    %p619 = scmp.ne.s32.totalorder %s614, %s616
    %p620 = scmp.eq.s32.totalorder %s34, 0
    %p621 = por %p619, %p620
    %p622 = scmp.ne.s32.totalorder %s614, %s616
    %p623 = scmp.eq.s32.totalorder %s39, 1
    %p624 = por %p622, %p623
    %p625 = scmp.ne.s32.totalorder %s616, %s617
    %p626 = scmp.eq.s32.totalorder %s39, 0
    %p627 = por %p625, %p626
    %p628 = scmp.ne.s32.totalorder %s616, %s617
    %p629 = scmp.eq.s32.totalorder %s40, 1
    %p630 = por %p628, %p629
    %p632 = scmp.ne.s32.totalorder %s617, %s631
    %p633 = scmp.eq.s32.totalorder %s40, 0
    %p634 = por %p632, %p633
    %s635 = ssub.s32 %s34, %s41
    %p636 = scmp.eq.s32.totalorder %s635, 0
    %s638 = sadd.s32 %s637, 1
    %s639 = scalar_select %p636, %s637, %s638
    %p642 = pneg %p636
    %p643 = scmp.eq.s32.totalorder %s34, 1
    %p644 = por %p642, %p643
    %p645 = scmp.ne.s32.totalorder %s637, %s640
    %p646 = scmp.eq.s32.totalorder %s34, 0
    %p647 = por %p645, %p646
    %p648 = scmp.ne.s32.totalorder %s637, %s640
    %p649 = scmp.eq.s32.totalorder %s39, 1
    %p650 = por %p648, %p649
    %p651 = scmp.ne.s32.totalorder %s640, %s641
    %p652 = scmp.eq.s32.totalorder %s39, 0
    %p653 = por %p651, %p652
    %p654 = scmp.ne.s32.totalorder %s640, %s641
    %p655 = scmp.eq.s32.totalorder %s40, 1
    %p656 = por %p654, %p655
    %p658 = scmp.ne.s32.totalorder %s641, %s657
    %p659 = scmp.eq.s32.totalorder %s40, 0
    %p660 = por %p658, %p659
    %p661 = scmp.le.s32.totalorder 1, %s34
    %p662 = scmp.lt.s32.totalorder %s34, 3
    %p663 = pnand %p661, %p662
    %p664 = pneg %p663
    // Predicated region
    $region9: #{model_forward.3} parent=5 // pred_check
      _
    $region10: #{model_forward.3} parent=5 // pred_check_branch
      %666 = sbr.rel (%p663) target = $region12
    $region11: #{model_forward.3} parent=5 // pred_region
      %s667 = ssub.s32 %s34, 1
      // Predicated region
      $region13: #{model_forward.3} parent=11 // pred_check
        %p668 = pneg %p81
      $region14: #{model_forward.3} parent=11 // pred_check_branch
        %670 = sbr.rel (%p668) target = $region16
      $region15: #{model_forward.3} parent=11 // pred_region
        _
      $region16: #{model_forward.3} parent=11 // pred_fallthru
        _
      // Predicated region
      $region17: #{model_forward.3} parent=11 // pred_check
        %p671 = pneg %p102
      $region18: #{model_forward.3} parent=11 // pred_check_branch
        %673 = sbr.rel (%p671) target = $region20
      $region19: #{model_forward.3} parent=11 // pred_region
        _
      $region20: #{model_forward.3} parent=11 // pred_fallthru
        _
      // Predicated region
      $region21: #{model_forward.3} parent=11 // pred_check
        %p674 = pneg %p123
      $region22: #{model_forward.3} parent=11 // pred_check_branch
        %676 = sbr.rel (%p674) target = $region24
      $region23: #{model_forward.3} parent=11 // pred_region
        _
      $region24: #{model_forward.3} parent=11 // pred_fallthru
        _
      // Predicated region
      $region25: #{model_forward.3} parent=11 // pred_check
        %p677 = pneg %p144
      $region26: #{model_forward.3} parent=11 // pred_check_branch
        %679 = sbr.rel (%p677) target = $region28
      $region27: #{model_forward.3} parent=11 // pred_region
        _
      $region28: #{model_forward.3} parent=11 // pred_fallthru
        _
      // Predicated region
      $region29: #{model_forward.3} parent=11 // pred_check
        %p680 = pneg %p165
      $region30: #{model_forward.3} parent=11 // pred_check_branch
        %682 = sbr.rel (%p680) target = $region32
      $region31: #{model_forward.3} parent=11 // pred_region
        _
      $region32: #{model_forward.3} parent=11 // pred_fallthru
        _
      // Predicated region
      $region33: #{model_forward.3} parent=11 // pred_check
        %p683 = pneg %p186
      $region34: #{model_forward.3} parent=11 // pred_check_branch
        %685 = sbr.rel (%p683) target = $region36
      $region35: #{model_forward.3} parent=11 // pred_region
        _
      $region36: #{model_forward.3} parent=11 // pred_fallthru
        _
      // Predicated region
      $region37: #{model_forward.3} parent=11 // pred_check
        %p686 = pneg %p207
      $region38: #{model_forward.3} parent=11 // pred_check_branch
        %688 = sbr.rel (%p686) target = $region40
      $region39: #{model_forward.3} parent=11 // pred_region
        _
      $region40: #{model_forward.3} parent=11 // pred_fallthru
        _
      // Predicated region
      $region41: #{model_forward.3} parent=11 // pred_check
        %p689 = pneg %p228
      $region42: #{model_forward.3} parent=11 // pred_check_branch
        %691 = sbr.rel (%p689) target = $region44
      $region43: #{model_forward.3} parent=11 // pred_region
        _
      $region44: #{model_forward.3} parent=11 // pred_fallthru
        _
      // Predicated region
      $region45: #{model_forward.3} parent=11 // pred_check
        %p692 = pneg %p249
      $region46: #{model_forward.3} parent=11 // pred_check_branch
        %694 = sbr.rel (%p692) target = $region48
      $region47: #{model_forward.3} parent=11 // pred_region
        _
      $region48: #{model_forward.3} parent=11 // pred_fallthru
        _
      // Predicated region
      $region49: #{model_forward.3} parent=11 // pred_check
        %p695 = pneg %p270
      $region50: #{model_forward.3} parent=11 // pred_check_branch
        %697 = sbr.rel (%p695) target = $region52
      $region51: #{model_forward.3} parent=11 // pred_region
        _
      $region52: #{model_forward.3} parent=11 // pred_fallthru
        _
      // Predicated region
      $region53: #{model_forward.3} parent=11 // pred_check
        %p698 = pneg %p291
      $region54: #{model_forward.3} parent=11 // pred_check_branch
        %700 = sbr.rel (%p698) target = $region56
      $region55: #{model_forward.3} parent=11 // pred_region
        _
      $region56: #{model_forward.3} parent=11 // pred_fallthru
        _
      // Predicated region
      $region57: #{model_forward.3} parent=11 // pred_check
        %p701 = pneg %p312
      $region58: #{model_forward.3} parent=11 // pred_check_branch
        %703 = sbr.rel (%p701) target = $region60
      $region59: #{model_forward.3} parent=11 // pred_region
        _
      $region60: #{model_forward.3} parent=11 // pred_fallthru
        _
      // Predicated region
      $region61: #{model_forward.3} parent=11 // pred_check
        %p704 = pneg %p333
      $region62: #{model_forward.3} parent=11 // pred_check_branch
        %706 = sbr.rel (%p704) target = $region64
      $region63: #{model_forward.3} parent=11 // pred_region
        _
      $region64: #{model_forward.3} parent=11 // pred_fallthru
        _
      // Predicated region
      $region65: #{model_forward.3} parent=11 // pred_check
        %p707 = pneg %p354
      $region66: #{model_forward.3} parent=11 // pred_check_branch
        %709 = sbr.rel (%p707) target = $region68
      $region67: #{model_forward.3} parent=11 // pred_region
        _
      $region68: #{model_forward.3} parent=11 // pred_fallthru
        _
      // Predicated region
      $region69: #{model_forward.3} parent=11 // pred_check
        %p710 = pneg %p375
      $region70: #{model_forward.3} parent=11 // pred_check_branch
        %712 = sbr.rel (%p710) target = $region72
      $region71: #{model_forward.3} parent=11 // pred_region
        _
      $region72: #{model_forward.3} parent=11 // pred_fallthru
        _
      // Predicated region
      $region73: #{model_forward.3} parent=11 // pred_check
        %p713 = pneg %p396
      $region74: #{model_forward.3} parent=11 // pred_check_branch
        %715 = sbr.rel (%p713) target = $region76
      $region75: #{model_forward.3} parent=11 // pred_region
        _
      $region76: #{model_forward.3} parent=11 // pred_fallthru
        _
      // Predicated region
      $region77: #{model_forward.3} parent=11 // pred_check
        %p716 = pneg %p417
      $region78: #{model_forward.3} parent=11 // pred_check_branch
        %718 = sbr.rel (%p716) target = $region80
      $region79: #{model_forward.3} parent=11 // pred_region
        _
      $region80: #{model_forward.3} parent=11 // pred_fallthru
        _
      // Predicated region
      $region81: #{model_forward.3} parent=11 // pred_check
        %p719 = pneg %p438
      $region82: #{model_forward.3} parent=11 // pred_check_branch
        %721 = sbr.rel (%p719) target = $region84
      $region83: #{model_forward.3} parent=11 // pred_region
        _
      $region84: #{model_forward.3} parent=11 // pred_fallthru
        _
      // Predicated region
      $region85: #{model_forward.3} parent=11 // pred_check
        %p722 = pneg %p459
      $region86: #{model_forward.3} parent=11 // pred_check_branch
        %724 = sbr.rel (%p722) target = $region88
      $region87: #{model_forward.3} parent=11 // pred_region
        _
      $region88: #{model_forward.3} parent=11 // pred_fallthru
        _
      // Predicated region
      $region89: #{model_forward.3} parent=11 // pred_check
        %p725 = pneg %p480
      $region90: #{model_forward.3} parent=11 // pred_check_branch
        %727 = sbr.rel (%p725) target = $region92
      $region91: #{model_forward.3} parent=11 // pred_region
        _
      $region92: #{model_forward.3} parent=11 // pred_fallthru
        _
      // Predicated region
      $region93: #{model_forward.3} parent=11 // pred_check
        %p728 = pneg %p501
      $region94: #{model_forward.3} parent=11 // pred_check_branch
        %730 = sbr.rel (%p728) target = $region96
      $region95: #{model_forward.3} parent=11 // pred_region
        _
      $region96: #{model_forward.3} parent=11 // pred_fallthru
        _
      // Predicated region
      $region97: #{model_forward.3} parent=11 // pred_check
        %p731 = pneg %p522
      $region98: #{model_forward.3} parent=11 // pred_check_branch
        %733 = sbr.rel (%p731) target = $region100
      $region99: #{model_forward.3} parent=11 // pred_region
        _
      $region100: #{model_forward.3} parent=11 // pred_fallthru
        _
      // Predicated region
      $region101: #{model_forward.3} parent=11 // pred_check
        %p734 = pneg %p543
      $region102: #{model_forward.3} parent=11 // pred_check_branch
        %736 = sbr.rel (%p734) target = $region104
      $region103: #{model_forward.3} parent=11 // pred_region
        _
      $region104: #{model_forward.3} parent=11 // pred_fallthru
        _
      // Predicated region
      $region105: #{model_forward.3} parent=11 // pred_check
        %p737 = pneg %p564
      $region106: #{model_forward.3} parent=11 // pred_check_branch
        %739 = sbr.rel (%p737) target = $region108
      $region107: #{model_forward.3} parent=11 // pred_region
        _
      $region108: #{model_forward.3} parent=11 // pred_fallthru
        _
      // Predicated region
      $region109: #{model_forward.3} parent=11 // pred_check
        %p740 = pneg %p585
      $region110: #{model_forward.3} parent=11 // pred_check_branch
        %742 = sbr.rel (%p740) target = $region112
      $region111: #{model_forward.3} parent=11 // pred_region
        _
      $region112: #{model_forward.3} parent=11 // pred_fallthru
        _
      // Predicated region
      $region113: #{model_forward.3} parent=11 // pred_check
        %p743 = pneg %p606
      $region114: #{model_forward.3} parent=11 // pred_check_branch
        %745 = sbr.rel (%p743) target = $region116
      $region115: #{model_forward.3} parent=11 // pred_region
        _
      $region116: #{model_forward.3} parent=11 // pred_fallthru
        _
      // Predicated region
      $region117: #{model_forward.3} parent=11 // pred_check
        %p746 = pneg %p627
      $region118: #{model_forward.3} parent=11 // pred_check_branch
        %748 = sbr.rel (%p746) target = $region120
      $region119: #{model_forward.3} parent=11 // pred_region
        _
      $region120: #{model_forward.3} parent=11 // pred_fallthru
        _
    $region12: #{model_forward.3} parent=5 // pred_fallthru
      _
    %p749 = scmp.lt.s32.totalorder %s34, 2
    // Predicated region
    $region121: #{model_forward.3} parent=5 // pred_check
      %p750 = pneg %p749
    $region122: #{model_forward.3} parent=5 // pred_check_branch
      %752 = sbr.rel (%p750) target = $region124
    $region123: #{model_forward.3} parent=5 // pred_region
      // Predicated region
      $region125: #{model_forward.3} parent=123 // pred_check
        %p753 = pneg %p54
      $region126: #{model_forward.3} parent=123 // pred_check_branch
        %755 = sbr.rel (%p753) target = $region128
      $region127: #{model_forward.3} parent=123 // pred_region
        %p756 = scmp.lt.s32.totalorder %s34, 1
        %s757 = scalar_select %p756, %s34, 1
        %s758 = smul.addr %s757, 8
        %s759 = smul.addr %s758, 8
        %s760 = scalar_lea.vmem %s0, %s759
      $region128: #{model_forward.3} parent=123 // pred_fallthru
        _
    $region124: #{model_forward.3} parent=5 // pred_fallthru
      _
    %p761 = scmp.le.s32.totalorder 1, %s34
    %p762 = scmp.lt.s32.totalorder %s34, 3
    %p763 = pnand %p761, %p762
    %p764 = pneg %p763
    // Predicated region
    $region129: #{model_forward.3} parent=5 // pred_check
      _
    $region130: #{model_forward.3} parent=5 // pred_check_branch
      %766 = sbr.rel (%p763) target = $region132
    $region131: #{model_forward.3} parent=5 // pred_region
      %s767 = ssub.s32 %s34, 1
      %p768 = scmp.lt.s32.totalorder %s39, 1
      %s769 = scalar_select %p768, %s39, 1
      %s770 = smul.addr %s769, 8
      %s771 = smul.addr %s770, 8
      %s772 = scalar_lea.vmem %s0, %s771
      %p773 = pneg %p60
      %p774 = pneg %p57
      %p775 = pneg %p81
      %p776 = pneg %p78
      %p777 = pneg %p102
      %p778 = pneg %p99
      %p779 = pneg %p123
      %p780 = pneg %p120
      %p781 = pneg %p144
      %p782 = pneg %p141
      %p783 = pneg %p165
      %p784 = pneg %p162
      %p785 = pneg %p186
      %p786 = pneg %p183
      %p787 = pneg %p207
      %p788 = pneg %p204
      %p789 = pneg %p228
      %p790 = pneg %p225
      %p791 = pneg %p249
      %p792 = pneg %p246
      %p793 = pneg %p270
      %p794 = pneg %p267
      %p795 = pneg %p291
      %p796 = pneg %p288
      %p797 = pneg %p312
      %p798 = pneg %p309
      %p799 = pneg %p333
      %p800 = pneg %p330
      %p801 = pneg %p354
      %p802 = pneg %p351
      %p803 = pneg %p375
      %p804 = pneg %p372
      %p805 = pneg %p396
      %p806 = pneg %p393
      %p807 = pneg %p417
      %p808 = pneg %p414
      %p809 = pneg %p438
      %p810 = pneg %p435
      %p811 = pneg %p459
      %p812 = pneg %p456
      %p813 = pneg %p480
      %p814 = pneg %p477
      %p815 = pneg %p501
      %p816 = pneg %p498
      %p817 = pneg %p522
      %p818 = pneg %p519
      %p819 = pneg %p543
      %p820 = pneg %p540
      %p821 = pneg %p564
      %p822 = pneg %p561
      %p823 = pneg %p585
      %p824 = pneg %p582
      %p825 = pneg %p606
      %p826 = pneg %p603
      %p827 = pneg %p627
      %p828 = pneg %p624
      %p829 = pneg %p653
      %p830 = pneg %p650
      %p831 = scmp.lt.s32.totalorder %s39, 1
      %s832 = scalar_select %p831, %s39, 1
      %s833 = smul.addr %s832, 8
      %s834 = smul.addr %s833, 8
      %s835 = scalar_lea.vmem %s28, %s834
      %p836 = scmp.lt.s32.totalorder %s39, 1
      %s837 = scalar_select %p836, %s39, 1
      %s838 = smul.addr %s837, 8
      %s839 = smul.addr %s838, 8
      %s840 = scalar_lea.vmem %s0, %s839
      %p841 = scmp.lt.s32.totalorder %s39, 1
      %s842 = scalar_select %p841, %s39, 1
      %s843 = smul.addr %s842, 8
      %s844 = smul.addr %s843, 8
      %s845 = scalar_lea.vmem %s28, %s844
      %v847 = vld [vmem:[%s840] sm:$0xff]
      %v848 = vld [vmem:[%s840 + $0x8] sm:$0xff]
      %v849 = vld [vmem:[%s840 + $0x10] sm:$0xff]
      %v850 = vld [vmem:[%s840 + $0x18] sm:$0xff]
      %v851 = vld [vmem:[%s840 + $0x20] sm:$0xff]
      %v852 = vld [vmem:[%s840 + $0x28] sm:$0xff]
      %v853 = vld [vmem:[%s840 + $0x30] sm:$0xff]
      %v854 = vld [vmem:[%s840 + $0x38] sm:$0xff]
      %v855 = vld [vmem:[%s4] sm:$0x1]
      %v856 = vmul.f32 %v847, %v847
      %v857 = vmul.f32 %v848, %v848
      %v858 = vmul.f32 %v849, %v849
      %v859 = vmul.f32 %v850, %v850
      %v860 = vmul.f32 %v851, %v851
      %v861 = vmul.f32 %v852, %v852
      %v862 = vmul.f32 %v853, %v853
      %v863 = vmul.f32 %v854, %v854
      %vm864 = vcmask 261120
      %v865 = vsel %vm864, %v856, 0.0
      %866 = vadd.xlane.f32.xlu0 %v865
      %v867 = vpop.xlane.xlu0 %866
      %v868 = vsel %vm864, %v857, 0.0
      %869 = vadd.xlane.f32.xlu0 %v868
      %v870 = vpop.xlane.xlu0 %869
      %v871 = vsel %vm864, %v858, 0.0
      %872 = vadd.xlane.f32.xlu0 %v871
      %v873 = vpop.xlane.xlu0 %872
      %v874 = vsel %vm864, %v859, 0.0
      %875 = vadd.xlane.f32.xlu0 %v874
      %v876 = vpop.xlane.xlu0 %875
      %v877 = vsel %vm864, %v860, 0.0
      %878 = vadd.xlane.f32.xlu0 %v877
      %v879 = vpop.xlane.xlu0 %878
      %v880 = vsel %vm864, %v861, 0.0
      %881 = vadd.xlane.f32.xlu0 %v880
      %v882 = vpop.xlane.xlu0 %881
      %v883 = vsel %vm864, %v862, 0.0
      %884 = vadd.xlane.f32.xlu0 %v883
      %v885 = vpop.xlane.xlu0 %884
      %v886 = vsel %vm864, %v863, 0.0
      %887 = vadd.xlane.f32.xlu0 %v886
      %v888 = vpop.xlane.xlu0 %887
      %v889 = vrcp.pop 32.0
      %v890 = vmul.f32 %v867, %v889
      %v891 = vmul.f32 %v870, %v889
      %v892 = vmul.f32 %v873, %v889
      %v893 = vmul.f32 %v876, %v889
      %v894 = vmul.f32 %v879, %v889
      %v895 = vmul.f32 %v882, %v889
      %v896 = vmul.f32 %v885, %v889
      %v897 = vmul.f32 %v888, %v889
      %v898 = vadd.f32 %v890, 1e-06
      %v899 = vadd.f32 %v891, 1e-06
      %v900 = vadd.f32 %v892, 1e-06
      %v901 = vadd.f32 %v893, 1e-06
      %v902 = vadd.f32 %v894, 1e-06
      %v903 = vadd.f32 %v895, 1e-06
      %v904 = vadd.f32 %v896, 1e-06
      %v905 = vadd.f32 %v897, 1e-06
      %v906 = vrsqrt.pop %v898
      %v907 = vrsqrt.pop %v899
      %v908 = vrsqrt.pop %v900
      %v909 = vrsqrt.pop %v901
      %v910 = vrsqrt.pop %v902
      %v911 = vrsqrt.pop %v903
      %v912 = vrsqrt.pop %v904
      %v913 = vrsqrt.pop %v905
      %v914 = vmul.f32 %v847, %v906
      %v915 = vmul.f32 %v848, %v907
      %v916 = vmul.f32 %v849, %v908
      %v917 = vmul.f32 %v850, %v909
      %v918 = vmul.f32 %v851, %v910
      %v919 = vmul.f32 %v852, %v911
      %v920 = vmul.f32 %v853, %v912
      %v921 = vmul.f32 %v854, %v913
      %v923 = vlaneseq
      %v924 = vshrl.u32 %v923, 7
      %v925 = vsub.s32 0, %v924
      %v926 = vrot.slane %v855, %v925
      %v928 = vmul.f32 %v914, %v926
      %v929 = vmul.f32 %v915, %v926
      %v930 = vmul.f32 %v916, %v926
      %v931 = vmul.f32 %v917, %v926
      %v932 = vmul.f32 %v918, %v926
      %v933 = vmul.f32 %v919, %v926
      %v934 = vmul.f32 %v920, %v926
      %v935 = vmul.f32 %v921, %v926
      %v936 = vpack.c.bf16 %v929, %v928
      %v937 = vpack.c.bf16 %v931, %v930
      %v938 = vpack.c.bf16 %v933, %v932
      %v939 = vpack.c.bf16 %v935, %v934
      %v940 = vld [vmem:[%s7] sm:$0xf]
      %v941 = vld [vmem:[%s7 + $0x4] sm:$0xf]
      %v942 = vld [vmem:[%s7 + $0x8] sm:$0xf]
      %v943 = vld [vmem:[%s7 + $0xc] sm:$0xf]
      %v944 = vld [vmem:[%s8] sm:$0x1]
      %v946 = vlaneseq
      %v947 = vshrl.u32 %v946, 7
      %v948 = vsub.s32 0, %v947
      %v949 = vrot.slane %v944, %v948
      %v955 = vunpack.c.l.b16 %v940
      %v956 = vunpack.c.l.b16 %v941
      %v957 = vunpack.c.l.b16 %v942
      %v958 = vunpack.c.l.b16 %v943
      %v959 = vpack.c.b16 %v956, %v955
      %v960 = vpack.c.b16 %v958, %v957
      %v964 = vsel %vm864, %v936, 0
      %v967 = vsel %vm864, %v937, 0
      %v970 = vsel %vm864, %v938, 0
      %v973 = vsel %vm864, %v939, 0
      %975 = vmatprep.subr.bf16.mxu0 0
      %976 = vmatpush1.bf16.msra.mxu0 %v959
      %977 = vmatprep.subr.bf16.mxu0 0
      %978 = vmatpush1.bf16.msra.mxu0 %v960
      %979 = vmatprep.subr.bf16.mxu0 0
      %980 = vmatpush1.bf16.msra.mxu0 0
      %981 = vmatprep.subr.bf16.mxu0 0
      %982 = vmatpush1.bf16.msra.mxu0 0
      %983 = vmatprep.subr.bf16.mxu0 0
      %984 = vmatpush1.bf16.msra.mxu0 0
      %985 = vmatprep.subr.bf16.mxu0 0
      %986 = vmatpush1.bf16.msra.mxu0 0
      %987 = vmatprep.subr.bf16.mxu0 0
      %988 = vmatpush1.bf16.msra.mxu0 0
      %989 = vmatprep.subr.bf16.mxu0 0
      %990 = vmatpush1.bf16.msra.mxu0 0
      %991 = vmatprep.subr.bf16.mxu0 0
      %992 = vmatpush1.bf16.msra.mxu0 0
      %993 = vmatprep.subr.bf16.mxu0 0
      %994 = vmatpush1.bf16.msra.mxu0 0
      %995 = vmatprep.subr.bf16.mxu0 0
      %996 = vmatpush1.bf16.msra.mxu0 0
      %997 = vmatprep.subr.bf16.mxu0 0
      %998 = vmatpush1.bf16.msra.mxu0 0
      %999 = vmatprep.subr.bf16.mxu0 0
      %1000 = vmatpush1.bf16.msra.mxu0 0
      %1001 = vmatprep.subr.bf16.mxu0 0
      %1002 = vmatpush1.bf16.msra.mxu0 0
      %1003 = vmatprep.subr.bf16.mxu0 0
      %1004 = vmatpush1.bf16.msra.mxu0 0
      %1005 = vmatprep.subr.bf16.mxu0 0
      %1006 = vmatpush1.bf16.msra.mxu0 0
      %1007 = vmatprep.mubr.bf16.mxu0 0
      %1008 = vmatmul.mubr.bf16.gmra.mrb[0].mxu0 %v964
      %v1009 = vpop.f32.mrb[0].mxu0
      %v1010 = vadd.f32 %v949, %v1009
      %v1011 = vpop.f32.mrb[0].mxu0
      %v1012 = vpop.f32.mrb[0].mxu0
      %v1013 = vadd.f32 %v949, %v1012
      %v1014 = vpop.f32.mrb[0].mxu0
      %1015 = vmatprep.mubr.bf16.mxu0 0
      %1016 = vmatmul.mubr.bf16.gmra.mrb[0].mxu0 %v967
      %v1017 = vpop.f32.mrb[0].mxu0
      %v1018 = vadd.f32 %v949, %v1017
      %v1019 = vpop.f32.mrb[0].mxu0
      %v1020 = vpop.f32.mrb[0].mxu0
      %v1021 = vadd.f32 %v949, %v1020
      %v1022 = vpop.f32.mrb[0].mxu0
      %1023 = vmatprep.mubr.bf16.mxu0 0
      %1024 = vmatmul.mubr.bf16.gmra.mrb[0].mxu0 %v970
      %v1025 = vpop.f32.mrb[0].mxu0
      %v1026 = vadd.f32 %v949, %v1025
      %v1027 = vpop.f32.mrb[0].mxu0
      %v1028 = vpop.f32.mrb[0].mxu0
      %v1029 = vadd.f32 %v949, %v1028
      %v1030 = vpop.f32.mrb[0].mxu0
      %1031 = vmatprep.mubr.bf16.mxu0 0
      %1032 = vmatmul.mubr.bf16.gmra.mrb[0].mxu0 %v973
      %v1033 = vpop.f32.mrb[0].mxu0
      %v1034 = vadd.f32 %v949, %v1033
      %v1035 = vpop.f32.mrb[0].mxu0
      %v1036 = vpop.f32.mrb[0].mxu0
      %v1037 = vadd.f32 %v949, %v1036
      %v1038 = vpop.f32.mrb[0].mxu0
      %1039 = vdwg.mxu0
      %v1040 = vld [vmem:[%s5] sm:$0xf]
      %v1041 = vld [vmem:[%s5 + $0x4] sm:$0xf]
      %v1042 = vld [vmem:[%s5 + $0x8] sm:$0xf]
      %v1043 = vld [vmem:[%s5 + $0xc] sm:$0xf]
      %v1044 = vld [vmem:[%s6] sm:$0x1]
      %v1046 = vlaneseq
      %v1047 = vshrl.u32 %v1046, 7
      %v1048 = vsub.s32 0, %v1047
      %v1049 = vrot.slane %v1044, %v1048
      %v1055 = vunpack.c.l.b16 %v1040
      %v1056 = vunpack.c.l.b16 %v1041
      %v1057 = vunpack.c.l.b16 %v1042
      %v1058 = vunpack.c.l.b16 %v1043
      %v1059 = vpack.c.b16 %v1056, %v1055
      %v1060 = vpack.c.b16 %v1058, %v1057
      %1063 = vmatprep.subr.bf16.mxu0 0
      %1064 = vmatpush1.bf16.msra.mxu0 %v1059
      %1065 = vmatprep.subr.bf16.mxu0 0
      %1066 = vmatpush1.bf16.msra.mxu0 %v1060
      %1067 = vmatprep.subr.bf16.mxu0 0
      %1068 = vmatpush1.bf16.msra.mxu0 0
      %1069 = vmatprep.subr.bf16.mxu0 0
      %1070 = vmatpush1.bf16.msra.mxu0 0
      %1071 = vmatprep.subr.bf16.mxu0 0
      %1072 = vmatpush1.bf16.msra.mxu0 0
      %1073 = vmatprep.subr.bf16.mxu0 0
      %1074 = vmatpush1.bf16.msra.mxu0 0
      %1075 = vmatprep.subr.bf16.mxu0 0
      %1076 = vmatpush1.bf16.msra.mxu0 0
      %1077 = vmatprep.subr.bf16.mxu0 0
      %1078 = vmatpush1.bf16.msra.mxu0 0
      %1079 = vmatprep.subr.bf16.mxu0 0
      %1080 = vmatpush1.bf16.msra.mxu0 0
      %1081 = vmatprep.subr.bf16.mxu0 0
      %1082 = vmatpush1.bf16.msra.mxu0 0
      %1083 = vmatprep.subr.bf16.mxu0 0
      %1084 = vmatpush1.bf16.msra.mxu0 0
      %1085 = vmatprep.subr.bf16.mxu0 0
      %1086 = vmatpush1.bf16.msra.mxu0 0
      %1087 = vmatprep.subr.bf16.mxu0 0
      %1088 = vmatpush1.bf16.msra.mxu0 0
      %1089 = vmatprep.subr.bf16.mxu0 0
      %1090 = vmatpush1.bf16.msra.mxu0 0
      %1091 = vmatprep.subr.bf16.mxu0 0
      %1092 = vmatpush1.bf16.msra.mxu0 0
      %1093 = vmatprep.subr.bf16.mxu0 0
      %1094 = vmatpush1.bf16.msra.mxu0 0
      %1095 = vmatprep.mubr.bf16.mxu0 0
      %1096 = vmatmul.mubr.bf16.gmra.mrb[0].mxu0 %v964
      %v1097 = vpop.f32.mrb[0].mxu0
      %v1098 = vadd.f32 %v1049, %v1097
      %v1099 = vpop.f32.mrb[0].mxu0
      %v1100 = vpop.f32.mrb[0].mxu0
      %v1101 = vadd.f32 %v1049, %v1100
      %v1102 = vpop.f32.mrb[0].mxu0
      %1103 = vdwg.mxu0
      %v1104 = vmul.f32 %v1098, 0.35355338
      %v1105 = vmul.f32 %v1101, 0.35355338
      %v1106 = vld [vmem:[%s1] sm:$0xff]
      %v1107 = vld [vmem:[%s1 + $0x8] sm:$0xff]
      %vm1108 = vcmask 130048
      %v1110 = vsel %vm1108, %v1010, 0
      %v1113 = vsel %vm1108, %v1013, 0
      %v1116 = vsel %vm1108, %v1018, 0
      %v1119 = vsel %vm1108, %v1021, 0
      %v1122 = vsel %vm1108, %v1026, 0
      %v1125 = vsel %vm1108, %v1029, 0
      %v1128 = vsel %vm1108, %v1034, 0
      %v1131 = vsel %vm1108, %v1037, 0
      %1133 = vmatprep.subr.mxu0 0.0
      %1134 = vmatpush1.msra.mxu0 %v1106
      %1135 = vmatprep.subr.mxu0 0.0
      %1136 = vmatpush1.msra.mxu0 %v1107
      %1137 = vmatprep.subr.mxu0 0.0
      %1138 = vmatpush1.msra.mxu0 0.0
      %1139 = vmatprep.subr.mxu0 0.0
      %1140 = vmatpush1.msra.mxu0 0.0
      %1141 = vmatprep.subr.mxu0 0.0
      %1142 = vmatpush1.msra.mxu0 0.0
      %1143 = vmatprep.subr.mxu0 0.0
      %1144 = vmatpush1.msra.mxu0 0.0
      %1145 = vmatprep.subr.mxu0 0.0
      %1146 = vmatpush1.msra.mxu0 0.0
      %1147 = vmatprep.subr.mxu0 0.0
      %1148 = vmatpush1.msra.mxu0 0.0
      %1149 = vmatprep.subr.mxu0 0.0
      %1150 = vmatpush1.msra.mxu0 0.0
      %1151 = vmatprep.subr.mxu0 0.0
      %1152 = vmatpush1.msra.mxu0 0.0
      %1153 = vmatprep.subr.mxu0 0.0
      %1154 = vmatpush1.msra.mxu0 0.0
      %1155 = vmatprep.subr.mxu0 0.0
      %1156 = vmatpush1.msra.mxu0 0.0
      %1157 = vmatprep.subr.mxu0 0.0
      %1158 = vmatpush1.msra.mxu0 0.0
      %1159 = vmatprep.subr.mxu0 0.0
      %1160 = vmatpush1.msra.mxu0 0.0
      %1161 = vmatprep.subr.mxu0 0.0
      %1162 = vmatpush1.msra.mxu0 0.0
      %1163 = vmatprep.subr.mxu0 0.0
      %1164 = vmatpush1.msra.mxu0 0.0
      %1165 = vmatprep.subr.mxu0 0.0
      %1166 = vmatpush1.msra.mxu0 0.0
      %1167 = vmatprep.subr.mxu0 0.0
      %1168 = vmatpush1.msra.mxu0 0.0
      %1169 = vmatprep.subr.mxu0 0.0
      %1170 = vmatpush1.msra.mxu0 0.0
      %1171 = vmatprep.subr.mxu0 0.0
      %1172 = vmatpush1.msra.mxu0 0.0
      %1173 = vmatprep.subr.mxu0 0.0
      %1174 = vmatpush1.msra.mxu0 0.0
      %1175 = vmatprep.subr.mxu0 0.0
      %1176 = vmatpush1.msra.mxu0 0.0
      %1177 = vmatprep.subr.mxu0 0.0
      %1178 = vmatpush1.msra.mxu0 0.0
      %1179 = vmatprep.subr.mxu0 0.0
      %1180 = vmatpush1.msra.mxu0 0.0
      %1181 = vmatprep.subr.mxu0 0.0
      %1182 = vmatpush1.msra.mxu0 0.0
      %1183 = vmatprep.subr.mxu0 0.0
      %1184 = vmatpush1.msra.mxu0 0.0
      %1185 = vmatprep.subr.mxu0 0.0
      %1186 = vmatpush1.msra.mxu0 0.0
      %1187 = vmatprep.subr.mxu0 0.0
      %1188 = vmatpush1.msra.mxu0 0.0
      %1189 = vmatprep.subr.mxu0 0.0
      %1190 = vmatpush1.msra.mxu0 0.0
      %1191 = vmatprep.subr.mxu0 0.0
      %1192 = vmatpush1.msra.mxu0 0.0
      %1193 = vmatprep.subr.mxu0 0.0
      %1194 = vmatpush1.msra.mxu0 0.0
      %1195 = vmatprep.subr.mxu0 0.0
      %1196 = vmatpush1.msra.mxu0 0.0
      %1197 = vmatprep.mubr.f32.mxu0 0.0
      %1198 = vmatmul.mubr.f32.gmra.mrb[0].mxu0 %v1110
      %v1199 = vpop.f32.mrb[0].mxu0
      %v1200 = vadd.f32 0.0, %v1199
      %v1201 = vpop.f32.mrb[0].mxu0
      %1202 = vmatprep.mubr.f32.mxu0 0.0
      %1203 = vmatmul.mubr.f32.gmra.mrb[0].mxu0 %v1113
      %v1204 = vpop.f32.mrb[0].mxu0
      %v1205 = vadd.f32 0.0, %v1204
      %v1206 = vpop.f32.mrb[0].mxu0
      %1207 = vmatprep.mubr.f32.mxu0 0.0
      %1208 = vmatmul.mubr.f32.gmra.mrb[0].mxu0 %v1116
      %v1209 = vpop.f32.mrb[0].mxu0
      %v1210 = vadd.f32 0.0, %v1209
      %v1211 = vpop.f32.mrb[0].mxu0
      %1212 = vmatprep.mubr.f32.mxu0 0.0
      %1213 = vmatmul.mubr.f32.gmra.mrb[0].mxu0 %v1119
      %v1214 = vpop.f32.mrb[0].mxu0
      %v1215 = vadd.f32 0.0, %v1214
      %v1216 = vpop.f32.mrb[0].mxu0
      %1217 = vmatprep.mubr.f32.mxu0 0.0
      %1218 = vmatmul.mubr.f32.gmra.mrb[0].mxu0 %v1122
      %v1219 = vpop.f32.mrb[0].mxu0
      %v1220 = vadd.f32 0.0, %v1219
      %v1221 = vpop.f32.mrb[0].mxu0
      %1222 = vmatprep.mubr.f32.mxu0 0.0
      %1223 = vmatmul.mubr.f32.gmra.mrb[0].mxu0 %v1125
      %v1224 = vpop.f32.mrb[0].mxu0
      %v1225 = vadd.f32 0.0, %v1224
      %v1226 = vpop.f32.mrb[0].mxu0
      %1227 = vmatprep.mubr.f32.mxu0 0.0
      %1228 = vmatmul.mubr.f32.gmra.mrb[0].mxu0 %v1128
      %v1229 = vpop.f32.mrb[0].mxu0
      %v1230 = vadd.f32 0.0, %v1229
      %v1231 = vpop.f32.mrb[0].mxu0
      %1232 = vmatprep.mubr.f32.mxu0 0.0
      %1233 = vmatmul.mubr.f32.gmra.mrb[0].mxu0 %v1131
      %v1234 = vpop.f32.mrb[0].mxu0
      %v1235 = vadd.f32 0.0, %v1234
      %v1236 = vpop.f32.mrb[0].mxu0
      %1237 = vdwg.mxu0
      %1238 = vrot.lane.b32.xlu0 %v1010, 112
      %v1239 = vpop.permute.xlu0 %1238
      %1240 = vrot.lane.b32.xlu0 %v1013, 112
      %v1241 = vpop.permute.xlu0 %1240
      %1242 = vrot.lane.b32.xlu0 %v1018, 112
      %v1243 = vpop.permute.xlu0 %1242
      %1244 = vrot.lane.b32.xlu0 %v1021, 112
      %v1245 = vpop.permute.xlu0 %1244
      %1246 = vrot.lane.b32.xlu0 %v1026, 112
      %v1247 = vpop.permute.xlu0 %1246
      %1248 = vrot.lane.b32.xlu0 %v1029, 112
      %v1249 = vpop.permute.xlu0 %1248
      %1250 = vrot.lane.b32.xlu0 %v1034, 112
      %v1251 = vpop.permute.xlu0 %1250
      %1252 = vrot.lane.b32.xlu0 %v1037, 112
      %v1253 = vpop.permute.xlu0 %1252
      %v1254 = vsel %vm1108, %v1239, 0
      %v1256 = vsel %vm1108, %v1241, 0
      %v1258 = vsel %vm1108, %v1243, 0
      %v1260 = vsel %vm1108, %v1245, 0
      %v1262 = vsel %vm1108, %v1247, 0
      %v1264 = vsel %vm1108, %v1249, 0
      %v1266 = vsel %vm1108, %v1251, 0
      %v1268 = vsel %vm1108, %v1253, 0
      %1270 = vmatprep.subr.mxu0 0.0
      %1271 = vmatpush1.msra.mxu0 %v1106
      %1272 = vmatprep.subr.mxu0 0.0
      %1273 = vmatpush1.msra.mxu0 %v1107
      %1274 = vmatprep.subr.mxu0 0.0
      %1275 = vmatpush1.msra.mxu0 0.0
      %1276 = vmatprep.subr.mxu0 0.0
      %1277 = vmatpush1.msra.mxu0 0.0
      %1278 = vmatprep.subr.mxu0 0.0
      %1279 = vmatpush1.msra.mxu0 0.0
      %1280 = vmatprep.subr.mxu0 0.0
      %1281 = vmatpush1.msra.mxu0 0.0
      %1282 = vmatprep.subr.mxu0 0.0
      %1283 = vmatpush1.msra.mxu0 0.0
      %1284 = vmatprep.subr.mxu0 0.0
      %1285 = vmatpush1.msra.mxu0 0.0
      %1286 = vmatprep.subr.mxu0 0.0
      %1287 = vmatpush1.msra.mxu0 0.0
      %1288 = vmatprep.subr.mxu0 0.0
      %1289 = vmatpush1.msra.mxu0 0.0
      %1290 = vmatprep.subr.mxu0 0.0
      %1291 = vmatpush1.msra.mxu0 0.0
      %1292 = vmatprep.subr.mxu0 0.0
      %1293 = vmatpush1.msra.mxu0 0.0
      %1294 = vmatprep.subr.mxu0 0.0
      %1295 = vmatpush1.msra.mxu0 0.0
      %1296 = vmatprep.subr.mxu0 0.0
      %1297 = vmatpush1.msra.mxu0 0.0
      %1298 = vmatprep.subr.mxu0 0.0
      %1299 = vmatpush1.msra.mxu0 0.0
      %1300 = vmatprep.subr.mxu0 0.0
      %1301 = vmatpush1.msra.mxu0 0.0
      %1302 = vmatprep.subr.mxu0 0.0
      %1303 = vmatpush1.msra.mxu0 0.0
      %1304 = vmatprep.subr.mxu0 0.0
      %1305 = vmatpush1.msra.mxu0 0.0
      %1306 = vmatprep.subr.mxu0 0.0
      %1307 = vmatpush1.msra.mxu0 0.0
      %1308 = vmatprep.subr.mxu0 0.0
      %1309 = vmatpush1.msra.mxu0 0.0
      %1310 = vmatprep.subr.mxu0 0.0
      %1311 = vmatpush1.msra.mxu0 0.0
      %1312 = vmatprep.subr.mxu0 0.0
      %1313 = vmatpush1.msra.mxu0 0.0
      %1314 = vmatprep.subr.mxu0 0.0
      %1315 = vmatpush1.msra.mxu0 0.0
      %1316 = vmatprep.subr.mxu0 0.0
      %1317 = vmatpush1.msra.mxu0 0.0
      %1318 = vmatprep.subr.mxu0 0.0
      %1319 = vmatpush1.msra.mxu0 0.0
      %1320 = vmatprep.subr.mxu0 0.0
      %1321 = vmatpush1.msra.mxu0 0.0
      %1322 = vmatprep.subr.mxu0 0.0
      %1323 = vmatpush1.msra.mxu0 0.0
      %1324 = vmatprep.subr.mxu0 0.0
      %1325 = vmatpush1.msra.mxu0 0.0
      %1326 = vmatprep.subr.mxu0 0.0
      %1327 = vmatpush1.msra.mxu0 0.0
      %1328 = vmatprep.subr.mxu0 0.0
      %1329 = vmatpush1.msra.mxu0 0.0
      %1330 = vmatprep.subr.mxu0 0.0
      %1331 = vmatpush1.msra.mxu0 0.0
      %1332 = vmatprep.subr.mxu0 0.0
      %1333 = vmatpush1.msra.mxu0 0.0
      %1334 = vmatprep.mubr.f32.mxu0 0.0
      %1335 = vmatmul.mubr.f32.gmra.mrb[0].mxu0 %v1254
      %v1336 = vpop.f32.mrb[0].mxu0
      %v1337 = vadd.f32 0.0, %v1336
      %v1338 = vpop.f32.mrb[0].mxu0
      %1339 = vmatprep.mubr.f32.mxu0 0.0
      %1340 = vmatmul.mubr.f32.gmra.mrb[0].mxu0 %v1256
      %v1341 = vpop.f32.mrb[0].mxu0
      %v1342 = vadd.f32 0.0, %v1341
      %v1343 = vpop.f32.mrb[0].mxu0
      %1344 = vmatprep.mubr.f32.mxu0 0.0
      %1345 = vmatmul.mubr.f32.gmra.mrb[0].mxu0 %v1258
      %v1346 = vpop.f32.mrb[0].mxu0
      %v1347 = vadd.f32 0.0, %v1346
      %v1348 = vpop.f32.mrb[0].mxu0
      %1349 = vmatprep.mubr.f32.mxu0 0.0
      %1350 = vmatmul.mubr.f32.gmra.mrb[0].mxu0 %v1260
      %v1351 = vpop.f32.mrb[0].mxu0
      %v1352 = vadd.f32 0.0, %v1351
      %v1353 = vpop.f32.mrb[0].mxu0
      %1354 = vmatprep.mubr.f32.mxu0 0.0
      %1355 = vmatmul.mubr.f32.gmra.mrb[0].mxu0 %v1262
      %v1356 = vpop.f32.mrb[0].mxu0
      %v1357 = vadd.f32 0.0, %v1356
      %v1358 = vpop.f32.mrb[0].mxu0
      %1359 = vmatprep.mubr.f32.mxu0 0.0
      %1360 = vmatmul.mubr.f32.gmra.mrb[0].mxu0 %v1264
      %v1361 = vpop.f32.mrb[0].mxu0
      %v1362 = vadd.f32 0.0, %v1361
      %v1363 = vpop.f32.mrb[0].mxu0
      %1364 = vmatprep.mubr.f32.mxu0 0.0
      %1365 = vmatmul.mubr.f32.gmra.mrb[0].mxu0 %v1266
      %v1366 = vpop.f32.mrb[0].mxu0
      %v1367 = vadd.f32 0.0, %v1366
      %v1368 = vpop.f32.mrb[0].mxu0
      %1369 = vmatprep.mubr.f32.mxu0 0.0
      %1370 = vmatmul.mubr.f32.gmra.mrb[0].mxu0 %v1268
      %v1371 = vpop.f32.mrb[0].mxu0
      %v1372 = vadd.f32 0.0, %v1371
      %v1373 = vpop.f32.mrb[0].mxu0
      %1374 = vdwg.mxu0
      %v1375 = vmul.f32 %v1200, %v1104
      %v1376 = vmul.f32 %v1205, %v1105
      %v1377 = vmul.f32 %v1210, %v1104
      %v1378 = vmul.f32 %v1215, %v1105
      %v1379 = vmul.f32 %v1220, %v1104
      %v1380 = vmul.f32 %v1225, %v1105
      %v1381 = vmul.f32 %v1230, %v1104
      %v1382 = vmul.f32 %v1235, %v1105
      %v1383 = vld [vmem:[%s2] sm:$0xff]
      %v1384 = vld [vmem:[%s2 + $0x8] sm:$0xff]
      %v1385 = vld [vmem:[%s2 + $0x10] sm:$0xff]
      %v1386 = vld [vmem:[%s2 + $0x18] sm:$0xff]
      %v1388 = vsel %vm864, %v1375, 0
      %v1391 = vsel %vm864, %v1376, 0
      %v1394 = vsel %vm864, %v1377, 0
      %v1397 = vsel %vm864, %v1378, 0
      %v1400 = vsel %vm864, %v1379, 0
      %v1403 = vsel %vm864, %v1380, 0
      %v1406 = vsel %vm864, %v1381, 0
      %v1409 = vsel %vm864, %v1382, 0
      %1411 = vmatprep.subr.mxu0 0.0
      %1412 = vmatpush1.msra.mxu0 %v1383
      %1413 = vmatprep.subr.mxu0 0.0
      %1414 = vmatpush1.msra.mxu0 %v1384
      %1415 = vmatprep.subr.mxu0 0.0
      %1416 = vmatpush1.msra.mxu0 %v1385
      %1417 = vmatprep.subr.mxu0 0.0
      %1418 = vmatpush1.msra.mxu0 %v1386
      %1419 = vmatprep.subr.mxu0 0.0
      %1420 = vmatpush1.msra.mxu0 0.0
      %1421 = vmatprep.subr.mxu0 0.0
      %1422 = vmatpush1.msra.mxu0 0.0
      %1423 = vmatprep.subr.mxu0 0.0
      %1424 = vmatpush1.msra.mxu0 0.0
      %1425 = vmatprep.subr.mxu0 0.0
      %1426 = vmatpush1.msra.mxu0 0.0
      %1427 = vmatprep.subr.mxu0 0.0
      %1428 = vmatpush1.msra.mxu0 0.0
      %1429 = vmatprep.subr.mxu0 0.0
      %1430 = vmatpush1.msra.mxu0 0.0
      %1431 = vmatprep.subr.mxu0 0.0
      %1432 = vmatpush1.msra.mxu0 0.0
      %1433 = vmatprep.subr.mxu0 0.0
      %1434 = vmatpush1.msra.mxu0 0.0
      %1435 = vmatprep.subr.mxu0 0.0
      %1436 = vmatpush1.msra.mxu0 0.0
      %1437 = vmatprep.subr.mxu0 0.0
      %1438 = vmatpush1.msra.mxu0 0.0
      %1439 = vmatprep.subr.mxu0 0.0
      %1440 = vmatpush1.msra.mxu0 0.0
      %1441 = vmatprep.subr.mxu0 0.0
      %1442 = vmatpush1.msra.mxu0 0.0
      %1443 = vmatprep.subr.mxu0 0.0
      %1444 = vmatpush1.msra.mxu0 0.0
      %1445 = vmatprep.subr.mxu0 0.0
      %1446 = vmatpush1.msra.mxu0 0.0
      %1447 = vmatprep.subr.mxu0 0.0
      %1448 = vmatpush1.msra.mxu0 0.0
      %1449 = vmatprep.subr.mxu0 0.0
      %1450 = vmatpush1.msra.mxu0 0.0
      %1451 = vmatprep.subr.mxu0 0.0
      %1452 = vmatpush1.msra.mxu0 0.0
      %1453 = vmatprep.subr.mxu0 0.0
      %1454 = vmatpush1.msra.mxu0 0.0
      %1455 = vmatprep.subr.mxu0 0.0
      %1456 = vmatpush1.msra.mxu0 0.0
      %1457 = vmatprep.subr.mxu0 0.0
      %1458 = vmatpush1.msra.mxu0 0.0
      %1459 = vmatprep.subr.mxu0 0.0
      %1460 = vmatpush1.msra.mxu0 0.0
      %1461 = vmatprep.subr.mxu0 0.0
      %1462 = vmatpush1.msra.mxu0 0.0
      %1463 = vmatprep.subr.mxu0 0.0
      %1464 = vmatpush1.msra.mxu0 0.0
      %1465 = vmatprep.subr.mxu0 0.0
      %1466 = vmatpush1.msra.mxu0 0.0
      %1467 = vmatprep.subr.mxu0 0.0
      %1468 = vmatpush1.msra.mxu0 0.0
      %1469 = vmatprep.subr.mxu0 0.0
      %1470 = vmatpush1.msra.mxu0 0.0
      %1471 = vmatprep.subr.mxu0 0.0
      %1472 = vmatpush1.msra.mxu0 0.0
      %1473 = vmatprep.subr.mxu0 0.0
      %1474 = vmatpush1.msra.mxu0 0.0
      %1475 = vmatprep.mubr.f32.mxu0 0.0
      %1476 = vmatmul.mubr.f32.gmra.mrb[0].mxu0 %v1388
      %v1477 = vpop.f32.mrb[0].mxu0
      %v1478 = vadd.f32 0.0, %v1477
      %v1479 = vpop.f32.mrb[0].mxu0
      %1480 = vmatprep.mubr.f32.mxu0 0.0
      %1481 = vmatmul.mubr.f32.gmra.mrb[0].mxu0 %v1391
      %v1482 = vpop.f32.mrb[0].mxu0
      %v1483 = vadd.f32 0.0, %v1482
      %v1484 = vpop.f32.mrb[0].mxu0
      %1485 = vmatprep.mubr.f32.mxu0 0.0
      %1486 = vmatmul.mubr.f32.gmra.mrb[0].mxu0 %v1394
      %v1487 = vpop.f32.mrb[0].mxu0
      %v1488 = vadd.f32 0.0, %v1487
      %v1489 = vpop.f32.mrb[0].mxu0
      %1490 = vmatprep.mubr.f32.mxu0 0.0
      %1491 = vmatmul.mubr.f32.gmra.mrb[0].mxu0 %v1397
      %v1492 = vpop.f32.mrb[0].mxu0
      %v1493 = vadd.f32 0.0, %v1492
      %v1494 = vpop.f32.mrb[0].mxu0
      %1495 = vmatprep.mubr.f32.mxu0 0.0
      %1496 = vmatmul.mubr.f32.gmra.mrb[0].mxu0 %v1400
      %v1497 = vpop.f32.mrb[0].mxu0
      %v1498 = vadd.f32 0.0, %v1497
      %v1499 = vpop.f32.mrb[0].mxu0
      %1500 = vmatprep.mubr.f32.mxu0 0.0
      %1501 = vmatmul.mubr.f32.gmra.mrb[0].mxu0 %v1403
      %v1502 = vpop.f32.mrb[0].mxu0
      %v1503 = vadd.f32 0.0, %v1502
      %v1504 = vpop.f32.mrb[0].mxu0
      %1505 = vmatprep.mubr.f32.mxu0 0.0
      %1506 = vmatmul.mubr.f32.gmra.mrb[0].mxu0 %v1406
      %v1507 = vpop.f32.mrb[0].mxu0
      %v1508 = vadd.f32 0.0, %v1507
      %v1509 = vpop.f32.mrb[0].mxu0
      %1510 = vmatprep.mubr.f32.mxu0 0.0
      %1511 = vmatmul.mubr.f32.gmra.mrb[0].mxu0 %v1409
      %v1512 = vpop.f32.mrb[0].mxu0
      %v1513 = vadd.f32 0.0, %v1512
      %v1514 = vpop.f32.mrb[0].mxu0
      %1515 = vdwg.mxu0
      %vm1516 = vcmask 31744
      %v1517 = vsel %vm1516, %v1478, -inf
      %v1518 = vsel %vm1516, %v1488, -inf
      %v1519 = vsel %vm1516, %v1498, -inf
      %v1520 = vmax.f32 %v1517, %v1519
      %v1521 = vsel %vm1516, %v1508, -inf
      %v1522 = vmax.f32 %v1518, %v1521
      %v1523 = vmax.f32 %v1520, %v1522
      %v1524 = vsel %vm1516, %v1483, -inf
      %v1525 = vsel %vm1516, %v1493, -inf
      %v1526 = vsel %vm1516, %v1503, -inf
      %v1527 = vmax.f32 %v1524, %v1526
      %v1528 = vsel %vm1516, %v1513, -inf
      %v1529 = vmax.f32 %v1525, %v1528
      %v1530 = vmax.f32 %v1527, %v1529
      %v1531 = vsub.f32 %v1478, %v1523
      %v1532 = vsub.f32 %v1483, %v1530
      %v1533 = vsub.f32 %v1488, %v1523
      %v1534 = vsub.f32 %v1493, %v1530
      %v1535 = vsub.f32 %v1498, %v1523
      %v1536 = vsub.f32 %v1503, %v1530
      %v1537 = vsub.f32 %v1508, %v1523
      %v1538 = vsub.f32 %v1513, %v1530
      %v1539 = vmul.f32 %v1531, 1.442695
      %v1540 = vpow.pop %v1539
      %v1541 = vmul.f32 %v1532, 1.442695
      %v1542 = vpow.pop %v1541
      %v1543 = vmul.f32 %v1533, 1.442695
      %v1544 = vpow.pop %v1543
      %v1545 = vmul.f32 %v1534, 1.442695
      %v1546 = vpow.pop %v1545
      %v1547 = vmul.f32 %v1535, 1.442695
      %v1548 = vpow.pop %v1547
      %v1549 = vmul.f32 %v1536, 1.442695
      %v1550 = vpow.pop %v1549
      %v1551 = vmul.f32 %v1537, 1.442695
      %v1552 = vpow.pop %v1551
      %v1553 = vmul.f32 %v1538, 1.442695
      %v1554 = vpow.pop %v1553
      %v1555 = vsel %vm1516, %v1540, 0.0
      %v1556 = vsel %vm1516, %v1544, 0.0
      %v1557 = vadd.f32 %v1555, %v1556
      %v1558 = vsel %vm1516, %v1548, 0.0
      %v1559 = vadd.f32 %v1557, %v1558
      %v1560 = vsel %vm1516, %v1552, 0.0
      %v1561 = vadd.f32 %v1559, %v1560
      %v1562 = vsel %vm1516, %v1542, 0.0
      %v1563 = vsel %vm1516, %v1546, 0.0
      %v1564 = vadd.f32 %v1562, %v1563
      %v1565 = vsel %vm1516, %v1550, 0.0
      %v1566 = vadd.f32 %v1564, %v1565
      %v1567 = vsel %vm1516, %v1554, 0.0
      %v1568 = vadd.f32 %v1566, %v1567
      %v1569 = vrcp.pop %v1561
      %v1570 = vmul.f32 %v1540, %v1569
      %v1571 = vrcp.pop %v1568
      %v1572 = vmul.f32 %v1542, %v1571
      %v1573 = vmul.f32 %v1544, %v1569
      %v1574 = vmul.f32 %v1546, %v1571
      %v1575 = vmul.f32 %v1548, %v1569
      %v1576 = vmul.f32 %v1550, %v1571
      %v1577 = vmul.f32 %v1552, %v1569
      %v1578 = vmul.f32 %v1554, %v1571
      %v1579 = vld [vmem:[%s3] sm:$0xf]
      %v1581 = vsel %vm1516, %v1570, 0
      %v1584 = vsel %vm1516, %v1572, 0
      %v1587 = vsel %vm1516, %v1573, 0
      %v1590 = vsel %vm1516, %v1574, 0
      %v1593 = vsel %vm1516, %v1575, 0
      %v1596 = vsel %vm1516, %v1576, 0
      %v1599 = vsel %vm1516, %v1577, 0
      %v1602 = vsel %vm1516, %v1578, 0
      %vm1604 = vcmask 1043456
      %v1606 = vsel %vm1604, %v1579, 0
      %1608 = vmatprep.subr.mxu0 0.0
      %1609 = vmatpush1.msra.mxu0 %v1606
      %1610 = vmatprep.subr.mxu0 0.0
      %1611 = vmatpush1.msra.mxu0 0.0
      %1612 = vmatprep.subr.mxu0 0.0
      %1613 = vmatpush1.msra.mxu0 0.0
      %1614 = vmatprep.subr.mxu0 0.0
      %1615 = vmatpush1.msra.mxu0 0.0
      %1616 = vmatprep.subr.mxu0 0.0
      %1617 = vmatpush1.msra.mxu0 0.0
      %1618 = vmatprep.subr.mxu0 0.0
      %1619 = vmatpush1.msra.mxu0 0.0
      %1620 = vmatprep.subr.mxu0 0.0
      %1621 = vmatpush1.msra.mxu0 0.0
      %1622 = vmatprep.subr.mxu0 0.0
      %1623 = vmatpush1.msra.mxu0 0.0
      %1624 = vmatprep.subr.mxu0 0.0
      %1625 = vmatpush1.msra.mxu0 0.0
      %1626 = vmatprep.subr.mxu0 0.0
      %1627 = vmatpush1.msra.mxu0 0.0
      %1628 = vmatprep.subr.mxu0 0.0
      %1629 = vmatpush1.msra.mxu0 0.0
      %1630 = vmatprep.subr.mxu0 0.0
      %1631 = vmatpush1.msra.mxu0 0.0
      %1632 = vmatprep.subr.mxu0 0.0
      %1633 = vmatpush1.msra.mxu0 0.0
      %1634 = vmatprep.subr.mxu0 0.0
      %1635 = vmatpush1.msra.mxu0 0.0
      %1636 = vmatprep.subr.mxu0 0.0
      %1637 = vmatpush1.msra.mxu0 0.0
      %1638 = vmatprep.subr.mxu0 0.0
      %1639 = vmatpush1.msra.mxu0 0.0
      %1640 = vmatprep.subr.mxu0 0.0
      %1641 = vmatpush1.msra.mxu0 0.0
      %1642 = vmatprep.subr.mxu0 0.0
      %1643 = vmatpush1.msra.mxu0 0.0
      %1644 = vmatprep.subr.mxu0 0.0
      %1645 = vmatpush1.msra.mxu0 0.0
      %1646 = vmatprep.subr.mxu0 0.0
      %1647 = vmatpush1.msra.mxu0 0.0
      %1648 = vmatprep.subr.mxu0 0.0
      %1649 = vmatpush1.msra.mxu0 0.0
      %1650 = vmatprep.subr.mxu0 0.0
      %1651 = vmatpush1.msra.mxu0 0.0
      %1652 = vmatprep.subr.mxu0 0.0
      %1653 = vmatpush1.msra.mxu0 0.0
      %1654 = vmatprep.subr.mxu0 0.0
      %1655 = vmatpush1.msra.mxu0 0.0
      %1656 = vmatprep.subr.mxu0 0.0
      %1657 = vmatpush1.msra.mxu0 0.0
      %1658 = vmatprep.subr.mxu0 0.0
      %1659 = vmatpush1.msra.mxu0 0.0
      %1660 = vmatprep.subr.mxu0 0.0
      %1661 = vmatpush1.msra.mxu0 0.0
      %1662 = vmatprep.subr.mxu0 0.0
      %1663 = vmatpush1.msra.mxu0 0.0
      %1664 = vmatprep.subr.mxu0 0.0
      %1665 = vmatpush1.msra.mxu0 0.0
      %1666 = vmatprep.subr.mxu0 0.0
      %1667 = vmatpush1.msra.mxu0 0.0
      %1668 = vmatprep.subr.mxu0 0.0
      %1669 = vmatpush1.msra.mxu0 0.0
      %1670 = vmatprep.subr.mxu0 0.0
      %1671 = vmatpush1.msra.mxu0 0.0
      %1672 = vmatprep.mubr.f32.mxu0 0.0
      %1673 = vmatmul.mubr.f32.gmra.mrb[0].mxu0 %v1581
      %v1674 = vpop.f32.mrb[0].mxu0
      %v1675 = vadd.f32 0.0, %v1674
      %v1676 = vpop.f32.mrb[0].mxu0
      %1677 = vmatprep.mubr.f32.mxu0 0.0
      %1678 = vmatmul.mubr.f32.gmra.mrb[0].mxu0 %v1584
      %v1679 = vpop.f32.mrb[0].mxu0
      %v1680 = vadd.f32 0.0, %v1679
      %v1681 = vpop.f32.mrb[0].mxu0
      %1682 = vmatprep.mubr.f32.mxu0 0.0
      %1683 = vmatmul.mubr.f32.gmra.mrb[0].mxu0 %v1587
      %v1684 = vpop.f32.mrb[0].mxu0
      %v1685 = vadd.f32 0.0, %v1684
      %v1686 = vpop.f32.mrb[0].mxu0
      %1687 = vmatprep.mubr.f32.mxu0 0.0
      %1688 = vmatmul.mubr.f32.gmra.mrb[0].mxu0 %v1590
      %v1689 = vpop.f32.mrb[0].mxu0
      %v1690 = vadd.f32 0.0, %v1689
      %v1691 = vpop.f32.mrb[0].mxu0
      %1692 = vmatprep.mubr.f32.mxu0 0.0
      %1693 = vmatmul.mubr.f32.gmra.mrb[0].mxu0 %v1593
      %v1694 = vpop.f32.mrb[0].mxu0
      %v1695 = vadd.f32 0.0, %v1694
      %v1696 = vpop.f32.mrb[0].mxu0
      %1697 = vmatprep.mubr.f32.mxu0 0.0
      %1698 = vmatmul.mubr.f32.gmra.mrb[0].mxu0 %v1596
      %v1699 = vpop.f32.mrb[0].mxu0
      %v1700 = vadd.f32 0.0, %v1699
      %v1701 = vpop.f32.mrb[0].mxu0
      %1702 = vmatprep.mubr.f32.mxu0 0.0
      %1703 = vmatmul.mubr.f32.gmra.mrb[0].mxu0 %v1599
      %v1704 = vpop.f32.mrb[0].mxu0
      %v1705 = vadd.f32 0.0, %v1704
      %v1706 = vpop.f32.mrb[0].mxu0
      %1707 = vmatprep.mubr.f32.mxu0 0.0
      %1708 = vmatmul.mubr.f32.gmra.mrb[0].mxu0 %v1602
      %v1709 = vpop.f32.mrb[0].mxu0
      %v1710 = vadd.f32 0.0, %v1709
      %v1711 = vpop.f32.mrb[0].mxu0
      %1712 = vdwg.mxu0
      %v1713 = vmul.f32 %v1675, %v1337
      %v1714 = vmul.f32 %v1680, %v1342
      %v1715 = vmul.f32 %v1685, %v1347
      %v1716 = vmul.f32 %v1690, %v1352
      %v1717 = vmul.f32 %v1695, %v1357
      %v1718 = vmul.f32 %v1700, %v1362
      %v1719 = vmul.f32 %v1705, %v1367
      %v1720 = vmul.f32 %v1710, %v1372
      %v1721 = vsel %vm864, %v1713, 0.0
      %v1722 = vsel %vm864, %v1715, 0.0
      %v1723 = vadd.f32 %v1721, %v1722
      %v1724 = vsel %vm864, %v1717, 0.0
      %v1725 = vadd.f32 %v1723, %v1724
      %v1726 = vsel %vm864, %v1719, 0.0
      %v1727 = vadd.f32 %v1725, %v1726
      %v1728 = vsel %vm864, %v1714, 0.0
      %v1729 = vsel %vm864, %v1716, 0.0
      %v1730 = vadd.f32 %v1728, %v1729
      %v1731 = vsel %vm864, %v1718, 0.0
      %v1732 = vadd.f32 %v1730, %v1731
      %v1733 = vsel %vm864, %v1720, 0.0
      %v1734 = vadd.f32 %v1732, %v1733
      %v1735 = vpack.c.bf16 %v1734, %v1727
      %v1736 = vld [vmem:[%s9] sm:$0xf]
      %v1737 = vld [vmem:[%s9 + $0x4] sm:$0xf]
      %v1738 = vld [vmem:[%s9 + $0x8] sm:$0xf]
      %v1739 = vld [vmem:[%s9 + $0xc] sm:$0xf]
      %v1740 = vld [vmem:[%s10] sm:$0x1]
      %v1742 = vlaneseq
      %v1743 = vshrl.u32 %v1742, 7
      %v1744 = vsub.s32 0, %v1743
      %v1745 = vrot.slane %v1740, %v1744
      %v1751 = vunpack.c.l.b16 %v1736
      %v1752 = vunpack.c.l.b16 %v1737
      %v1753 = vunpack.c.l.b16 %v1738
      %v1754 = vunpack.c.l.b16 %v1739
      %v1755 = vpack.c.b16 %v1752, %v1751
      %v1756 = vpack.c.b16 %v1754, %v1753
      %v1760 = vsel %vm864, %v1735, 0
      %1762 = vmatprep.subr.bf16.mxu0 0
      %1763 = vmatpush1.bf16.msra.mxu0 %v1755
      %1764 = vmatprep.subr.bf16.mxu0 0
      %1765 = vmatpush1.bf16.msra.mxu0 %v1756
      %1766 = vmatprep.subr.bf16.mxu0 0
      %1767 = vmatpush1.bf16.msra.mxu0 0
      %1768 = vmatprep.subr.bf16.mxu0 0
      %1769 = vmatpush1.bf16.msra.mxu0 0
      %1770 = vmatprep.subr.bf16.mxu0 0
      %1771 = vmatpush1.bf16.msra.mxu0 0
      %1772 = vmatprep.subr.bf16.mxu0 0
      %1773 = vmatpush1.bf16.msra.mxu0 0
      %1774 = vmatprep.subr.bf16.mxu0 0
      %1775 = vmatpush1.bf16.msra.mxu0 0
      %1776 = vmatprep.subr.bf16.mxu0 0
      %1777 = vmatpush1.bf16.msra.mxu0 0
      %1778 = vmatprep.subr.bf16.mxu0 0
      %1779 = vmatpush1.bf16.msra.mxu0 0
      %1780 = vmatprep.subr.bf16.mxu0 0
      %1781 = vmatpush1.bf16.msra.mxu0 0
      %1782 = vmatprep.subr.bf16.mxu0 0
      %1783 = vmatpush1.bf16.msra.mxu0 0
      %1784 = vmatprep.subr.bf16.mxu0 0
      %1785 = vmatpush1.bf16.msra.mxu0 0
      %1786 = vmatprep.subr.bf16.mxu0 0
      %1787 = vmatpush1.bf16.msra.mxu0 0
      %1788 = vmatprep.subr.bf16.mxu0 0
      %1789 = vmatpush1.bf16.msra.mxu0 0
      %1790 = vmatprep.subr.bf16.mxu0 0
      %1791 = vmatpush1.bf16.msra.mxu0 0
      %1792 = vmatprep.subr.bf16.mxu0 0
      %1793 = vmatpush1.bf16.msra.mxu0 0
      %1794 = vmatprep.mubr.bf16.mxu0 0
      %1795 = vmatmul.mubr.bf16.gmra.mrb[0].mxu0 %v1760
      %v1796 = vpop.f32.mrb[0].mxu0
      %v1797 = vadd.f32 %v1745, %v1796
      %v1798 = vpop.f32.mrb[0].mxu0
      %v1799 = vpop.f32.mrb[0].mxu0
      %v1800 = vadd.f32 %v1745, %v1799
      %v1801 = vpop.f32.mrb[0].mxu0
      %1802 = vdwg.mxu0
      %v1803 = vadd.f32 %v1797, %v847
      %v1804 = vadd.f32 %v1800, %v848
      %v1805 = vpack.c.bf16 %v1804, %v1803
      %v1806 = vld [vmem:[%s11] sm:$0xf]
      %v1807 = vld [vmem:[%s11 + $0x4] sm:$0xf]
      %v1808 = vld [vmem:[%s11 + $0x8] sm:$0xf]
      %v1809 = vld [vmem:[%s11 + $0xc] sm:$0xf]
      %v1810 = vld [vmem:[%s12] sm:$0x1]
      %v1812 = vlaneseq
      %v1813 = vshrl.u32 %v1812, 7
      %v1814 = vsub.s32 0, %v1813
      %v1815 = vrot.slane %v1810, %v1814
      %v1821 = vunpack.c.l.b16 %v1806
      %v1822 = vunpack.c.l.b16 %v1807
      %v1823 = vunpack.c.l.b16 %v1808
      %v1824 = vunpack.c.l.b16 %v1809
      %v1825 = vpack.c.b16 %v1822, %v1821
      %v1826 = vpack.c.b16 %v1824, %v1823
      %v1830 = vsel %vm864, %v1805, 0
      %1832 = vmatprep.subr.bf16.mxu0 0
      %1833 = vmatpush1.bf16.msra.mxu0 %v1825
      %1834 = vmatprep.subr.bf16.mxu0 0
      %1835 = vmatpush1.bf16.msra.mxu0 %v1826
      %1836 = vmatprep.subr.bf16.mxu0 0
      %1837 = vmatpush1.bf16.msra.mxu0 0
      %1838 = vmatprep.subr.bf16.mxu0 0
      %1839 = vmatpush1.bf16.msra.mxu0 0
      %1840 = vmatprep.subr.bf16.mxu0 0
      %1841 = vmatpush1.bf16.msra.mxu0 0
      %1842 = vmatprep.subr.bf16.mxu0 0
      %1843 = vmatpush1.bf16.msra.mxu0 0
      %1844 = vmatprep.subr.bf16.mxu0 0
      %1845 = vmatpush1.bf16.msra.mxu0 0
      %1846 = vmatprep.subr.bf16.mxu0 0
      %1847 = vmatpush1.bf16.msra.mxu0 0
      %1848 = vmatprep.subr.bf16.mxu0 0
      %1849 = vmatpush1.bf16.msra.mxu0 0
      %1850 = vmatprep.subr.bf16.mxu0 0
      %1851 = vmatpush1.bf16.msra.mxu0 0
      %1852 = vmatprep.subr.bf16.mxu0 0
      %1853 = vmatpush1.bf16.msra.mxu0 0
      %1854 = vmatprep.subr.bf16.mxu0 0
      %1855 = vmatpush1.bf16.msra.mxu0 0
      %1856 = vmatprep.subr.bf16.mxu0 0
      %1857 = vmatpush1.bf16.msra.mxu0 0
      %1858 = vmatprep.subr.bf16.mxu0 0
      %1859 = vmatpush1.bf16.msra.mxu0 0
      %1860 = vmatprep.subr.bf16.mxu0 0
      %1861 = vmatpush1.bf16.msra.mxu0 0
      %1862 = vmatprep.subr.bf16.mxu0 0
      %1863 = vmatpush1.bf16.msra.mxu0 0
      %1864 = vmatprep.mubr.bf16.mxu0 0
      %1865 = vmatmul.mubr.bf16.gmra.mrb[0].mxu0 %v1830
      %v1866 = vpop.f32.mrb[0].mxu0
      %v1867 = vadd.f32 %v1815, %v1866
      %v1868 = vpop.f32.mrb[0].mxu0
      %v1869 = vpop.f32.mrb[0].mxu0
      %v1870 = vadd.f32 %v1815, %v1869
      %v1871 = vpop.f32.mrb[0].mxu0
      %1872 = vdwg.mxu0
      %v1873 = vld [vmem:[%s13] sm:$0xf]
      %v1874 = vlaneseq
      %v1875 = vshrl.u32 %v1874, 7
      %v1876 = vadd.s32 %v1875, 8
      %v1877 = vld [vmem:[%s14] sm:$0x1]
      %v1878 = vrot.slane %v1867, 5
      %v1879 = vrot.slane %v1870, 5
      %vm1880 = vcmp.lt.s32.totalorder %v1875, 3
      %v1881 = vsel %vm1880, %v1878, %v1879
      %v1882 = vsel %vm1880, %v1879, %v1878
      %vm1883 = vcmp.ge.s32.totalorder %v1875, 3
      %vm1884 = vcmp.ge.s32.totalorder %v1876, 3
      %v1885 = vsel %vm1883, 1, 0
      %v1886 = vsel %vm1884, 1, 0
      %vm1887 = vcmp.eq.s32.totalorder %v1885, 1
      %vm1888 = vcmp.eq.s32.totalorder %v1886, 1
      %v1889 = vsel %vm1887, %v1882, 0.0
      %v1890 = vsel %vm1888, %v1881, 0.0
      %v1891 = vlaneseq
      %v1892 = vshrl.u32 %v1891, 7
      %v1893 = vsub.s32 0, %v1892
      %v1894 = vrot.slane %v1873, %v1893
      %v1895 = vmul.f32 %v1889, %v1894
      %v1896 = vmul.f32 %v1890, %v1894
      %v1898 = vlaneseq
      %v1899 = vshrl.u32 %v1898, 7
      %v1900 = vsub.s32 0, %v1899
      %v1901 = vrot.slane %v1877, %v1900
      %v1903 = vadd.f32 %v1901, %v1895
      %v1904 = vadd.f32 %v1901, %v1896
      %v1905 = vrot.slane %v1867, 6
      %v1906 = vrot.slane %v1870, 6
      %vm1907 = vcmp.lt.s32.totalorder %v1875, 2
      %v1908 = vsel %vm1907, %v1905, %v1906
      %v1909 = vsel %vm1907, %v1906, %v1905
      %vm1910 = vcmp.ge.s32.totalorder %v1875, 2
      %vm1911 = vcmp.ge.s32.totalorder %v1876, 2
      %v1912 = vsel %vm1910, 1, 0
      %v1913 = vsel %vm1911, 1, 0
      %vm1914 = vcmp.eq.s32.totalorder %v1912, 1
      %vm1915 = vcmp.eq.s32.totalorder %v1913, 1
      %v1916 = vsel %vm1914, %v1909, 0.0
      %v1917 = vsel %vm1915, %v1908, 0.0
      %v1918 = vlaneseq
      %v1919 = vshrl.u32 %v1918, 7
      %v1920 = vsub.s32 1, %v1919
      %v1921 = vrot.slane %v1873, %v1920
      %v1922 = vmul.f32 %v1916, %v1921
      %v1923 = vmul.f32 %v1917, %v1921
      %v1924 = vadd.f32 %v1903, %v1922
      %v1925 = vadd.f32 %v1904, %v1923
      %v1926 = vrot.slane %v1867, 7
      %v1927 = vrot.slane %v1870, 7
      %vm1928 = vcmp.lt.s32.totalorder %v1875, 1
      %v1929 = vsel %vm1928, %v1926, %v1927
      %v1930 = vsel %vm1928, %v1927, %v1926
      %vm1931 = vcmp.ge.s32.totalorder %v1875, 1
      %vm1932 = vcmp.ge.s32.totalorder %v1876, 1
      %v1933 = vsel %vm1931, 1, 0
      %v1934 = vsel %vm1932, 1, 0
      %vm1935 = vcmp.eq.s32.totalorder %v1933, 1
      %vm1936 = vcmp.eq.s32.totalorder %v1934, 1
      %v1937 = vsel %vm1935, %v1930, 0.0
      %v1938 = vsel %vm1936, %v1929, 0.0
      %v1939 = vlaneseq
      %v1940 = vshrl.u32 %v1939, 7
      %v1941 = vsub.s32 2, %v1940
      %v1942 = vrot.slane %v1873, %v1941
      %v1943 = vmul.f32 %v1937, %v1942
      %v1944 = vmul.f32 %v1938, %v1942
      %v1945 = vadd.f32 %v1924, %v1943
      %v1946 = vadd.f32 %v1925, %v1944
      %v1947 = vlaneseq
      %v1948 = vshrl.u32 %v1947, 7
      %v1949 = vsub.s32 3, %v1948
      %v1950 = vrot.slane %v1873, %v1949
      %v1951 = vmul.f32 %v1867, %v1950
      %v1952 = vmul.f32 %v1870, %v1950
      %v1953 = vadd.f32 %v1945, %v1951
      %v1954 = vadd.f32 %v1946, %v1952
      %v1955 = vxor.u32 %v1953, 2147483648
      %v1956 = vxor.u32 %v1954, 2147483648
      %v1957 = vmul.f32 %v1955, 1.442695
      %v1958 = vpow.pop %v1957
      %v1959 = vmul.f32 %v1956, 1.442695
      %v1960 = vpow.pop %v1959
      %v1961 = vadd.f32 %v1958, 1.0
      %v1962 = vadd.f32 %v1960, 1.0
      %v1963 = vrcp.pop %v1961
      %v1964 = vmul.f32 1.0, %v1963
      %v1965 = vrcp.pop %v1962
      %v1966 = vmul.f32 1.0, %v1965
      %v1967 = vmul.f32 %v1953, %v1964
      %v1968 = vmul.f32 %v1954, %v1966
      %v1969 = vxor.u32 %v1867, 2147483648
      %v1970 = vxor.u32 %v1870, 2147483648
      %v1971 = vmul.f32 %v1969, 1.442695
      %v1972 = vpow.pop %v1971
      %v1973 = vmul.f32 %v1970, 1.442695
      %v1974 = vpow.pop %v1973
      %v1975 = vadd.f32 %v1972, 1.0
      %v1976 = vadd.f32 %v1974, 1.0
      %v1977 = vrcp.pop %v1975
      %v1978 = vmul.f32 1.0, %v1977
      %v1979 = vrcp.pop %v1976
      %v1980 = vmul.f32 1.0, %v1979
      %v1981 = vmul.f32 %v1867, %v1978
      %v1982 = vmul.f32 %v1870, %v1980
      %1985 = vrot.lane.b32.xlu0 %v1981, 64
      %v1986 = vpop.permute.xlu0 %1985
      %1987 = vrot.lane.b32.xlu0 %v1982, 64
      %v1988 = vpop.permute.xlu0 %1987
      %v1991 = vmul.f32 %v1967, %v1986
      %v1992 = vmul.f32 %v1968, %v1988
      %v1993 = vpack.c.bf16 %v1992, %v1991
      %v1994 = vld [vmem:[%s15] sm:$0xf]
      %v1995 = vld [vmem:[%s15 + $0x4] sm:$0xf]
      %v1996 = vld [vmem:[%s15 + $0x8] sm:$0xf]
      %v1997 = vld [vmem:[%s15 + $0xc] sm:$0xf]
      %v1998 = vld [vmem:[%s15 + $0x10] sm:$0xf]
      %v1999 = vld [vmem:[%s15 + $0x14] sm:$0xf]
      %v2000 = vld [vmem:[%s15 + $0x18] sm:$0xf]
      %v2001 = vld [vmem:[%s15 + $0x1c] sm:$0xf]
      %v2002 = vld [vmem:[%s16] sm:$0x1]
      %v2004 = vlaneseq
      %v2005 = vshrl.u32 %v2004, 7
      %v2006 = vsub.s32 0, %v2005
      %v2007 = vrot.slane %v2002, %v2006
      %v2017 = vunpack.c.l.b16 %v1994
      %v2018 = vunpack.c.l.b16 %v1995
      %v2019 = vunpack.c.l.b16 %v1996
      %v2020 = vunpack.c.l.b16 %v1997
      %v2021 = vunpack.c.l.b16 %v1998
      %v2022 = vunpack.c.l.b16 %v1999
      %v2023 = vunpack.c.l.b16 %v2000
      %v2024 = vunpack.c.l.b16 %v2001
      %v2025 = vpack.c.b16 %v2018, %v2017
      %v2026 = vpack.c.b16 %v2020, %v2019
      %v2027 = vpack.c.b16 %v2022, %v2021
      %v2028 = vpack.c.b16 %v2024, %v2023
      %vm2033 = vcmask 523264
      %v2035 = vsel %vm2033, %v1993, 0
      %2037 = vmatprep.subr.bf16.mxu0 0
      %2038 = vmatpush1.bf16.msra.mxu0 %v2025
      %2039 = vmatprep.subr.bf16.mxu0 0
      %2040 = vmatpush1.bf16.msra.mxu0 %v2026
      %2041 = vmatprep.subr.bf16.mxu0 0
      %2042 = vmatpush1.bf16.msra.mxu0 %v2027
      %2043 = vmatprep.subr.bf16.mxu0 0
      %2044 = vmatpush1.bf16.msra.mxu0 %v2028
      %2045 = vmatprep.subr.bf16.mxu0 0
      %2046 = vmatpush1.bf16.msra.mxu0 0
      %2047 = vmatprep.subr.bf16.mxu0 0
      %2048 = vmatpush1.bf16.msra.mxu0 0
      %2049 = vmatprep.subr.bf16.mxu0 0
      %2050 = vmatpush1.bf16.msra.mxu0 0
      %2051 = vmatprep.subr.bf16.mxu0 0
      %2052 = vmatpush1.bf16.msra.mxu0 0
      %2053 = vmatprep.subr.bf16.mxu0 0
      %2054 = vmatpush1.bf16.msra.mxu0 0
      %2055 = vmatprep.subr.bf16.mxu0 0
      %2056 = vmatpush1.bf16.msra.mxu0 0
      %2057 = vmatprep.subr.bf16.mxu0 0
      %2058 = vmatpush1.bf16.msra.mxu0 0
      %2059 = vmatprep.subr.bf16.mxu0 0
      %2060 = vmatpush1.bf16.msra.mxu0 0
      %2061 = vmatprep.subr.bf16.mxu0 0
      %2062 = vmatpush1.bf16.msra.mxu0 0
      %2063 = vmatprep.subr.bf16.mxu0 0
      %2064 = vmatpush1.bf16.msra.mxu0 0
      %2065 = vmatprep.subr.bf16.mxu0 0
      %2066 = vmatpush1.bf16.msra.mxu0 0
      %2067 = vmatprep.subr.bf16.mxu0 0
      %2068 = vmatpush1.bf16.msra.mxu0 0
      %2069 = vmatprep.mubr.bf16.mxu0 0
      %2070 = vmatmul.mubr.bf16.gmra.mrb[0].mxu0 %v2035
      %v2071 = vpop.f32.mrb[0].mxu0
      %v2072 = vadd.f32 %v2007, %v2071
      %v2073 = vpop.f32.mrb[0].mxu0
      %v2074 = vpop.f32.mrb[0].mxu0
      %v2075 = vadd.f32 %v2007, %v2074
      %v2076 = vpop.f32.mrb[0].mxu0
      %2077 = vdwg.mxu0
      %v2078 = vadd.f32 %v2072, %v1803
      %v2079 = vadd.f32 %v2075, %v1804
      %v2080 = vld [vmem:[%s17] sm:$0x1]
      %v2081 = vmul.f32 %v2078, %v2078
      %v2082 = vmul.f32 %v2079, %v2079
      %v2083 = vsel %vm864, %v2081, 0.0
      %2084 = vadd.xlane.f32.xlu0 %v2083
      %v2085 = vpop.xlane.xlu0 %2084
      %v2086 = vsel %vm864, %v2082, 0.0
      %2087 = vadd.xlane.f32.xlu0 %v2086
      %v2088 = vpop.xlane.xlu0 %2087
      %v2089 = vmul.f32 %v2085, %v889
      %v2090 = vmul.f32 %v2088, %v889
      %v2091 = vadd.f32 %v2089, 1e-06
      %v2092 = vadd.f32 %v2090, 1e-06
      %v2093 = vrsqrt.pop %v2091
      %v2094 = vrsqrt.pop %v2092
      %v2095 = vmul.f32 %v2078, %v2093
      %v2096 = vmul.f32 %v2079, %v2094
      %v2098 = vlaneseq
      %v2099 = vshrl.u32 %v2098, 7
      %v2100 = vsub.s32 0, %v2099
      %v2101 = vrot.slane %v2080, %v2100
      %v2103 = vmul.f32 %v2095, %v2101
      %v2104 = vmul.f32 %v2096, %v2101
      %v2105 = vld [vmem:[%s18] sm:$0x1]
      %v2106 = vmul.f32 %v2103, %v2103
      %v2107 = vmul.f32 %v2104, %v2104
      %v2108 = vsel %vm864, %v2106, 0.0
      %2109 = vadd.xlane.f32.xlu0 %v2108
      %v2110 = vpop.xlane.xlu0 %2109
      %v2111 = vsel %vm864, %v2107, 0.0
      %2112 = vadd.xlane.f32.xlu0 %v2111
      %v2113 = vpop.xlane.xlu0 %2112
      %v2114 = vmul.f32 %v2110, %v889
      %v2115 = vmul.f32 %v2113, %v889
      %v2116 = vadd.f32 %v2114, 1e-06
      %v2117 = vadd.f32 %v2115, 1e-06
      %v2118 = vrsqrt.pop %v2116
      %v2119 = vrsqrt.pop %v2117
      %v2120 = vmul.f32 %v2103, %v2118
      %v2121 = vmul.f32 %v2104, %v2119
      %v2123 = vlaneseq
      %v2124 = vshrl.u32 %v2123, 7
      %v2125 = vsub.s32 0, %v2124
      %v2126 = vrot.slane %v2105, %v2125
      %v2128 = vmul.f32 %v2120, %v2126
      %v2129 = vmul.f32 %v2121, %v2126
      %v2130 = vmul.f32 %v916, %v2126
      %v2131 = vmul.f32 %v917, %v2126
      %v2132 = vmul.f32 %v918, %v2126
      %v2133 = vmul.f32 %v919, %v2126
      %v2134 = vmul.f32 %v920, %v2126
      %v2135 = vmul.f32 %v921, %v2126
      %v2136 = vpack.c.bf16 %v2129, %v2128
      %v2137 = vpack.c.bf16 %v2131, %v2130
      %v2138 = vpack.c.bf16 %v2133, %v2132
      %v2139 = vpack.c.bf16 %v2135, %v2134
      %v2140 = vld [vmem:[%s19] sm:$0xf]
      %v2141 = vld [vmem:[%s19 + $0x4] sm:$0xf]
      %v2142 = vld [vmem:[%s19 + $0x8] sm:$0xf]
      %v2143 = vld [vmem:[%s19 + $0xc] sm:$0xf]
      %v2144 = vld [vmem:[%s20] sm:$0x1]
      %v2146 = vlaneseq
      %v2147 = vshrl.u32 %v2146, 7
      %v2148 = vsub.s32 0, %v2147
      %v2149 = vrot.slane %v2144, %v2148
      %v2155 = vunpack.c.l.b16 %v2140
      %v2156 = vunpack.c.l.b16 %v2141
      %v2157 = vunpack.c.l.b16 %v2142
      %v2158 = vunpack.c.l.b16 %v2143
      %v2159 = vpack.c.b16 %v2156, %v2155
      %v2160 = vpack.c.b16 %v2158, %v2157
      %v2164 = vsel %vm864, %v2136, 0
      %v2167 = vsel %vm864, %v2137, 0
      %v2170 = vsel %vm864, %v2138, 0
      %v2173 = vsel %vm864, %v2139, 0
      %2175 = vmatprep.subr.bf16.mxu0 0
      %2176 = vmatpush1.bf16.msra.mxu0 %v2159
      %2177 = vmatprep.subr.bf16.mxu0 0
      %2178 = vmatpush1.bf16.msra.mxu0 %v2160
      %2179 = vmatprep.subr.bf16.mxu0 0
      %2180 = vmatpush1.bf16.msra.mxu0 0
      %2181 = vmatprep.subr.bf16.mxu0 0
      %2182 = vmatpush1.bf16.msra.mxu0 0
      %2183 = vmatprep.subr.bf16.mxu0 0
      %2184 = vmatpush1.bf16.msra.mxu0 0
      %2185 = vmatprep.subr.bf16.mxu0 0
      %2186 = vmatpush1.bf16.msra.mxu0 0
      %2187 = vmatprep.subr.bf16.mxu0 0
      %2188 = vmatpush1.bf16.msra.mxu0 0
      %2189 = vmatprep.subr.bf16.mxu0 0
      %2190 = vmatpush1.bf16.msra.mxu0 0
      %2191 = vmatprep.subr.bf16.mxu0 0
      %2192 = vmatpush1.bf16.msra.mxu0 0
      %2193 = vmatprep.subr.bf16.mxu0 0
      %2194 = vmatpush1.bf16.msra.mxu0 0
      %2195 = vmatprep.subr.bf16.mxu0 0
      %2196 = vmatpush1.bf16.msra.mxu0 0
      %2197 = vmatprep.subr.bf16.mxu0 0
      %2198 = vmatpush1.bf16.msra.mxu0 0
      %2199 = vmatprep.subr.bf16.mxu0 0
      %2200 = vmatpush1.bf16.msra.mxu0 0
      %2201 = vmatprep.subr.bf16.mxu0 0
      %2202 = vmatpush1.bf16.msra.mxu0 0
      %2203 = vmatprep.subr.bf16.mxu0 0
      %2204 = vmatpush1.bf16.msra.mxu0 0
      %2205 = vmatprep.subr.bf16.mxu0 0
      %2206 = vmatpush1.bf16.msra.mxu0 0
      %2207 = vmatprep.mubr.bf16.mxu0 0
      %2208 = vmatmul.mubr.bf16.gmra.mrb[0].mxu0 %v2164
      %v2209 = vpop.f32.mrb[0].mxu0
      %v2210 = vadd.f32 %v2149, %v2209
      %v2211 = vpop.f32.mrb[0].mxu0
      %v2212 = vpop.f32.mrb[0].mxu0
      %v2213 = vadd.f32 %v2149, %v2212
      %v2214 = vpop.f32.mrb[0].mxu0
      %2215 = vmatprep.mubr.bf16.mxu0 0
      %2216 = vmatmul.mubr.bf16.gmra.mrb[0].mxu0 %v2167
      %v2217 = vpop.f32.mrb[0].mxu0
      %v2218 = vadd.f32 %v2149, %v2217
      %v2219 = vpop.f32.mrb[0].mxu0
      %v2220 = vpop.f32.mrb[0].mxu0
      %v2221 = vadd.f32 %v2149, %v2220
      %v2222 = vpop.f32.mrb[0].mxu0
      %2223 = vmatprep.mubr.bf16.mxu0 0
      %2224 = vmatmul.mubr.bf16.gmra.mrb[0].mxu0 %v2170
      %v2225 = vpop.f32.mrb[0].mxu0
      %v2226 = vadd.f32 %v2149, %v2225
      %v2227 = vpop.f32.mrb[0].mxu0
      %v2228 = vpop.f32.mrb[0].mxu0
      %v2229 = vadd.f32 %v2149, %v2228
      %v2230 = vpop.f32.mrb[0].mxu0
      %2231 = vmatprep.mubr.bf16.mxu0 0
      %2232 = vmatmul.mubr.bf16.gmra.mrb[0].mxu0 %v2173
      %v2233 = vpop.f32.mrb[0].mxu0
      %v2234 = vadd.f32 %v2149, %v2233
      %v2235 = vpop.f32.mrb[0].mxu0
      %v2236 = vpop.f32.mrb[0].mxu0
      %v2237 = vadd.f32 %v2149, %v2236
      %v2238 = vpop.f32.mrb[0].mxu0
      %2239 = vdwg.mxu0
      %v2240 = vmul.f32 %v2210, 0.35355338
      %v2241 = vmul.f32 %v2213, 0.35355338
      %v2242 = vmul.f32 %v2218, 0.35355338
      %v2243 = vmul.f32 %v2221, 0.35355338
      %v2244 = vmul.f32 %v2226, 0.35355338
      %v2245 = vmul.f32 %v2229, 0.35355338
      %v2246 = vmul.f32 %v2234, 0.35355338
      %v2247 = vmul.f32 %v2237, 0.35355338
      %v2248 = vpack.c.bf16 %v2241, %v2240
      %v2249 = vpack.c.bf16 %v2243, %v2242
      %v2250 = vpack.c.bf16 %v2245, %v2244
      %v2251 = vpack.c.bf16 %v2247, %v2246
      %v2252 = vpack.c.bf16 %v2213, %v2210
      %v2253 = vpack.c.bf16 %v2221, %v2218
      %v2254 = vpack.c.bf16 %v2229, %v2226
      %v2255 = vpack.c.bf16 %v2237, %v2234
      %2257 = vrot.lane.b32.xlu0 %v2252, 96
      %v2258 = vpop.permute.xlu0 %2257
      %vm2259 = vcmask 64512
      %v2261 = vsel %vm2259, %v2248, 0
      %v2264 = vsel %vm2259, %v2258, 0
      %2266 = vmatprep.subr.bf16.mxu0 0
      %2267 = vmatpush1.bf16.xpose.msra.mxu0 %v2264
      %2268 = vmatprep.subr.bf16.mxu0 0
      %2269 = vmatpush1.bf16.xpose.msra.mxu0 0
      %2270 = vmatprep.subr.bf16.mxu0 0
      %2271 = vmatpush1.bf16.xpose.msra.mxu0 0
      %2272 = vmatprep.subr.bf16.mxu0 0
      %2273 = vmatpush1.bf16.xpose.msra.mxu0 0
      %2274 = vmatprep.subr.bf16.mxu0 0
      %2275 = vmatpush1.bf16.xpose.msra.mxu0 0
      %2276 = vmatprep.subr.bf16.mxu0 0
      %2277 = vmatpush1.bf16.xpose.msra.mxu0 0
      %2278 = vmatprep.subr.bf16.mxu0 0
      %2279 = vmatpush1.bf16.xpose.msra.mxu0 0
      %2280 = vmatprep.subr.bf16.mxu0 0
      %2281 = vmatpush1.bf16.xpose.msra.mxu0 0
      %2282 = vmatprep.subr.bf16.mxu0 0
      %2283 = vmatpush1.bf16.xpose.msra.mxu0 0
      %2284 = vmatprep.subr.bf16.mxu0 0
      %2285 = vmatpush1.bf16.xpose.msra.mxu0 0
      %2286 = vmatprep.subr.bf16.mxu0 0
      %2287 = vmatpush1.bf16.xpose.msra.mxu0 0
      %2288 = vmatprep.subr.bf16.mxu0 0
      %2289 = vmatpush1.bf16.xpose.msra.mxu0 0
      %2290 = vmatprep.subr.bf16.mxu0 0
      %2291 = vmatpush1.bf16.xpose.msra.mxu0 0
      %2292 = vmatprep.subr.bf16.mxu0 0
      %2293 = vmatpush1.bf16.xpose.msra.mxu0 0
      %2294 = vmatprep.subr.bf16.mxu0 0
      %2295 = vmatpush1.bf16.xpose.msra.mxu0 0
      %2296 = vmatprep.subr.bf16.mxu0 0
      %2297 = vmatpush1.bf16.xpose.msra.mxu0 0
      %2298 = vmatprep.mubr.bf16.mxu0 0
      %2299 = vmatmul.mubr.bf16.gmra.mrb[0].mxu0 %v2261
      %v2300 = vpop.f32.mrb[0].mxu0
      %v2301 = vadd.f32 0.0, %v2300
      %v2302 = vpop.f32.mrb[0].mxu0
      %v2303 = vpop.f32.mrb[0].mxu0
      %v2304 = vadd.f32 0.0, %v2303
      %v2305 = vpop.f32.mrb[0].mxu0
      %2306 = vdwg.mxu0
      %2308 = vrot.lane.b32.xlu0 %v2253, 96
      %v2309 = vpop.permute.xlu0 %2308
      %v2311 = vsel %vm2259, %v2249, 0
      %v2314 = vsel %vm2259, %v2309, 0
      %2316 = vmatprep.subr.bf16.mxu0 0
      %2317 = vmatpush1.bf16.xpose.msra.mxu0 %v2314
      %2318 = vmatprep.subr.bf16.mxu0 0
      %2319 = vmatpush1.bf16.xpose.msra.mxu0 0
      %2320 = vmatprep.subr.bf16.mxu0 0
      %2321 = vmatpush1.bf16.xpose.msra.mxu0 0
      %2322 = vmatprep.subr.bf16.mxu0 0
      %2323 = vmatpush1.bf16.xpose.msra.mxu0 0
      %2324 = vmatprep.subr.bf16.mxu0 0
      %2325 = vmatpush1.bf16.xpose.msra.mxu0 0
      %2326 = vmatprep.subr.bf16.mxu0 0
      %2327 = vmatpush1.bf16.xpose.msra.mxu0 0
      %2328 = vmatprep.subr.bf16.mxu0 0
      %2329 = vmatpush1.bf16.xpose.msra.mxu0 0
      %2330 = vmatprep.subr.bf16.mxu0 0
      %2331 = vmatpush1.bf16.xpose.msra.mxu0 0
      %2332 = vmatprep.subr.bf16.mxu0 0
      %2333 = vmatpush1.bf16.xpose.msra.mxu0 0
      %2334 = vmatprep.subr.bf16.mxu0 0
      %2335 = vmatpush1.bf16.xpose.msra.mxu0 0
      %2336 = vmatprep.subr.bf16.mxu0 0
      %2337 = vmatpush1.bf16.xpose.msra.mxu0 0
      %2338 = vmatprep.subr.bf16.mxu0 0
      %2339 = vmatpush1.bf16.xpose.msra.mxu0 0
      %2340 = vmatprep.subr.bf16.mxu0 0
      %2341 = vmatpush1.bf16.xpose.msra.mxu0 0
      %2342 = vmatprep.subr.bf16.mxu0 0
      %2343 = vmatpush1.bf16.xpose.msra.mxu0 0
      %2344 = vmatprep.subr.bf16.mxu0 0
      %2345 = vmatpush1.bf16.xpose.msra.mxu0 0
      %2346 = vmatprep.subr.bf16.mxu0 0
      %2347 = vmatpush1.bf16.xpose.msra.mxu0 0
      %2348 = vmatprep.mubr.bf16.mxu0 0
      %2349 = vmatmul.mubr.bf16.gmra.mrb[0].mxu0 %v2311
      %v2350 = vpop.f32.mrb[0].mxu0
      %v2351 = vadd.f32 0.0, %v2350
      %v2352 = vpop.f32.mrb[0].mxu0
      %v2353 = vpop.f32.mrb[0].mxu0
      %v2354 = vadd.f32 0.0, %v2353
      %v2355 = vpop.f32.mrb[0].mxu0
      %2356 = vdwg.mxu0
      %2358 = vrot.lane.b32.xlu0 %v2254, 96
      %v2359 = vpop.permute.xlu0 %2358
      %v2361 = vsel %vm2259, %v2250, 0
      %v2364 = vsel %vm2259, %v2359, 0
      %2366 = vmatprep.subr.bf16.mxu0 0
      %2367 = vmatpush1.bf16.xpose.msra.mxu0 %v2364
      %2368 = vmatprep.subr.bf16.mxu0 0
      %2369 = vmatpush1.bf16.xpose.msra.mxu0 0
      %2370 = vmatprep.subr.bf16.mxu0 0
      %2371 = vmatpush1.bf16.xpose.msra.mxu0 0
      %2372 = vmatprep.subr.bf16.mxu0 0
      %2373 = vmatpush1.bf16.xpose.msra.mxu0 0
      %2374 = vmatprep.subr.bf16.mxu0 0
      %2375 = vmatpush1.bf16.xpose.msra.mxu0 0
      %2376 = vmatprep.subr.bf16.mxu0 0
      %2377 = vmatpush1.bf16.xpose.msra.mxu0 0
      %2378 = vmatprep.subr.bf16.mxu0 0
      %2379 = vmatpush1.bf16.xpose.msra.mxu0 0
      %2380 = vmatprep.subr.bf16.mxu0 0
      %2381 = vmatpush1.bf16.xpose.msra.mxu0 0
      %2382 = vmatprep.subr.bf16.mxu0 0
      %2383 = vmatpush1.bf16.xpose.msra.mxu0 0
      %2384 = vmatprep.subr.bf16.mxu0 0
      %2385 = vmatpush1.bf16.xpose.msra.mxu0 0
      %2386 = vmatprep.subr.bf16.mxu0 0
      %2387 = vmatpush1.bf16.xpose.msra.mxu0 0
      %2388 = vmatprep.subr.bf16.mxu0 0
      %2389 = vmatpush1.bf16.xpose.msra.mxu0 0
      %2390 = vmatprep.subr.bf16.mxu0 0
      %2391 = vmatpush1.bf16.xpose.msra.mxu0 0
      %2392 = vmatprep.subr.bf16.mxu0 0
      %2393 = vmatpush1.bf16.xpose.msra.mxu0 0
      %2394 = vmatprep.subr.bf16.mxu0 0
      %2395 = vmatpush1.bf16.xpose.msra.mxu0 0
      %2396 = vmatprep.subr.bf16.mxu0 0
      %2397 = vmatpush1.bf16.xpose.msra.mxu0 0
      %2398 = vmatprep.mubr.bf16.mxu0 0
      %2399 = vmatmul.mubr.bf16.gmra.mrb[0].mxu0 %v2361
      %v2400 = vpop.f32.mrb[0].mxu0
      %v2401 = vadd.f32 0.0, %v2400
      %v2402 = vpop.f32.mrb[0].mxu0
      %v2403 = vpop.f32.mrb[0].mxu0
      %v2404 = vadd.f32 0.0, %v2403
      %v2405 = vpop.f32.mrb[0].mxu0
      %2406 = vdwg.mxu0
      %2408 = vrot.lane.b32.xlu0 %v2255, 96
      %v2409 = vpop.permute.xlu0 %2408
      %v2411 = vsel %vm2259, %v2251, 0
      %v2414 = vsel %vm2259, %v2409, 0
      %2416 = vmatprep.subr.bf16.mxu0 0
      %2417 = vmatpush1.bf16.xpose.msra.mxu0 %v2414
      %2418 = vmatprep.subr.bf16.mxu0 0
      %2419 = vmatpush1.bf16.xpose.msra.mxu0 0
      %2420 = vmatprep.subr.bf16.mxu0 0
      %2421 = vmatpush1.bf16.xpose.msra.mxu0 0
      %2422 = vmatprep.subr.bf16.mxu0 0
      %2423 = vmatpush1.bf16.xpose.msra.mxu0 0
      %2424 = vmatprep.subr.bf16.mxu0 0
      %2425 = vmatpush1.bf16.xpose.msra.mxu0 0
      %2426 = vmatprep.subr.bf16.mxu0 0
      %2427 = vmatpush1.bf16.xpose.msra.mxu0 0
      %2428 = vmatprep.subr.bf16.mxu0 0
      %2429 = vmatpush1.bf16.xpose.msra.mxu0 0
      %2430 = vmatprep.subr.bf16.mxu0 0
      %2431 = vmatpush1.bf16.xpose.msra.mxu0 0
      %2432 = vmatprep.subr.bf16.mxu0 0
      %2433 = vmatpush1.bf16.xpose.msra.mxu0 0
      %2434 = vmatprep.subr.bf16.mxu0 0
      %2435 = vmatpush1.bf16.xpose.msra.mxu0 0
      %2436 = vmatprep.subr.bf16.mxu0 0
      %2437 = vmatpush1.bf16.xpose.msra.mxu0 0
      %2438 = vmatprep.subr.bf16.mxu0 0
      %2439 = vmatpush1.bf16.xpose.msra.mxu0 0
      %2440 = vmatprep.subr.bf16.mxu0 0
      %2441 = vmatpush1.bf16.xpose.msra.mxu0 0
      %2442 = vmatprep.subr.bf16.mxu0 0
      %2443 = vmatpush1.bf16.xpose.msra.mxu0 0
      %2444 = vmatprep.subr.bf16.mxu0 0
      %2445 = vmatpush1.bf16.xpose.msra.mxu0 0
      %2446 = vmatprep.subr.bf16.mxu0 0
      %2447 = vmatpush1.bf16.xpose.msra.mxu0 0
      %2448 = vmatprep.mubr.bf16.mxu0 0
      %2449 = vmatmul.mubr.bf16.gmra.mrb[0].mxu0 %v2411
      %v2450 = vpop.f32.mrb[0].mxu0
      %v2451 = vadd.f32 0.0, %v2450
      %v2452 = vpop.f32.mrb[0].mxu0
      %v2453 = vpop.f32.mrb[0].mxu0
      %v2454 = vadd.f32 0.0, %v2453
      %v2455 = vpop.f32.mrb[0].mxu0
      %2456 = vdwg.mxu0
      %v2457 = vsel %vm1108, %v2301, -inf
      %2458 = vmax.xlane.f32.xlu0 %v2457
      %v2459 = vpop.xlane.xlu0 %2458
      %v2460 = vsel %vm1108, %v2304, -inf
      %2461 = vmax.xlane.f32.xlu0 %v2460
      %v2462 = vpop.xlane.xlu0 %2461
      %v2463 = vsel %vm1108, %v2351, -inf
      %2464 = vmax.xlane.f32.xlu0 %v2463
      %v2465 = vpop.xlane.xlu0 %2464
      %v2466 = vsel %vm1108, %v2354, -inf
      %2467 = vmax.xlane.f32.xlu0 %v2466
      %v2468 = vpop.xlane.xlu0 %2467
      %v2469 = vsel %vm1108, %v2401, -inf
      %2470 = vmax.xlane.f32.xlu0 %v2469
      %v2471 = vpop.xlane.xlu0 %2470
      %v2472 = vsel %vm1108, %v2404, -inf
      %2473 = vmax.xlane.f32.xlu0 %v2472
      %v2474 = vpop.xlane.xlu0 %2473
      %v2475 = vsel %vm1108, %v2451, -inf
      %2476 = vmax.xlane.f32.xlu0 %v2475
      %v2477 = vpop.xlane.xlu0 %2476
      %v2478 = vsel %vm1108, %v2454, -inf
      %2479 = vmax.xlane.f32.xlu0 %v2478
      %v2480 = vpop.xlane.xlu0 %2479
      %v2481 = vsub.f32 %v2301, %v2459
      %v2482 = vsub.f32 %v2304, %v2462
      %v2483 = vsub.f32 %v2351, %v2465
      %v2484 = vsub.f32 %v2354, %v2468
      %v2485 = vsub.f32 %v2401, %v2471
      %v2486 = vsub.f32 %v2404, %v2474
      %v2487 = vsub.f32 %v2451, %v2477
      %v2488 = vsub.f32 %v2454, %v2480
      %v2489 = vmul.f32 %v2481, 1.442695
      %v2490 = vpow.pop %v2489
      %v2491 = vmul.f32 %v2482, 1.442695
      %v2492 = vpow.pop %v2491
      %v2493 = vmul.f32 %v2483, 1.442695
      %v2494 = vpow.pop %v2493
      %v2495 = vmul.f32 %v2484, 1.442695
      %v2496 = vpow.pop %v2495
      %v2497 = vmul.f32 %v2485, 1.442695
      %v2498 = vpow.pop %v2497
      %v2499 = vmul.f32 %v2486, 1.442695
      %v2500 = vpow.pop %v2499
      %v2501 = vmul.f32 %v2487, 1.442695
      %v2502 = vpow.pop %v2501
      %v2503 = vmul.f32 %v2488, 1.442695
      %v2504 = vpow.pop %v2503
      %v2505 = vsel %vm1108, %v2490, 0.0
      %2506 = vadd.xlane.f32.xlu0 %v2505
      %v2507 = vpop.xlane.xlu0 %2506
      %v2508 = vsel %vm1108, %v2492, 0.0
      %2509 = vadd.xlane.f32.xlu0 %v2508
      %v2510 = vpop.xlane.xlu0 %2509
      %v2511 = vsel %vm1108, %v2494, 0.0
      %2512 = vadd.xlane.f32.xlu0 %v2511
      %v2513 = vpop.xlane.xlu0 %2512
      %v2514 = vsel %vm1108, %v2496, 0.0
      %2515 = vadd.xlane.f32.xlu0 %v2514
      %v2516 = vpop.xlane.xlu0 %2515
      %v2517 = vsel %vm1108, %v2498, 0.0
      %2518 = vadd.xlane.f32.xlu0 %v2517
      %v2519 = vpop.xlane.xlu0 %2518
      %v2520 = vsel %vm1108, %v2500, 0.0
      %2521 = vadd.xlane.f32.xlu0 %v2520
      %v2522 = vpop.xlane.xlu0 %2521
      %v2523 = vsel %vm1108, %v2502, 0.0
      %2524 = vadd.xlane.f32.xlu0 %v2523
      %v2525 = vpop.xlane.xlu0 %2524
      %v2526 = vsel %vm1108, %v2504, 0.0
      %2527 = vadd.xlane.f32.xlu0 %v2526
      %v2528 = vpop.xlane.xlu0 %2527
      %v2529 = vrcp.pop %v2507
      %v2530 = vmul.f32 %v2490, %v2529
      %v2531 = vrcp.pop %v2510
      %v2532 = vmul.f32 %v2492, %v2531
      %v2533 = vrcp.pop %v2513
      %v2534 = vmul.f32 %v2494, %v2533
      %v2535 = vrcp.pop %v2516
      %v2536 = vmul.f32 %v2496, %v2535
      %v2537 = vrcp.pop %v2519
      %v2538 = vmul.f32 %v2498, %v2537
      %v2539 = vrcp.pop %v2522
      %v2540 = vmul.f32 %v2500, %v2539
      %v2541 = vrcp.pop %v2525
      %v2542 = vmul.f32 %v2502, %v2541
      %v2543 = vrcp.pop %v2528
      %v2544 = vmul.f32 %v2504, %v2543
      %v2545 = vpack.c.bf16 %v2532, %v2530
      %v2546 = vpack.c.bf16 %v2536, %v2534
      %v2547 = vpack.c.bf16 %v2540, %v2538
      %v2548 = vpack.c.bf16 %v2544, %v2542
      %2549 = vrot.lane.b32.xlu0 %v2252, 80
      %v2550 = vpop.permute.xlu0 %2549
      %v2553 = vsel %vm1108, %v2545, 0
      %2555 = vmatprep.subr.bf16.mxu0 0
      %2556 = vmatpush1.bf16.msra.mxu0 %v2550
      %2557 = vmatprep.subr.bf16.mxu0 0
      %2558 = vmatpush1.bf16.msra.mxu0 0
      %2559 = vmatprep.subr.bf16.mxu0 0
      %2560 = vmatpush1.bf16.msra.mxu0 0
      %2561 = vmatprep.subr.bf16.mxu0 0
      %2562 = vmatpush1.bf16.msra.mxu0 0
      %2563 = vmatprep.subr.bf16.mxu0 0
      %2564 = vmatpush1.bf16.msra.mxu0 0
      %2565 = vmatprep.subr.bf16.mxu0 0
      %2566 = vmatpush1.bf16.msra.mxu0 0
      %2567 = vmatprep.subr.bf16.mxu0 0
      %2568 = vmatpush1.bf16.msra.mxu0 0
      %2569 = vmatprep.subr.bf16.mxu0 0
      %2570 = vmatpush1.bf16.msra.mxu0 0
      %2571 = vmatprep.subr.bf16.mxu0 0
      %2572 = vmatpush1.bf16.msra.mxu0 0
      %2573 = vmatprep.subr.bf16.mxu0 0
      %2574 = vmatpush1.bf16.msra.mxu0 0
      %2575 = vmatprep.subr.bf16.mxu0 0
      %2576 = vmatpush1.bf16.msra.mxu0 0
      %2577 = vmatprep.subr.bf16.mxu0 0
      %2578 = vmatpush1.bf16.msra.mxu0 0
      %2579 = vmatprep.subr.bf16.mxu0 0
      %2580 = vmatpush1.bf16.msra.mxu0 0
      %2581 = vmatprep.subr.bf16.mxu0 0
      %2582 = vmatpush1.bf16.msra.mxu0 0
      %2583 = vmatprep.subr.bf16.mxu0 0
      %2584 = vmatpush1.bf16.msra.mxu0 0
      %2585 = vmatprep.subr.bf16.mxu0 0
      %2586 = vmatpush1.bf16.msra.mxu0 0
      %2587 = vmatprep.mubr.bf16.mxu0 0
      %2588 = vmatmul.mubr.bf16.gmra.mrb[0].mxu0 %v2553
      %v2589 = vpop.f32.mrb[0].mxu0
      %v2590 = vadd.f32 0.0, %v2589
      %v2591 = vpop.f32.mrb[0].mxu0
      %v2592 = vpop.f32.mrb[0].mxu0
      %v2593 = vadd.f32 0.0, %v2592
      %v2594 = vpop.f32.mrb[0].mxu0
      %2595 = vdwg.mxu0
      %2596 = vrot.lane.b32.xlu0 %v2253, 80
      %v2597 = vpop.permute.xlu0 %2596
      %v2600 = vsel %vm1108, %v2546, 0
      %2602 = vmatprep.subr.bf16.mxu0 0
      %2603 = vmatpush1.bf16.msra.mxu0 %v2597
      %2604 = vmatprep.subr.bf16.mxu0 0
      %2605 = vmatpush1.bf16.msra.mxu0 0
      %2606 = vmatprep.subr.bf16.mxu0 0
      %2607 = vmatpush1.bf16.msra.mxu0 0
      %2608 = vmatprep.subr.bf16.mxu0 0
      %2609 = vmatpush1.bf16.msra.mxu0 0
      %2610 = vmatprep.subr.bf16.mxu0 0
      %2611 = vmatpush1.bf16.msra.mxu0 0
      %2612 = vmatprep.subr.bf16.mxu0 0
      %2613 = vmatpush1.bf16.msra.mxu0 0
      %2614 = vmatprep.subr.bf16.mxu0 0
      %2615 = vmatpush1.bf16.msra.mxu0 0
      %2616 = vmatprep.subr.bf16.mxu0 0
      %2617 = vmatpush1.bf16.msra.mxu0 0
      %2618 = vmatprep.subr.bf16.mxu0 0
      %2619 = vmatpush1.bf16.msra.mxu0 0
      %2620 = vmatprep.subr.bf16.mxu0 0
      %2621 = vmatpush1.bf16.msra.mxu0 0
      %2622 = vmatprep.subr.bf16.mxu0 0
      %2623 = vmatpush1.bf16.msra.mxu0 0
      %2624 = vmatprep.subr.bf16.mxu0 0
      %2625 = vmatpush1.bf16.msra.mxu0 0
      %2626 = vmatprep.subr.bf16.mxu0 0
      %2627 = vmatpush1.bf16.msra.mxu0 0
      %2628 = vmatprep.subr.bf16.mxu0 0
      %2629 = vmatpush1.bf16.msra.mxu0 0
      %2630 = vmatprep.subr.bf16.mxu0 0
      %2631 = vmatpush1.bf16.msra.mxu0 0
      %2632 = vmatprep.subr.bf16.mxu0 0
      %2633 = vmatpush1.bf16.msra.mxu0 0
      %2634 = vmatprep.mubr.bf16.mxu0 0
      %2635 = vmatmul.mubr.bf16.gmra.mrb[0].mxu0 %v2600
      %v2636 = vpop.f32.mrb[0].mxu0
      %v2637 = vadd.f32 0.0, %v2636
      %v2638 = vpop.f32.mrb[0].mxu0
      %v2639 = vpop.f32.mrb[0].mxu0
      %v2640 = vadd.f32 0.0, %v2639
      %v2641 = vpop.f32.mrb[0].mxu0
      %2642 = vdwg.mxu0
      %2643 = vrot.lane.b32.xlu0 %v2254, 80
      %v2644 = vpop.permute.xlu0 %2643
      %v2647 = vsel %vm1108, %v2547, 0
      %2649 = vmatprep.subr.bf16.mxu0 0
      %2650 = vmatpush1.bf16.msra.mxu0 %v2644
      %2651 = vmatprep.subr.bf16.mxu0 0
      %2652 = vmatpush1.bf16.msra.mxu0 0
      %2653 = vmatprep.subr.bf16.mxu0 0
      %2654 = vmatpush1.bf16.msra.mxu0 0
      %2655 = vmatprep.subr.bf16.mxu0 0
      %2656 = vmatpush1.bf16.msra.mxu0 0
      %2657 = vmatprep.subr.bf16.mxu0 0
      %2658 = vmatpush1.bf16.msra.mxu0 0
      %2659 = vmatprep.subr.bf16.mxu0 0
      %2660 = vmatpush1.bf16.msra.mxu0 0
      %2661 = vmatprep.subr.bf16.mxu0 0
      %2662 = vmatpush1.bf16.msra.mxu0 0
      %2663 = vmatprep.subr.bf16.mxu0 0
      %2664 = vmatpush1.bf16.msra.mxu0 0
      %2665 = vmatprep.subr.bf16.mxu0 0
      %2666 = vmatpush1.bf16.msra.mxu0 0
      %2667 = vmatprep.subr.bf16.mxu0 0
      %2668 = vmatpush1.bf16.msra.mxu0 0
      %2669 = vmatprep.subr.bf16.mxu0 0
      %2670 = vmatpush1.bf16.msra.mxu0 0
      %2671 = vmatprep.subr.bf16.mxu0 0
      %2672 = vmatpush1.bf16.msra.mxu0 0
      %2673 = vmatprep.subr.bf16.mxu0 0
      %2674 = vmatpush1.bf16.msra.mxu0 0
      %2675 = vmatprep.subr.bf16.mxu0 0
      %2676 = vmatpush1.bf16.msra.mxu0 0
      %2677 = vmatprep.subr.bf16.mxu0 0
      %2678 = vmatpush1.bf16.msra.mxu0 0
      %2679 = vmatprep.subr.bf16.mxu0 0
      %2680 = vmatpush1.bf16.msra.mxu0 0
      %2681 = vmatprep.mubr.bf16.mxu0 0
      %2682 = vmatmul.mubr.bf16.gmra.mrb[0].mxu0 %v2647
      %v2683 = vpop.f32.mrb[0].mxu0
      %v2684 = vadd.f32 0.0, %v2683
      %v2685 = vpop.f32.mrb[0].mxu0
      %v2686 = vpop.f32.mrb[0].mxu0
      %v2687 = vadd.f32 0.0, %v2686
      %v2688 = vpop.f32.mrb[0].mxu0
      %2689 = vdwg.mxu0
      %2690 = vrot.lane.b32.xlu0 %v2255, 80
      %v2691 = vpop.permute.xlu0 %2690
      %v2694 = vsel %vm1108, %v2548, 0
      %2696 = vmatprep.subr.bf16.mxu0 0
      %2697 = vmatpush1.bf16.msra.mxu0 %v2691
      %2698 = vmatprep.subr.bf16.mxu0 0
      %2699 = vmatpush1.bf16.msra.mxu0 0
      %2700 = vmatprep.subr.bf16.mxu0 0
      %2701 = vmatpush1.bf16.msra.mxu0 0
      %2702 = vmatprep.subr.bf16.mxu0 0
      %2703 = vmatpush1.bf16.msra.mxu0 0
      %2704 = vmatprep.subr.bf16.mxu0 0
      %2705 = vmatpush1.bf16.msra.mxu0 0
      %2706 = vmatprep.subr.bf16.mxu0 0
      %2707 = vmatpush1.bf16.msra.mxu0 0
      %2708 = vmatprep.subr.bf16.mxu0 0
      %2709 = vmatpush1.bf16.msra.mxu0 0
      %2710 = vmatprep.subr.bf16.mxu0 0
      %2711 = vmatpush1.bf16.msra.mxu0 0
      %2712 = vmatprep.subr.bf16.mxu0 0
      %2713 = vmatpush1.bf16.msra.mxu0 0
      %2714 = vmatprep.subr.bf16.mxu0 0
      %2715 = vmatpush1.bf16.msra.mxu0 0
      %2716 = vmatprep.subr.bf16.mxu0 0
      %2717 = vmatpush1.bf16.msra.mxu0 0
      %2718 = vmatprep.subr.bf16.mxu0 0
      %2719 = vmatpush1.bf16.msra.mxu0 0
      %2720 = vmatprep.subr.bf16.mxu0 0
      %2721 = vmatpush1.bf16.msra.mxu0 0
      %2722 = vmatprep.subr.bf16.mxu0 0
      %2723 = vmatpush1.bf16.msra.mxu0 0
      %2724 = vmatprep.subr.bf16.mxu0 0
      %2725 = vmatpush1.bf16.msra.mxu0 0
      %2726 = vmatprep.subr.bf16.mxu0 0
      %2727 = vmatpush1.bf16.msra.mxu0 0
      %2728 = vmatprep.mubr.bf16.mxu0 0
      %2729 = vmatmul.mubr.bf16.gmra.mrb[0].mxu0 %v2694
      %v2730 = vpop.f32.mrb[0].mxu0
      %v2731 = vadd.f32 0.0, %v2730
      %v2732 = vpop.f32.mrb[0].mxu0
      %v2733 = vpop.f32.mrb[0].mxu0
      %v2734 = vadd.f32 0.0, %v2733
      %v2735 = vpop.f32.mrb[0].mxu0
      %2736 = vdwg.mxu0
      %2738 = vrot.lane.b32.xlu0 %v2248, 120
      %v2739 = vpop.permute.xlu0 %2738
      %v2741 = vsel %vm2259, %v2739, 0
      %2743 = vmatprep.subr.bf16.mxu0 0
      %2744 = vmatpush1.bf16.xpose.msra.mxu0 %v2264
      %2745 = vmatprep.subr.bf16.mxu0 0
      %2746 = vmatpush1.bf16.xpose.msra.mxu0 0
      %2747 = vmatprep.subr.bf16.mxu0 0
      %2748 = vmatpush1.bf16.xpose.msra.mxu0 0
      %2749 = vmatprep.subr.bf16.mxu0 0
      %2750 = vmatpush1.bf16.xpose.msra.mxu0 0
      %2751 = vmatprep.subr.bf16.mxu0 0
      %2752 = vmatpush1.bf16.xpose.msra.mxu0 0
      %2753 = vmatprep.subr.bf16.mxu0 0
      %2754 = vmatpush1.bf16.xpose.msra.mxu0 0
      %2755 = vmatprep.subr.bf16.mxu0 0
      %2756 = vmatpush1.bf16.xpose.msra.mxu0 0
      %2757 = vmatprep.subr.bf16.mxu0 0
      %2758 = vmatpush1.bf16.xpose.msra.mxu0 0
      %2759 = vmatprep.subr.bf16.mxu0 0
      %2760 = vmatpush1.bf16.xpose.msra.mxu0 0
      %2761 = vmatprep.subr.bf16.mxu0 0
      %2762 = vmatpush1.bf16.xpose.msra.mxu0 0
      %2763 = vmatprep.subr.bf16.mxu0 0
      %2764 = vmatpush1.bf16.xpose.msra.mxu0 0
      %2765 = vmatprep.subr.bf16.mxu0 0
      %2766 = vmatpush1.bf16.xpose.msra.mxu0 0
      %2767 = vmatprep.subr.bf16.mxu0 0
      %2768 = vmatpush1.bf16.xpose.msra.mxu0 0
      %2769 = vmatprep.subr.bf16.mxu0 0
      %2770 = vmatpush1.bf16.xpose.msra.mxu0 0
      %2771 = vmatprep.subr.bf16.mxu0 0
      %2772 = vmatpush1.bf16.xpose.msra.mxu0 0
      %2773 = vmatprep.subr.bf16.mxu0 0
      %2774 = vmatpush1.bf16.xpose.msra.mxu0 0
      %2775 = vmatprep.mubr.bf16.mxu0 0
      %2776 = vmatmul.mubr.bf16.gmra.mrb[0].mxu0 %v2741
      %v2777 = vpop.f32.mrb[0].mxu0
      %v2778 = vadd.f32 0.0, %v2777
      %v2779 = vpop.f32.mrb[0].mxu0
      %v2780 = vpop.f32.mrb[0].mxu0
      %v2781 = vadd.f32 0.0, %v2780
      %v2782 = vpop.f32.mrb[0].mxu0
      %2783 = vdwg.mxu0
      %2785 = vrot.lane.b32.xlu0 %v2249, 120
      %v2786 = vpop.permute.xlu0 %2785
      %v2788 = vsel %vm2259, %v2786, 0
      %2790 = vmatprep.subr.bf16.mxu0 0
      %2791 = vmatpush1.bf16.xpose.msra.mxu0 %v2314
      %2792 = vmatprep.subr.bf16.mxu0 0
      %2793 = vmatpush1.bf16.xpose.msra.mxu0 0
      %2794 = vmatprep.subr.bf16.mxu0 0
      %2795 = vmatpush1.bf16.xpose.msra.mxu0 0
      %2796 = vmatprep.subr.bf16.mxu0 0
      %2797 = vmatpush1.bf16.xpose.msra.mxu0 0
      %2798 = vmatprep.subr.bf16.mxu0 0
      %2799 = vmatpush1.bf16.xpose.msra.mxu0 0
      %2800 = vmatprep.subr.bf16.mxu0 0
      %2801 = vmatpush1.bf16.xpose.msra.mxu0 0
      %2802 = vmatprep.subr.bf16.mxu0 0
      %2803 = vmatpush1.bf16.xpose.msra.mxu0 0
      %2804 = vmatprep.subr.bf16.mxu0 0
      %2805 = vmatpush1.bf16.xpose.msra.mxu0 0
      %2806 = vmatprep.subr.bf16.mxu0 0
      %2807 = vmatpush1.bf16.xpose.msra.mxu0 0
      %2808 = vmatprep.subr.bf16.mxu0 0
      %2809 = vmatpush1.bf16.xpose.msra.mxu0 0
      %2810 = vmatprep.subr.bf16.mxu0 0
      %2811 = vmatpush1.bf16.xpose.msra.mxu0 0
      %2812 = vmatprep.subr.bf16.mxu0 0
      %2813 = vmatpush1.bf16.xpose.msra.mxu0 0
      %2814 = vmatprep.subr.bf16.mxu0 0
      %2815 = vmatpush1.bf16.xpose.msra.mxu0 0
      %2816 = vmatprep.subr.bf16.mxu0 0
      %2817 = vmatpush1.bf16.xpose.msra.mxu0 0
      %2818 = vmatprep.subr.bf16.mxu0 0
      %2819 = vmatpush1.bf16.xpose.msra.mxu0 0
      %2820 = vmatprep.subr.bf16.mxu0 0
      %2821 = vmatpush1.bf16.xpose.msra.mxu0 0
      %2822 = vmatprep.mubr.bf16.mxu0 0
      %2823 = vmatmul.mubr.bf16.gmra.mrb[0].mxu0 %v2788
      %v2824 = vpop.f32.mrb[0].mxu0
      %v2825 = vadd.f32 0.0, %v2824
      %v2826 = vpop.f32.mrb[0].mxu0
      %v2827 = vpop.f32.mrb[0].mxu0
      %v2828 = vadd.f32 0.0, %v2827
      %v2829 = vpop.f32.mrb[0].mxu0
      %2830 = vdwg.mxu0
      %2832 = vrot.lane.b32.xlu0 %v2250, 120
      %v2833 = vpop.permute.xlu0 %2832
      %v2835 = vsel %vm2259, %v2833, 0
      %2837 = vmatprep.subr.bf16.mxu0 0
      %2838 = vmatpush1.bf16.xpose.msra.mxu0 %v2364
      %2839 = vmatprep.subr.bf16.mxu0 0
      %2840 = vmatpush1.bf16.xpose.msra.mxu0 0
      %2841 = vmatprep.subr.bf16.mxu0 0
      %2842 = vmatpush1.bf16.xpose.msra.mxu0 0
      %2843 = vmatprep.subr.bf16.mxu0 0
      %2844 = vmatpush1.bf16.xpose.msra.mxu0 0
      %2845 = vmatprep.subr.bf16.mxu0 0
      %2846 = vmatpush1.bf16.xpose.msra.mxu0 0
      %2847 = vmatprep.subr.bf16.mxu0 0
      %2848 = vmatpush1.bf16.xpose.msra.mxu0 0
      %2849 = vmatprep.subr.bf16.mxu0 0
      %2850 = vmatpush1.bf16.xpose.msra.mxu0 0
      %2851 = vmatprep.subr.bf16.mxu0 0
      %2852 = vmatpush1.bf16.xpose.msra.mxu0 0
      %2853 = vmatprep.subr.bf16.mxu0 0
      %2854 = vmatpush1.bf16.xpose.msra.mxu0 0
      %2855 = vmatprep.subr.bf16.mxu0 0
      %2856 = vmatpush1.bf16.xpose.msra.mxu0 0
      %2857 = vmatprep.subr.bf16.mxu0 0
      %2858 = vmatpush1.bf16.xpose.msra.mxu0 0
      %2859 = vmatprep.subr.bf16.mxu0 0
      %2860 = vmatpush1.bf16.xpose.msra.mxu0 0
      %2861 = vmatprep.subr.bf16.mxu0 0
      %2862 = vmatpush1.bf16.xpose.msra.mxu0 0
      %2863 = vmatprep.subr.bf16.mxu0 0
      %2864 = vmatpush1.bf16.xpose.msra.mxu0 0
      %2865 = vmatprep.subr.bf16.mxu0 0
      %2866 = vmatpush1.bf16.xpose.msra.mxu0 0
      %2867 = vmatprep.subr.bf16.mxu0 0
      %2868 = vmatpush1.bf16.xpose.msra.mxu0 0
      %2869 = vmatprep.mubr.bf16.mxu0 0
      %2870 = vmatmul.mubr.bf16.gmra.mrb[0].mxu0 %v2835
      %v2871 = vpop.f32.mrb[0].mxu0
      %v2872 = vadd.f32 0.0, %v2871
      %v2873 = vpop.f32.mrb[0].mxu0
      %v2874 = vpop.f32.mrb[0].mxu0
      %v2875 = vadd.f32 0.0, %v2874
      %v2876 = vpop.f32.mrb[0].mxu0
      %2877 = vdwg.mxu0
      %2879 = vrot.lane.b32.xlu0 %v2251, 120
      %v2880 = vpop.permute.xlu0 %2879
      %v2882 = vsel %vm2259, %v2880, 0
      %2884 = vmatprep.subr.bf16.mxu0 0
      %2885 = vmatpush1.bf16.xpose.msra.mxu0 %v2414
      %2886 = vmatprep.subr.bf16.mxu0 0
      %2887 = vmatpush1.bf16.xpose.msra.mxu0 0
      %2888 = vmatprep.subr.bf16.mxu0 0
      %2889 = vmatpush1.bf16.xpose.msra.mxu0 0
      %2890 = vmatprep.subr.bf16.mxu0 0
      %2891 = vmatpush1.bf16.xpose.msra.mxu0 0
      %2892 = vmatprep.subr.bf16.mxu0 0
      %2893 = vmatpush1.bf16.xpose.msra.mxu0 0
      %2894 = vmatprep.subr.bf16.mxu0 0
      %2895 = vmatpush1.bf16.xpose.msra.mxu0 0
      %2896 = vmatprep.subr.bf16.mxu0 0
      %2897 = vmatpush1.bf16.xpose.msra.mxu0 0
      %2898 = vmatprep.subr.bf16.mxu0 0
      %2899 = vmatpush1.bf16.xpose.msra.mxu0 0
      %2900 = vmatprep.subr.bf16.mxu0 0
      %2901 = vmatpush1.bf16.xpose.msra.mxu0 0
      %2902 = vmatprep.subr.bf16.mxu0 0
      %2903 = vmatpush1.bf16.xpose.msra.mxu0 0
      %2904 = vmatprep.subr.bf16.mxu0 0
      %2905 = vmatpush1.bf16.xpose.msra.mxu0 0
      %2906 = vmatprep.subr.bf16.mxu0 0
      %2907 = vmatpush1.bf16.xpose.msra.mxu0 0
      %2908 = vmatprep.subr.bf16.mxu0 0
      %2909 = vmatpush1.bf16.xpose.msra.mxu0 0
      %2910 = vmatprep.subr.bf16.mxu0 0
      %2911 = vmatpush1.bf16.xpose.msra.mxu0 0
      %2912 = vmatprep.subr.bf16.mxu0 0
      %2913 = vmatpush1.bf16.xpose.msra.mxu0 0
      %2914 = vmatprep.subr.bf16.mxu0 0
      %2915 = vmatpush1.bf16.xpose.msra.mxu0 0
      %2916 = vmatprep.mubr.bf16.mxu0 0
      %2917 = vmatmul.mubr.bf16.gmra.mrb[0].mxu0 %v2882
      %v2918 = vpop.f32.mrb[0].mxu0
      %v2919 = vadd.f32 0.0, %v2918
      %v2920 = vpop.f32.mrb[0].mxu0
      %v2921 = vpop.f32.mrb[0].mxu0
      %v2922 = vadd.f32 0.0, %v2921
      %v2923 = vpop.f32.mrb[0].mxu0
      %2924 = vdwg.mxu0
      %v2925 = vsel %vm1108, %v2778, -inf
      %2926 = vmax.xlane.f32.xlu0 %v2925
      %v2927 = vpop.xlane.xlu0 %2926
      %v2928 = vsel %vm1108, %v2781, -inf
      %2929 = vmax.xlane.f32.xlu0 %v2928
      %v2930 = vpop.xlane.xlu0 %2929
      %v2931 = vsel %vm1108, %v2825, -inf
      %2932 = vmax.xlane.f32.xlu0 %v2931
      %v2933 = vpop.xlane.xlu0 %2932
      %v2934 = vsel %vm1108, %v2828, -inf
      %2935 = vmax.xlane.f32.xlu0 %v2934
      %v2936 = vpop.xlane.xlu0 %2935
      %v2937 = vsel %vm1108, %v2872, -inf
      %2938 = vmax.xlane.f32.xlu0 %v2937
      %v2939 = vpop.xlane.xlu0 %2938
      %v2940 = vsel %vm1108, %v2875, -inf
      %2941 = vmax.xlane.f32.xlu0 %v2940
      %v2942 = vpop.xlane.xlu0 %2941
      %v2943 = vsel %vm1108, %v2919, -inf
      %2944 = vmax.xlane.f32.xlu0 %v2943
      %v2945 = vpop.xlane.xlu0 %2944
      %v2946 = vsel %vm1108, %v2922, -inf
      %2947 = vmax.xlane.f32.xlu0 %v2946
      %v2948 = vpop.xlane.xlu0 %2947
      %v2949 = vsub.f32 %v2778, %v2927
      %v2950 = vsub.f32 %v2781, %v2930
      %v2951 = vsub.f32 %v2825, %v2933
      %v2952 = vsub.f32 %v2828, %v2936
      %v2953 = vsub.f32 %v2872, %v2939
      %v2954 = vsub.f32 %v2875, %v2942
      %v2955 = vsub.f32 %v2919, %v2945
      %v2956 = vsub.f32 %v2922, %v2948
      %v2957 = vmul.f32 %v2949, 1.442695
      %v2958 = vpow.pop %v2957
      %v2959 = vmul.f32 %v2950, 1.442695
      %v2960 = vpow.pop %v2959
      %v2961 = vmul.f32 %v2951, 1.442695
      %v2962 = vpow.pop %v2961
      %v2963 = vmul.f32 %v2952, 1.442695
      %v2964 = vpow.pop %v2963
      %v2965 = vmul.f32 %v2953, 1.442695
      %v2966 = vpow.pop %v2965
      %v2967 = vmul.f32 %v2954, 1.442695
      %v2968 = vpow.pop %v2967
      %v2969 = vmul.f32 %v2955, 1.442695
      %v2970 = vpow.pop %v2969
      %v2971 = vmul.f32 %v2956, 1.442695
      %v2972 = vpow.pop %v2971
      %v2973 = vsel %vm1108, %v2958, 0.0
      %2974 = vadd.xlane.f32.xlu0 %v2973
      %v2975 = vpop.xlane.xlu0 %2974
      %v2976 = vsel %vm1108, %v2960, 0.0
      %2977 = vadd.xlane.f32.xlu0 %v2976
      %v2978 = vpop.xlane.xlu0 %2977
      %v2979 = vsel %vm1108, %v2962, 0.0
      %2980 = vadd.xlane.f32.xlu0 %v2979
      %v2981 = vpop.xlane.xlu0 %2980
      %v2982 = vsel %vm1108, %v2964, 0.0
      %2983 = vadd.xlane.f32.xlu0 %v2982
      %v2984 = vpop.xlane.xlu0 %2983
      %v2985 = vsel %vm1108, %v2966, 0.0
      %2986 = vadd.xlane.f32.xlu0 %v2985
      %v2987 = vpop.xlane.xlu0 %2986
      %v2988 = vsel %vm1108, %v2968, 0.0
      %2989 = vadd.xlane.f32.xlu0 %v2988
      %v2990 = vpop.xlane.xlu0 %2989
      %v2991 = vsel %vm1108, %v2970, 0.0
      %2992 = vadd.xlane.f32.xlu0 %v2991
      %v2993 = vpop.xlane.xlu0 %2992
      %v2994 = vsel %vm1108, %v2972, 0.0
      %2995 = vadd.xlane.f32.xlu0 %v2994
      %v2996 = vpop.xlane.xlu0 %2995
      %v2997 = vrcp.pop %v2975
      %v2998 = vmul.f32 %v2958, %v2997
      %v2999 = vrcp.pop %v2978
      %v3000 = vmul.f32 %v2960, %v2999
      %v3001 = vrcp.pop %v2981
      %v3002 = vmul.f32 %v2962, %v3001
      %v3003 = vrcp.pop %v2984
      %v3004 = vmul.f32 %v2964, %v3003
      %v3005 = vrcp.pop %v2987
      %v3006 = vmul.f32 %v2966, %v3005
      %v3007 = vrcp.pop %v2990
      %v3008 = vmul.f32 %v2968, %v3007
      %v3009 = vrcp.pop %v2993
      %v3010 = vmul.f32 %v2970, %v3009
      %v3011 = vrcp.pop %v2996
      %v3012 = vmul.f32 %v2972, %v3011
      %v3013 = vpack.c.bf16 %v3000, %v2998
      %v3014 = vpack.c.bf16 %v3004, %v3002
      %v3015 = vpack.c.bf16 %v3008, %v3006
      %v3016 = vpack.c.bf16 %v3012, %v3010
      %v3018 = vsel %vm1108, %v3013, 0
      %3020 = vmatprep.subr.bf16.mxu0 0
      %3021 = vmatpush1.bf16.msra.mxu0 %v2550
      %3022 = vmatprep.subr.bf16.mxu0 0
      %3023 = vmatpush1.bf16.msra.mxu0 0
      %3024 = vmatprep.subr.bf16.mxu0 0
      %3025 = vmatpush1.bf16.msra.mxu0 0
      %3026 = vmatprep.subr.bf16.mxu0 0
      %3027 = vmatpush1.bf16.msra.mxu0 0
      %3028 = vmatprep.subr.bf16.mxu0 0
      %3029 = vmatpush1.bf16.msra.mxu0 0
      %3030 = vmatprep.subr.bf16.mxu0 0
      %3031 = vmatpush1.bf16.msra.mxu0 0
      %3032 = vmatprep.subr.bf16.mxu0 0
      %3033 = vmatpush1.bf16.msra.mxu0 0
      %3034 = vmatprep.subr.bf16.mxu0 0
      %3035 = vmatpush1.bf16.msra.mxu0 0
      %3036 = vmatprep.subr.bf16.mxu0 0
      %3037 = vmatpush1.bf16.msra.mxu0 0
      %3038 = vmatprep.subr.bf16.mxu0 0
      %3039 = vmatpush1.bf16.msra.mxu0 0
      %3040 = vmatprep.subr.bf16.mxu0 0
      %3041 = vmatpush1.bf16.msra.mxu0 0
      %3042 = vmatprep.subr.bf16.mxu0 0
      %3043 = vmatpush1.bf16.msra.mxu0 0
      %3044 = vmatprep.subr.bf16.mxu0 0
      %3045 = vmatpush1.bf16.msra.mxu0 0
      %3046 = vmatprep.subr.bf16.mxu0 0
      %3047 = vmatpush1.bf16.msra.mxu0 0
      %3048 = vmatprep.subr.bf16.mxu0 0
      %3049 = vmatpush1.bf16.msra.mxu0 0
      %3050 = vmatprep.subr.bf16.mxu0 0
      %3051 = vmatpush1.bf16.msra.mxu0 0
      %3052 = vmatprep.mubr.bf16.mxu0 0
      %3053 = vmatmul.mubr.bf16.gmra.mrb[0].mxu0 %v3018
      %v3054 = vpop.f32.mrb[0].mxu0
      %v3055 = vadd.f32 0.0, %v3054
      %v3056 = vpop.f32.mrb[0].mxu0
      %v3057 = vpop.f32.mrb[0].mxu0
      %v3058 = vadd.f32 0.0, %v3057
      %v3059 = vpop.f32.mrb[0].mxu0
      %3060 = vdwg.mxu0
      %v3062 = vsel %vm1108, %v3014, 0
      %3064 = vmatprep.subr.bf16.mxu0 0
      %3065 = vmatpush1.bf16.msra.mxu0 %v2597
      %3066 = vmatprep.subr.bf16.mxu0 0
      %3067 = vmatpush1.bf16.msra.mxu0 0
      %3068 = vmatprep.subr.bf16.mxu0 0
      %3069 = vmatpush1.bf16.msra.mxu0 0
      %3070 = vmatprep.subr.bf16.mxu0 0
      %3071 = vmatpush1.bf16.msra.mxu0 0
      %3072 = vmatprep.subr.bf16.mxu0 0
      %3073 = vmatpush1.bf16.msra.mxu0 0
      %3074 = vmatprep.subr.bf16.mxu0 0
      %3075 = vmatpush1.bf16.msra.mxu0 0
      %3076 = vmatprep.subr.bf16.mxu0 0
      %3077 = vmatpush1.bf16.msra.mxu0 0
      %3078 = vmatprep.subr.bf16.mxu0 0
      %3079 = vmatpush1.bf16.msra.mxu0 0
      %3080 = vmatprep.subr.bf16.mxu0 0
      %3081 = vmatpush1.bf16.msra.mxu0 0
      %3082 = vmatprep.subr.bf16.mxu0 0
      %3083 = vmatpush1.bf16.msra.mxu0 0
      %3084 = vmatprep.subr.bf16.mxu0 0
      %3085 = vmatpush1.bf16.msra.mxu0 0
      %3086 = vmatprep.subr.bf16.mxu0 0
      %3087 = vmatpush1.bf16.msra.mxu0 0
      %3088 = vmatprep.subr.bf16.mxu0 0
      %3089 = vmatpush1.bf16.msra.mxu0 0
      %3090 = vmatprep.subr.bf16.mxu0 0
      %3091 = vmatpush1.bf16.msra.mxu0 0
      %3092 = vmatprep.subr.bf16.mxu0 0
      %3093 = vmatpush1.bf16.msra.mxu0 0
      %3094 = vmatprep.subr.bf16.mxu0 0
      %3095 = vmatpush1.bf16.msra.mxu0 0
      %3096 = vmatprep.mubr.bf16.mxu0 0
      %3097 = vmatmul.mubr.bf16.gmra.mrb[0].mxu0 %v3062
      %v3098 = vpop.f32.mrb[0].mxu0
      %v3099 = vadd.f32 0.0, %v3098
      %v3100 = vpop.f32.mrb[0].mxu0
      %v3101 = vpop.f32.mrb[0].mxu0
      %v3102 = vadd.f32 0.0, %v3101
      %v3103 = vpop.f32.mrb[0].mxu0
      %3104 = vdwg.mxu0
      %v3106 = vsel %vm1108, %v3015, 0
      %3108 = vmatprep.subr.bf16.mxu0 0
      %3109 = vmatpush1.bf16.msra.mxu0 %v2644
      %3110 = vmatprep.subr.bf16.mxu0 0
      %3111 = vmatpush1.bf16.msra.mxu0 0
      %3112 = vmatprep.subr.bf16.mxu0 0
      %3113 = vmatpush1.bf16.msra.mxu0 0
      %3114 = vmatprep.subr.bf16.mxu0 0
      %3115 = vmatpush1.bf16.msra.mxu0 0
      %3116 = vmatprep.subr.bf16.mxu0 0
      %3117 = vmatpush1.bf16.msra.mxu0 0
      %3118 = vmatprep.subr.bf16.mxu0 0
      %3119 = vmatpush1.bf16.msra.mxu0 0
      %3120 = vmatprep.subr.bf16.mxu0 0
      %3121 = vmatpush1.bf16.msra.mxu0 0
      %3122 = vmatprep.subr.bf16.mxu0 0
      %3123 = vmatpush1.bf16.msra.mxu0 0
      %3124 = vmatprep.subr.bf16.mxu0 0
      %3125 = vmatpush1.bf16.msra.mxu0 0
      %3126 = vmatprep.subr.bf16.mxu0 0
      %3127 = vmatpush1.bf16.msra.mxu0 0
      %3128 = vmatprep.subr.bf16.mxu0 0
      %3129 = vmatpush1.bf16.msra.mxu0 0
      %3130 = vmatprep.subr.bf16.mxu0 0
      %3131 = vmatpush1.bf16.msra.mxu0 0
      %3132 = vmatprep.subr.bf16.mxu0 0
      %3133 = vmatpush1.bf16.msra.mxu0 0
      %3134 = vmatprep.subr.bf16.mxu0 0
      %3135 = vmatpush1.bf16.msra.mxu0 0
      %3136 = vmatprep.subr.bf16.mxu0 0
      %3137 = vmatpush1.bf16.msra.mxu0 0
      %3138 = vmatprep.subr.bf16.mxu0 0
      %3139 = vmatpush1.bf16.msra.mxu0 0
      %3140 = vmatprep.mubr.bf16.mxu0 0
      %3141 = vmatmul.mubr.bf16.gmra.mrb[0].mxu0 %v3106
      %v3142 = vpop.f32.mrb[0].mxu0
      %v3143 = vadd.f32 0.0, %v3142
      %v3144 = vpop.f32.mrb[0].mxu0
      %v3145 = vpop.f32.mrb[0].mxu0
      %v3146 = vadd.f32 0.0, %v3145
      %v3147 = vpop.f32.mrb[0].mxu0
      %3148 = vdwg.mxu0
      %v3150 = vsel %vm1108, %v3016, 0
      %3152 = vmatprep.subr.bf16.mxu0 0
      %3153 = vmatpush1.bf16.msra.mxu0 %v2691
      %3154 = vmatprep.subr.bf16.mxu0 0
      %3155 = vmatpush1.bf16.msra.mxu0 0
      %3156 = vmatprep.subr.bf16.mxu0 0
      %3157 = vmatpush1.bf16.msra.mxu0 0
      %3158 = vmatprep.subr.bf16.mxu0 0
      %3159 = vmatpush1.bf16.msra.mxu0 0
      %3160 = vmatprep.subr.bf16.mxu0 0
      %3161 = vmatpush1.bf16.msra.mxu0 0
      %3162 = vmatprep.subr.bf16.mxu0 0
      %3163 = vmatpush1.bf16.msra.mxu0 0
      %3164 = vmatprep.subr.bf16.mxu0 0
      %3165 = vmatpush1.bf16.msra.mxu0 0
      %3166 = vmatprep.subr.bf16.mxu0 0
      %3167 = vmatpush1.bf16.msra.mxu0 0
      %3168 = vmatprep.subr.bf16.mxu0 0
      %3169 = vmatpush1.bf16.msra.mxu0 0
      %3170 = vmatprep.subr.bf16.mxu0 0
      %3171 = vmatpush1.bf16.msra.mxu0 0
      %3172 = vmatprep.subr.bf16.mxu0 0
      %3173 = vmatpush1.bf16.msra.mxu0 0
      %3174 = vmatprep.subr.bf16.mxu0 0
      %3175 = vmatpush1.bf16.msra.mxu0 0
      %3176 = vmatprep.subr.bf16.mxu0 0
      %3177 = vmatpush1.bf16.msra.mxu0 0
      %3178 = vmatprep.subr.bf16.mxu0 0
      %3179 = vmatpush1.bf16.msra.mxu0 0
      %3180 = vmatprep.subr.bf16.mxu0 0
      %3181 = vmatpush1.bf16.msra.mxu0 0
      %3182 = vmatprep.subr.bf16.mxu0 0
      %3183 = vmatpush1.bf16.msra.mxu0 0
      %3184 = vmatprep.mubr.bf16.mxu0 0
      %3185 = vmatmul.mubr.bf16.gmra.mrb[0].mxu0 %v3150
      %v3186 = vpop.f32.mrb[0].mxu0
      %v3187 = vadd.f32 0.0, %v3186
      %v3188 = vpop.f32.mrb[0].mxu0
      %v3189 = vpop.f32.mrb[0].mxu0
      %v3190 = vadd.f32 0.0, %v3189
      %v3191 = vpop.f32.mrb[0].mxu0
      %3192 = vdwg.mxu0
      %3193 = vrot.lane.b32.xlu0 %v2248, 112
      %v3194 = vpop.permute.xlu0 %3193
      %3195 = vrot.lane.b32.xlu0 %v2252, 88
      %v3196 = vpop.permute.xlu0 %3195
      %v3198 = vsel %vm2259, %v3194, 0
      %v3201 = vsel %vm2259, %v3196, 0
      %3203 = vmatprep.subr.bf16.mxu0 0
      %3204 = vmatpush1.bf16.xpose.msra.mxu0 %v3201
      %3205 = vmatprep.subr.bf16.mxu0 0
      %3206 = vmatpush1.bf16.xpose.msra.mxu0 0
      %3207 = vmatprep.subr.bf16.mxu0 0
      %3208 = vmatpush1.bf16.xpose.msra.mxu0 0
      %3209 = vmatprep.subr.bf16.mxu0 0
      %3210 = vmatpush1.bf16.xpose.msra.mxu0 0
      %3211 = vmatprep.subr.bf16.mxu0 0
      %3212 = vmatpush1.bf16.xpose.msra.mxu0 0
      %3213 = vmatprep.subr.bf16.mxu0 0
      %3214 = vmatpush1.bf16.xpose.msra.mxu0 0
      %3215 = vmatprep.subr.bf16.mxu0 0
      %3216 = vmatpush1.bf16.xpose.msra.mxu0 0
      %3217 = vmatprep.subr.bf16.mxu0 0
      %3218 = vmatpush1.bf16.xpose.msra.mxu0 0
      %3219 = vmatprep.subr.bf16.mxu0 0
      %3220 = vmatpush1.bf16.xpose.msra.mxu0 0
      %3221 = vmatprep.subr.bf16.mxu0 0
      %3222 = vmatpush1.bf16.xpose.msra.mxu0 0
      %3223 = vmatprep.subr.bf16.mxu0 0
      %3224 = vmatpush1.bf16.xpose.msra.mxu0 0
      %3225 = vmatprep.subr.bf16.mxu0 0
      %3226 = vmatpush1.bf16.xpose.msra.mxu0 0
      %3227 = vmatprep.subr.bf16.mxu0 0
      %3228 = vmatpush1.bf16.xpose.msra.mxu0 0
      %3229 = vmatprep.subr.bf16.mxu0 0
      %3230 = vmatpush1.bf16.xpose.msra.mxu0 0
      %3231 = vmatprep.subr.bf16.mxu0 0
      %3232 = vmatpush1.bf16.xpose.msra.mxu0 0
      %3233 = vmatprep.subr.bf16.mxu0 0
      %3234 = vmatpush1.bf16.xpose.msra.mxu0 0
      %3235 = vmatprep.mubr.bf16.mxu0 0
      %3236 = vmatmul.mubr.bf16.gmra.mrb[0].mxu0 %v3198
      %v3237 = vpop.f32.mrb[0].mxu0
      %v3238 = vadd.f32 0.0, %v3237
      %v3239 = vpop.f32.mrb[0].mxu0
      %v3240 = vpop.f32.mrb[0].mxu0
      %v3241 = vadd.f32 0.0, %v3240
      %v3242 = vpop.f32.mrb[0].mxu0
      %3243 = vdwg.mxu0
      %3244 = vrot.lane.b32.xlu0 %v2249, 112
      %v3245 = vpop.permute.xlu0 %3244
      %3246 = vrot.lane.b32.xlu0 %v2253, 88
      %v3247 = vpop.permute.xlu0 %3246
      %v3249 = vsel %vm2259, %v3245, 0
      %v3252 = vsel %vm2259, %v3247, 0
      %3254 = vmatprep.subr.bf16.mxu0 0
      %3255 = vmatpush1.bf16.xpose.msra.mxu0 %v3252
      %3256 = vmatprep.subr.bf16.mxu0 0
      %3257 = vmatpush1.bf16.xpose.msra.mxu0 0
      %3258 = vmatprep.subr.bf16.mxu0 0
      %3259 = vmatpush1.bf16.xpose.msra.mxu0 0
      %3260 = vmatprep.subr.bf16.mxu0 0
      %3261 = vmatpush1.bf16.xpose.msra.mxu0 0
      %3262 = vmatprep.subr.bf16.mxu0 0
      %3263 = vmatpush1.bf16.xpose.msra.mxu0 0
      %3264 = vmatprep.subr.bf16.mxu0 0
      %3265 = vmatpush1.bf16.xpose.msra.mxu0 0
      %3266 = vmatprep.subr.bf16.mxu0 0
      %3267 = vmatpush1.bf16.xpose.msra.mxu0 0
      %3268 = vmatprep.subr.bf16.mxu0 0
      %3269 = vmatpush1.bf16.xpose.msra.mxu0 0
      %3270 = vmatprep.subr.bf16.mxu0 0
      %3271 = vmatpush1.bf16.xpose.msra.mxu0 0
      %3272 = vmatprep.subr.bf16.mxu0 0
      %3273 = vmatpush1.bf16.xpose.msra.mxu0 0
      %3274 = vmatprep.subr.bf16.mxu0 0
      %3275 = vmatpush1.bf16.xpose.msra.mxu0 0
      %3276 = vmatprep.subr.bf16.mxu0 0
      %3277 = vmatpush1.bf16.xpose.msra.mxu0 0
      %3278 = vmatprep.subr.bf16.mxu0 0
      %3279 = vmatpush1.bf16.xpose.msra.mxu0 0
      %3280 = vmatprep.subr.bf16.mxu0 0
      %3281 = vmatpush1.bf16.xpose.msra.mxu0 0
      %3282 = vmatprep.subr.bf16.mxu0 0
      %3283 = vmatpush1.bf16.xpose.msra.mxu0 0
      %3284 = vmatprep.subr.bf16.mxu0 0
      %3285 = vmatpush1.bf16.xpose.msra.mxu0 0
      %3286 = vmatprep.mubr.bf16.mxu0 0
      %3287 = vmatmul.mubr.bf16.gmra.mrb[0].mxu0 %v3249
      %v3288 = vpop.f32.mrb[0].mxu0
      %v3289 = vadd.f32 0.0, %v3288
      %v3290 = vpop.f32.mrb[0].mxu0
      %v3291 = vpop.f32.mrb[0].mxu0
      %v3292 = vadd.f32 0.0, %v3291
      %v3293 = vpop.f32.mrb[0].mxu0
      %3294 = vdwg.mxu0
      %3295 = vrot.lane.b32.xlu0 %v2250, 112
      %v3296 = vpop.permute.xlu0 %3295
      %3297 = vrot.lane.b32.xlu0 %v2254, 88
      %v3298 = vpop.permute.xlu0 %3297
      %v3300 = vsel %vm2259, %v3296, 0
      %v3303 = vsel %vm2259, %v3298, 0
      %3305 = vmatprep.subr.bf16.mxu0 0
      %3306 = vmatpush1.bf16.xpose.msra.mxu0 %v3303
      %3307 = vmatprep.subr.bf16.mxu0 0
      %3308 = vmatpush1.bf16.xpose.msra.mxu0 0
      %3309 = vmatprep.subr.bf16.mxu0 0
      %3310 = vmatpush1.bf16.xpose.msra.mxu0 0
      %3311 = vmatprep.subr.bf16.mxu0 0
      %3312 = vmatpush1.bf16.xpose.msra.mxu0 0
      %3313 = vmatprep.subr.bf16.mxu0 0
      %3314 = vmatpush1.bf16.xpose.msra.mxu0 0
      %3315 = vmatprep.subr.bf16.mxu0 0
      %3316 = vmatpush1.bf16.xpose.msra.mxu0 0
      %3317 = vmatprep.subr.bf16.mxu0 0
      %3318 = vmatpush1.bf16.xpose.msra.mxu0 0
      %3319 = vmatprep.subr.bf16.mxu0 0
      %3320 = vmatpush1.bf16.xpose.msra.mxu0 0
      %3321 = vmatprep.subr.bf16.mxu0 0
      %3322 = vmatpush1.bf16.xpose.msra.mxu0 0
      %3323 = vmatprep.subr.bf16.mxu0 0
      %3324 = vmatpush1.bf16.xpose.msra.mxu0 0
      %3325 = vmatprep.subr.bf16.mxu0 0
      %3326 = vmatpush1.bf16.xpose.msra.mxu0 0
      %3327 = vmatprep.subr.bf16.mxu0 0
      %3328 = vmatpush1.bf16.xpose.msra.mxu0 0
      %3329 = vmatprep.subr.bf16.mxu0 0
      %3330 = vmatpush1.bf16.xpose.msra.mxu0 0
      %3331 = vmatprep.subr.bf16.mxu0 0
      %3332 = vmatpush1.bf16.xpose.msra.mxu0 0
      %3333 = vmatprep.subr.bf16.mxu0 0
      %3334 = vmatpush1.bf16.xpose.msra.mxu0 0
      %3335 = vmatprep.subr.bf16.mxu0 0
      %3336 = vmatpush1.bf16.xpose.msra.mxu0 0
      %3337 = vmatprep.mubr.bf16.mxu0 0
      %3338 = vmatmul.mubr.bf16.gmra.mrb[0].mxu0 %v3300
      %v3339 = vpop.f32.mrb[0].mxu0
      %v3340 = vadd.f32 0.0, %v3339
      %v3341 = vpop.f32.mrb[0].mxu0
      %v3342 = vpop.f32.mrb[0].mxu0
      %v3343 = vadd.f32 0.0, %v3342
      %v3344 = vpop.f32.mrb[0].mxu0
      %3345 = vdwg.mxu0
      %3346 = vrot.lane.b32.xlu0 %v2251, 112
      %v3347 = vpop.permute.xlu0 %3346
      %3348 = vrot.lane.b32.xlu0 %v2255, 88
      %v3349 = vpop.permute.xlu0 %3348
      %v3351 = vsel %vm2259, %v3347, 0
      %v3354 = vsel %vm2259, %v3349, 0
      %3356 = vmatprep.subr.bf16.mxu0 0
      %3357 = vmatpush1.bf16.xpose.msra.mxu0 %v3354
      %3358 = vmatprep.subr.bf16.mxu0 0
      %3359 = vmatpush1.bf16.xpose.msra.mxu0 0
      %3360 = vmatprep.subr.bf16.mxu0 0
      %3361 = vmatpush1.bf16.xpose.msra.mxu0 0
      %3362 = vmatprep.subr.bf16.mxu0 0
      %3363 = vmatpush1.bf16.xpose.msra.mxu0 0
      %3364 = vmatprep.subr.bf16.mxu0 0
      %3365 = vmatpush1.bf16.xpose.msra.mxu0 0
      %3366 = vmatprep.subr.bf16.mxu0 0
      %3367 = vmatpush1.bf16.xpose.msra.mxu0 0
      %3368 = vmatprep.subr.bf16.mxu0 0
      %3369 = vmatpush1.bf16.xpose.msra.mxu0 0
      %3370 = vmatprep.subr.bf16.mxu0 0
      %3371 = vmatpush1.bf16.xpose.msra.mxu0 0
      %3372 = vmatprep.subr.bf16.mxu0 0
      %3373 = vmatpush1.bf16.xpose.msra.mxu0 0
      %3374 = vmatprep.subr.bf16.mxu0 0
      %3375 = vmatpush1.bf16.xpose.msra.mxu0 0
      %3376 = vmatprep.subr.bf16.mxu0 0
      %3377 = vmatpush1.bf16.xpose.msra.mxu0 0
      %3378 = vmatprep.subr.bf16.mxu0 0
      %3379 = vmatpush1.bf16.xpose.msra.mxu0 0
      %3380 = vmatprep.subr.bf16.mxu0 0
      %3381 = vmatpush1.bf16.xpose.msra.mxu0 0
      %3382 = vmatprep.subr.bf16.mxu0 0
      %3383 = vmatpush1.bf16.xpose.msra.mxu0 0
      %3384 = vmatprep.subr.bf16.mxu0 0
      %3385 = vmatpush1.bf16.xpose.msra.mxu0 0
      %3386 = vmatprep.subr.bf16.mxu0 0
      %3387 = vmatpush1.bf16.xpose.msra.mxu0 0
      %3388 = vmatprep.mubr.bf16.mxu0 0
      %3389 = vmatmul.mubr.bf16.gmra.mrb[0].mxu0 %v3351
      %v3390 = vpop.f32.mrb[0].mxu0
      %v3391 = vadd.f32 0.0, %v3390
      %v3392 = vpop.f32.mrb[0].mxu0
      %v3393 = vpop.f32.mrb[0].mxu0
      %v3394 = vadd.f32 0.0, %v3393
      %v3395 = vpop.f32.mrb[0].mxu0
      %3396 = vdwg.mxu0
      %v3397 = vsel %vm1108, %v3238, -inf
      %3398 = vmax.xlane.f32.xlu0 %v3397
      %v3399 = vpop.xlane.xlu0 %3398
      %v3400 = vsel %vm1108, %v3241, -inf
      %3401 = vmax.xlane.f32.xlu0 %v3400
      %v3402 = vpop.xlane.xlu0 %3401
      %v3403 = vsel %vm1108, %v3289, -inf
      %3404 = vmax.xlane.f32.xlu0 %v3403
      %v3405 = vpop.xlane.xlu0 %3404
      %v3406 = vsel %vm1108, %v3292, -inf
      %3407 = vmax.xlane.f32.xlu0 %v3406
      %v3408 = vpop.xlane.xlu0 %3407
      %v3409 = vsel %vm1108, %v3340, -inf
      %3410 = vmax.xlane.f32.xlu0 %v3409
      %v3411 = vpop.xlane.xlu0 %3410
      %v3412 = vsel %vm1108, %v3343, -inf
      %3413 = vmax.xlane.f32.xlu0 %v3412
      %v3414 = vpop.xlane.xlu0 %3413
      %v3415 = vsel %vm1108, %v3391, -inf
      %3416 = vmax.xlane.f32.xlu0 %v3415
      %v3417 = vpop.xlane.xlu0 %3416
      %v3418 = vsel %vm1108, %v3394, -inf
      %3419 = vmax.xlane.f32.xlu0 %v3418
      %v3420 = vpop.xlane.xlu0 %3419
      %v3421 = vsub.f32 %v3238, %v3399
      %v3422 = vsub.f32 %v3241, %v3402
      %v3423 = vsub.f32 %v3289, %v3405
      %v3424 = vsub.f32 %v3292, %v3408
      %v3425 = vsub.f32 %v3340, %v3411
      %v3426 = vsub.f32 %v3343, %v3414
      %v3427 = vsub.f32 %v3391, %v3417
      %v3428 = vsub.f32 %v3394, %v3420
      %v3429 = vmul.f32 %v3421, 1.442695
      %v3430 = vpow.pop %v3429
      %v3431 = vmul.f32 %v3422, 1.442695
      %v3432 = vpow.pop %v3431
      %v3433 = vmul.f32 %v3423, 1.442695
      %v3434 = vpow.pop %v3433
      %v3435 = vmul.f32 %v3424, 1.442695
      %v3436 = vpow.pop %v3435
      %v3437 = vmul.f32 %v3425, 1.442695
      %v3438 = vpow.pop %v3437
      %v3439 = vmul.f32 %v3426, 1.442695
      %v3440 = vpow.pop %v3439
      %v3441 = vmul.f32 %v3427, 1.442695
      %v3442 = vpow.pop %v3441
      %v3443 = vmul.f32 %v3428, 1.442695
      %v3444 = vpow.pop %v3443
      %v3445 = vsel %vm1108, %v3430, 0.0
      %3446 = vadd.xlane.f32.xlu0 %v3445
      %v3447 = vpop.xlane.xlu0 %3446
      %v3448 = vsel %vm1108, %v3432, 0.0
      %3449 = vadd.xlane.f32.xlu0 %v3448
      %v3450 = vpop.xlane.xlu0 %3449
      %v3451 = vsel %vm1108, %v3434, 0.0
      %3452 = vadd.xlane.f32.xlu0 %v3451
      %v3453 = vpop.xlane.xlu0 %3452
      %v3454 = vsel %vm1108, %v3436, 0.0
      %3455 = vadd.xlane.f32.xlu0 %v3454
      %v3456 = vpop.xlane.xlu0 %3455
      %v3457 = vsel %vm1108, %v3438, 0.0
      %3458 = vadd.xlane.f32.xlu0 %v3457
      %v3459 = vpop.xlane.xlu0 %3458
      %v3460 = vsel %vm1108, %v3440, 0.0
      %3461 = vadd.xlane.f32.xlu0 %v3460
      %v3462 = vpop.xlane.xlu0 %3461
      %v3463 = vsel %vm1108, %v3442, 0.0
      %3464 = vadd.xlane.f32.xlu0 %v3463
      %v3465 = vpop.xlane.xlu0 %3464
      %v3466 = vsel %vm1108, %v3444, 0.0
      %3467 = vadd.xlane.f32.xlu0 %v3466
      %v3468 = vpop.xlane.xlu0 %3467
      %v3469 = vrcp.pop %v3447
      %v3470 = vmul.f32 %v3430, %v3469
      %v3471 = vrcp.pop %v3450
      %v3472 = vmul.f32 %v3432, %v3471
      %v3473 = vrcp.pop %v3453
      %v3474 = vmul.f32 %v3434, %v3473
      %v3475 = vrcp.pop %v3456
      %v3476 = vmul.f32 %v3436, %v3475
      %v3477 = vrcp.pop %v3459
      %v3478 = vmul.f32 %v3438, %v3477
      %v3479 = vrcp.pop %v3462
      %v3480 = vmul.f32 %v3440, %v3479
      %v3481 = vrcp.pop %v3465
      %v3482 = vmul.f32 %v3442, %v3481
      %v3483 = vrcp.pop %v3468
      %v3484 = vmul.f32 %v3444, %v3483
      %v3485 = vpack.c.bf16 %v3472, %v3470
      %v3486 = vpack.c.bf16 %v3476, %v3474
      %v3487 = vpack.c.bf16 %v3480, %v3478
      %v3488 = vpack.c.bf16 %v3484, %v3482
      %3489 = vrot.lane.b32.xlu0 %v2252, 72
      %v3490 = vpop.permute.xlu0 %3489
      %v3493 = vsel %vm1108, %v3485, 0
      %3495 = vmatprep.subr.bf16.mxu0 0
      %3496 = vmatpush1.bf16.msra.mxu0 %v3490
      %3497 = vmatprep.subr.bf16.mxu0 0
      %3498 = vmatpush1.bf16.msra.mxu0 0
      %3499 = vmatprep.subr.bf16.mxu0 0
      %3500 = vmatpush1.bf16.msra.mxu0 0
      %3501 = vmatprep.subr.bf16.mxu0 0
      %3502 = vmatpush1.bf16.msra.mxu0 0
      %3503 = vmatprep.subr.bf16.mxu0 0
      %3504 = vmatpush1.bf16.msra.mxu0 0
      %3505 = vmatprep.subr.bf16.mxu0 0
      %3506 = vmatpush1.bf16.msra.mxu0 0
      %3507 = vmatprep.subr.bf16.mxu0 0
      %3508 = vmatpush1.bf16.msra.mxu0 0
      %3509 = vmatprep.subr.bf16.mxu0 0
      %3510 = vmatpush1.bf16.msra.mxu0 0
      %3511 = vmatprep.subr.bf16.mxu0 0
      %3512 = vmatpush1.bf16.msra.mxu0 0
      %3513 = vmatprep.subr.bf16.mxu0 0
      %3514 = vmatpush1.bf16.msra.mxu0 0
      %3515 = vmatprep.subr.bf16.mxu0 0
      %3516 = vmatpush1.bf16.msra.mxu0 0
      %3517 = vmatprep.subr.bf16.mxu0 0
      %3518 = vmatpush1.bf16.msra.mxu0 0
      %3519 = vmatprep.subr.bf16.mxu0 0
      %3520 = vmatpush1.bf16.msra.mxu0 0
      %3521 = vmatprep.subr.bf16.mxu0 0
      %3522 = vmatpush1.bf16.msra.mxu0 0
      %3523 = vmatprep.subr.bf16.mxu0 0
      %3524 = vmatpush1.bf16.msra.mxu0 0
      %3525 = vmatprep.subr.bf16.mxu0 0
      %3526 = vmatpush1.bf16.msra.mxu0 0
      %3527 = vmatprep.mubr.bf16.mxu0 0
      %3528 = vmatmul.mubr.bf16.gmra.mrb[0].mxu0 %v3493
      %v3529 = vpop.f32.mrb[0].mxu0
      %v3530 = vadd.f32 0.0, %v3529
      %v3531 = vpop.f32.mrb[0].mxu0
      %v3532 = vpop.f32.mrb[0].mxu0
      %v3533 = vadd.f32 0.0, %v3532
      %v3534 = vpop.f32.mrb[0].mxu0
      %3535 = vdwg.mxu0
      %3536 = vrot.lane.b32.xlu0 %v2253, 72
      %v3537 = vpop.permute.xlu0 %3536
      %v3540 = vsel %vm1108, %v3486, 0
      %3542 = vmatprep.subr.bf16.mxu0 0
      %3543 = vmatpush1.bf16.msra.mxu0 %v3537
      %3544 = vmatprep.subr.bf16.mxu0 0
      %3545 = vmatpush1.bf16.msra.mxu0 0
      %3546 = vmatprep.subr.bf16.mxu0 0
      %3547 = vmatpush1.bf16.msra.mxu0 0
      %3548 = vmatprep.subr.bf16.mxu0 0
      %3549 = vmatpush1.bf16.msra.mxu0 0
      %3550 = vmatprep.subr.bf16.mxu0 0
      %3551 = vmatpush1.bf16.msra.mxu0 0
      %3552 = vmatprep.subr.bf16.mxu0 0
      %3553 = vmatpush1.bf16.msra.mxu0 0
      %3554 = vmatprep.subr.bf16.mxu0 0
      %3555 = vmatpush1.bf16.msra.mxu0 0
      %3556 = vmatprep.subr.bf16.mxu0 0
      %3557 = vmatpush1.bf16.msra.mxu0 0
      %3558 = vmatprep.subr.bf16.mxu0 0
      %3559 = vmatpush1.bf16.msra.mxu0 0
      %3560 = vmatprep.subr.bf16.mxu0 0
      %3561 = vmatpush1.bf16.msra.mxu0 0
      %3562 = vmatprep.subr.bf16.mxu0 0
      %3563 = vmatpush1.bf16.msra.mxu0 0
      %3564 = vmatprep.subr.bf16.mxu0 0
      %3565 = vmatpush1.bf16.msra.mxu0 0
      %3566 = vmatprep.subr.bf16.mxu0 0
      %3567 = vmatpush1.bf16.msra.mxu0 0
      %3568 = vmatprep.subr.bf16.mxu0 0
      %3569 = vmatpush1.bf16.msra.mxu0 0
      %3570 = vmatprep.subr.bf16.mxu0 0
      %3571 = vmatpush1.bf16.msra.mxu0 0
      %3572 = vmatprep.subr.bf16.mxu0 0
      %3573 = vmatpush1.bf16.msra.mxu0 0
      %3574 = vmatprep.mubr.bf16.mxu0 0
      %3575 = vmatmul.mubr.bf16.gmra.mrb[0].mxu0 %v3540
      %v3576 = vpop.f32.mrb[0].mxu0
      %v3577 = vadd.f32 0.0, %v3576
      %v3578 = vpop.f32.mrb[0].mxu0
      %v3579 = vpop.f32.mrb[0].mxu0
      %v3580 = vadd.f32 0.0, %v3579
      %v3581 = vpop.f32.mrb[0].mxu0
      %3582 = vdwg.mxu0
      %3583 = vrot.lane.b32.xlu0 %v2254, 72
      %v3584 = vpop.permute.xlu0 %3583
      %v3587 = vsel %vm1108, %v3487, 0
      %3589 = vmatprep.subr.bf16.mxu0 0
      %3590 = vmatpush1.bf16.msra.mxu0 %v3584
      %3591 = vmatprep.subr.bf16.mxu0 0
      %3592 = vmatpush1.bf16.msra.mxu0 0
      %3593 = vmatprep.subr.bf16.mxu0 0
      %3594 = vmatpush1.bf16.msra.mxu0 0
      %3595 = vmatprep.subr.bf16.mxu0 0
      %3596 = vmatpush1.bf16.msra.mxu0 0
      %3597 = vmatprep.subr.bf16.mxu0 0
      %3598 = vmatpush1.bf16.msra.mxu0 0
      %3599 = vmatprep.subr.bf16.mxu0 0
      %3600 = vmatpush1.bf16.msra.mxu0 0
      %3601 = vmatprep.subr.bf16.mxu0 0
      %3602 = vmatpush1.bf16.msra.mxu0 0
      %3603 = vmatprep.subr.bf16.mxu0 0
      %3604 = vmatpush1.bf16.msra.mxu0 0
      %3605 = vmatprep.subr.bf16.mxu0 0
      %3606 = vmatpush1.bf16.msra.mxu0 0
      %3607 = vmatprep.subr.bf16.mxu0 0
      %3608 = vmatpush1.bf16.msra.mxu0 0
      %3609 = vmatprep.subr.bf16.mxu0 0
      %3610 = vmatpush1.bf16.msra.mxu0 0
      %3611 = vmatprep.subr.bf16.mxu0 0
      %3612 = vmatpush1.bf16.msra.mxu0 0
      %3613 = vmatprep.subr.bf16.mxu0 0
      %3614 = vmatpush1.bf16.msra.mxu0 0
      %3615 = vmatprep.subr.bf16.mxu0 0
      %3616 = vmatpush1.bf16.msra.mxu0 0
      %3617 = vmatprep.subr.bf16.mxu0 0
      %3618 = vmatpush1.bf16.msra.mxu0 0
      %3619 = vmatprep.subr.bf16.mxu0 0
      %3620 = vmatpush1.bf16.msra.mxu0 0
      %3621 = vmatprep.mubr.bf16.mxu0 0
      %3622 = vmatmul.mubr.bf16.gmra.mrb[0].mxu0 %v3587
      %v3623 = vpop.f32.mrb[0].mxu0
      %v3624 = vadd.f32 0.0, %v3623
      %v3625 = vpop.f32.mrb[0].mxu0
      %v3626 = vpop.f32.mrb[0].mxu0
      %v3627 = vadd.f32 0.0, %v3626
      %v3628 = vpop.f32.mrb[0].mxu0
      %3629 = vdwg.mxu0
      %3630 = vrot.lane.b32.xlu0 %v2255, 72
      %v3631 = vpop.permute.xlu0 %3630
      %v3634 = vsel %vm1108, %v3488, 0
      %3636 = vmatprep.subr.bf16.mxu0 0
      %3637 = vmatpush1.bf16.msra.mxu0 %v3631
      %3638 = vmatprep.subr.bf16.mxu0 0
      %3639 = vmatpush1.bf16.msra.mxu0 0
      %3640 = vmatprep.subr.bf16.mxu0 0
      %3641 = vmatpush1.bf16.msra.mxu0 0
      %3642 = vmatprep.subr.bf16.mxu0 0
      %3643 = vmatpush1.bf16.msra.mxu0 0
      %3644 = vmatprep.subr.bf16.mxu0 0
      %3645 = vmatpush1.bf16.msra.mxu0 0
      %3646 = vmatprep.subr.bf16.mxu0 0
      %3647 = vmatpush1.bf16.msra.mxu0 0
      %3648 = vmatprep.subr.bf16.mxu0 0
      %3649 = vmatpush1.bf16.msra.mxu0 0
      %3650 = vmatprep.subr.bf16.mxu0 0
      %3651 = vmatpush1.bf16.msra.mxu0 0
      %3652 = vmatprep.subr.bf16.mxu0 0
      %3653 = vmatpush1.bf16.msra.mxu0 0
      %3654 = vmatprep.subr.bf16.mxu0 0
      %3655 = vmatpush1.bf16.msra.mxu0 0
      %3656 = vmatprep.subr.bf16.mxu0 0
      %3657 = vmatpush1.bf16.msra.mxu0 0
      %3658 = vmatprep.subr.bf16.mxu0 0
      %3659 = vmatpush1.bf16.msra.mxu0 0
      %3660 = vmatprep.subr.bf16.mxu0 0
      %3661 = vmatpush1.bf16.msra.mxu0 0
      %3662 = vmatprep.subr.bf16.mxu0 0
      %3663 = vmatpush1.bf16.msra.mxu0 0
      %3664 = vmatprep.subr.bf16.mxu0 0
      %3665 = vmatpush1.bf16.msra.mxu0 0
      %3666 = vmatprep.subr.bf16.mxu0 0
      %3667 = vmatpush1.bf16.msra.mxu0 0
      %3668 = vmatprep.mubr.bf16.mxu0 0
      %3669 = vmatmul.mubr.bf16.gmra.mrb[0].mxu0 %v3634
      %v3670 = vpop.f32.mrb[0].mxu0
      %v3671 = vadd.f32 0.0, %v3670
      %v3672 = vpop.f32.mrb[0].mxu0
      %v3673 = vpop.f32.mrb[0].mxu0
      %v3674 = vadd.f32 0.0, %v3673
      %v3675 = vpop.f32.mrb[0].mxu0
      %3676 = vdwg.mxu0
      %3677 = vrot.lane.b32.xlu0 %v2248, 104
      %v3678 = vpop.permute.xlu0 %3677
      %v3680 = vsel %vm2259, %v3678, 0
      %3682 = vmatprep.subr.bf16.mxu0 0
      %3683 = vmatpush1.bf16.xpose.msra.mxu0 %v3201
      %3684 = vmatprep.subr.bf16.mxu0 0
      %3685 = vmatpush1.bf16.xpose.msra.mxu0 0
      %3686 = vmatprep.subr.bf16.mxu0 0
      %3687 = vmatpush1.bf16.xpose.msra.mxu0 0
      %3688 = vmatprep.subr.bf16.mxu0 0
      %3689 = vmatpush1.bf16.xpose.msra.mxu0 0
      %3690 = vmatprep.subr.bf16.mxu0 0
      %3691 = vmatpush1.bf16.xpose.msra.mxu0 0
      %3692 = vmatprep.subr.bf16.mxu0 0
      %3693 = vmatpush1.bf16.xpose.msra.mxu0 0
      %3694 = vmatprep.subr.bf16.mxu0 0
      %3695 = vmatpush1.bf16.xpose.msra.mxu0 0
      %3696 = vmatprep.subr.bf16.mxu0 0
      %3697 = vmatpush1.bf16.xpose.msra.mxu0 0
      %3698 = vmatprep.subr.bf16.mxu0 0
      %3699 = vmatpush1.bf16.xpose.msra.mxu0 0
      %3700 = vmatprep.subr.bf16.mxu0 0
      %3701 = vmatpush1.bf16.xpose.msra.mxu0 0
      %3702 = vmatprep.subr.bf16.mxu0 0
      %3703 = vmatpush1.bf16.xpose.msra.mxu0 0
      %3704 = vmatprep.subr.bf16.mxu0 0
      %3705 = vmatpush1.bf16.xpose.msra.mxu0 0
      %3706 = vmatprep.subr.bf16.mxu0 0
      %3707 = vmatpush1.bf16.xpose.msra.mxu0 0
      %3708 = vmatprep.subr.bf16.mxu0 0
      %3709 = vmatpush1.bf16.xpose.msra.mxu0 0
      %3710 = vmatprep.subr.bf16.mxu0 0
      %3711 = vmatpush1.bf16.xpose.msra.mxu0 0
      %3712 = vmatprep.subr.bf16.mxu0 0
      %3713 = vmatpush1.bf16.xpose.msra.mxu0 0
      %3714 = vmatprep.mubr.bf16.mxu0 0
      %3715 = vmatmul.mubr.bf16.gmra.mrb[0].mxu0 %v3680
      %v3716 = vpop.f32.mrb[0].mxu0
      %v3717 = vadd.f32 0.0, %v3716
      %v3718 = vpop.f32.mrb[0].mxu0
      %v3719 = vpop.f32.mrb[0].mxu0
      %v3720 = vadd.f32 0.0, %v3719
      %v3721 = vpop.f32.mrb[0].mxu0
      %3722 = vdwg.mxu0
      %3723 = vrot.lane.b32.xlu0 %v2249, 104
      %v3724 = vpop.permute.xlu0 %3723
      %v3726 = vsel %vm2259, %v3724, 0
      %3728 = vmatprep.subr.bf16.mxu0 0
      %3729 = vmatpush1.bf16.xpose.msra.mxu0 %v3252
      %3730 = vmatprep.subr.bf16.mxu0 0
      %3731 = vmatpush1.bf16.xpose.msra.mxu0 0
      %3732 = vmatprep.subr.bf16.mxu0 0
      %3733 = vmatpush1.bf16.xpose.msra.mxu0 0
      %3734 = vmatprep.subr.bf16.mxu0 0
      %3735 = vmatpush1.bf16.xpose.msra.mxu0 0
      %3736 = vmatprep.subr.bf16.mxu0 0
      %3737 = vmatpush1.bf16.xpose.msra.mxu0 0
      %3738 = vmatprep.subr.bf16.mxu0 0
      %3739 = vmatpush1.bf16.xpose.msra.mxu0 0
      %3740 = vmatprep.subr.bf16.mxu0 0
      %3741 = vmatpush1.bf16.xpose.msra.mxu0 0
      %3742 = vmatprep.subr.bf16.mxu0 0
      %3743 = vmatpush1.bf16.xpose.msra.mxu0 0
      %3744 = vmatprep.subr.bf16.mxu0 0
      %3745 = vmatpush1.bf16.xpose.msra.mxu0 0
      %3746 = vmatprep.subr.bf16.mxu0 0
      %3747 = vmatpush1.bf16.xpose.msra.mxu0 0
      %3748 = vmatprep.subr.bf16.mxu0 0
      %3749 = vmatpush1.bf16.xpose.msra.mxu0 0
      %3750 = vmatprep.subr.bf16.mxu0 0
      %3751 = vmatpush1.bf16.xpose.msra.mxu0 0
      %3752 = vmatprep.subr.bf16.mxu0 0
      %3753 = vmatpush1.bf16.xpose.msra.mxu0 0
      %3754 = vmatprep.subr.bf16.mxu0 0
      %3755 = vmatpush1.bf16.xpose.msra.mxu0 0
      %3756 = vmatprep.subr.bf16.mxu0 0
      %3757 = vmatpush1.bf16.xpose.msra.mxu0 0
      %3758 = vmatprep.subr.bf16.mxu0 0
      %3759 = vmatpush1.bf16.xpose.msra.mxu0 0
      %3760 = vmatprep.mubr.bf16.mxu0 0
      %3761 = vmatmul.mubr.bf16.gmra.mrb[0].mxu0 %v3726
      %v3762 = vpop.f32.mrb[0].mxu0
      %v3763 = vadd.f32 0.0, %v3762
      %v3764 = vpop.f32.mrb[0].mxu0
      %v3765 = vpop.f32.mrb[0].mxu0
      %v3766 = vadd.f32 0.0, %v3765
      %v3767 = vpop.f32.mrb[0].mxu0
      %3768 = vdwg.mxu0
      %3769 = vrot.lane.b32.xlu0 %v2250, 104
      %v3770 = vpop.permute.xlu0 %3769
      %v3772 = vsel %vm2259, %v3770, 0
      %3774 = vmatprep.subr.bf16.mxu0 0
      %3775 = vmatpush1.bf16.xpose.msra.mxu0 %v3303
      %3776 = vmatprep.subr.bf16.mxu0 0
      %3777 = vmatpush1.bf16.xpose.msra.mxu0 0
      %3778 = vmatprep.subr.bf16.mxu0 0
      %3779 = vmatpush1.bf16.xpose.msra.mxu0 0
      %3780 = vmatprep.subr.bf16.mxu0 0
      %3781 = vmatpush1.bf16.xpose.msra.mxu0 0
      %3782 = vmatprep.subr.bf16.mxu0 0
      %3783 = vmatpush1.bf16.xpose.msra.mxu0 0
      %3784 = vmatprep.subr.bf16.mxu0 0
      %3785 = vmatpush1.bf16.xpose.msra.mxu0 0
      %3786 = vmatprep.subr.bf16.mxu0 0
      %3787 = vmatpush1.bf16.xpose.msra.mxu0 0
      %3788 = vmatprep.subr.bf16.mxu0 0
      %3789 = vmatpush1.bf16.xpose.msra.mxu0 0
      %3790 = vmatprep.subr.bf16.mxu0 0
      %3791 = vmatpush1.bf16.xpose.msra.mxu0 0
      %3792 = vmatprep.subr.bf16.mxu0 0
      %3793 = vmatpush1.bf16.xpose.msra.mxu0 0
      %3794 = vmatprep.subr.bf16.mxu0 0
      %3795 = vmatpush1.bf16.xpose.msra.mxu0 0
      %3796 = vmatprep.subr.bf16.mxu0 0
      %3797 = vmatpush1.bf16.xpose.msra.mxu0 0
      %3798 = vmatprep.subr.bf16.mxu0 0
      %3799 = vmatpush1.bf16.xpose.msra.mxu0 0
      %3800 = vmatprep.subr.bf16.mxu0 0
      %3801 = vmatpush1.bf16.xpose.msra.mxu0 0
      %3802 = vmatprep.subr.bf16.mxu0 0
      %3803 = vmatpush1.bf16.xpose.msra.mxu0 0
      %3804 = vmatprep.subr.bf16.mxu0 0
      %3805 = vmatpush1.bf16.xpose.msra.mxu0 0
      %3806 = vmatprep.mubr.bf16.mxu0 0
      %3807 = vmatmul.mubr.bf16.gmra.mrb[0].mxu0 %v3772
      %v3808 = vpop.f32.mrb[0].mxu0
      %v3809 = vadd.f32 0.0, %v3808
      %v3810 = vpop.f32.mrb[0].mxu0
      %v3811 = vpop.f32.mrb[0].mxu0
      %v3812 = vadd.f32 0.0, %v3811
      %v3813 = vpop.f32.mrb[0].mxu0
      %3814 = vdwg.mxu0
      %3815 = vrot.lane.b32.xlu0 %v2251, 104
      %v3816 = vpop.permute.xlu0 %3815
      %v3818 = vsel %vm2259, %v3816, 0
      %3820 = vmatprep.subr.bf16.mxu0 0
      %3821 = vmatpush1.bf16.xpose.msra.mxu0 %v3354
      %3822 = vmatprep.subr.bf16.mxu0 0
      %3823 = vmatpush1.bf16.xpose.msra.mxu0 0
      %3824 = vmatprep.subr.bf16.mxu0 0
      %3825 = vmatpush1.bf16.xpose.msra.mxu0 0
      %3826 = vmatprep.subr.bf16.mxu0 0
      %3827 = vmatpush1.bf16.xpose.msra.mxu0 0
      %3828 = vmatprep.subr.bf16.mxu0 0
      %3829 = vmatpush1.bf16.xpose.msra.mxu0 0
      %3830 = vmatprep.subr.bf16.mxu0 0
      %3831 = vmatpush1.bf16.xpose.msra.mxu0 0
      %3832 = vmatprep.subr.bf16.mxu0 0
      %3833 = vmatpush1.bf16.xpose.msra.mxu0 0
      %3834 = vmatprep.subr.bf16.mxu0 0
      %3835 = vmatpush1.bf16.xpose.msra.mxu0 0
      %3836 = vmatprep.subr.bf16.mxu0 0
      %3837 = vmatpush1.bf16.xpose.msra.mxu0 0
      %3838 = vmatprep.subr.bf16.mxu0 0
      %3839 = vmatpush1.bf16.xpose.msra.mxu0 0
      %3840 = vmatprep.subr.bf16.mxu0 0
      %3841 = vmatpush1.bf16.xpose.msra.mxu0 0
      %3842 = vmatprep.subr.bf16.mxu0 0
      %3843 = vmatpush1.bf16.xpose.msra.mxu0 0
      %3844 = vmatprep.subr.bf16.mxu0 0
      %3845 = vmatpush1.bf16.xpose.msra.mxu0 0
      %3846 = vmatprep.subr.bf16.mxu0 0
      %3847 = vmatpush1.bf16.xpose.msra.mxu0 0
      %3848 = vmatprep.subr.bf16.mxu0 0
      %3849 = vmatpush1.bf16.xpose.msra.mxu0 0
      %3850 = vmatprep.subr.bf16.mxu0 0
      %3851 = vmatpush1.bf16.xpose.msra.mxu0 0
      %3852 = vmatprep.mubr.bf16.mxu0 0
      %3853 = vmatmul.mubr.bf16.gmra.mrb[0].mxu0 %v3818
      %v3854 = vpop.f32.mrb[0].mxu0
      %v3855 = vadd.f32 0.0, %v3854
      %v3856 = vpop.f32.mrb[0].mxu0
      %v3857 = vpop.f32.mrb[0].mxu0
      %v3858 = vadd.f32 0.0, %v3857
      %v3859 = vpop.f32.mrb[0].mxu0
      %3860 = vdwg.mxu0
      %v3861 = vsel %vm1108, %v3717, -inf
      %3862 = vmax.xlane.f32.xlu0 %v3861
      %v3863 = vpop.xlane.xlu0 %3862
      %v3864 = vsel %vm1108, %v3720, -inf
      %3865 = vmax.xlane.f32.xlu0 %v3864
      %v3866 = vpop.xlane.xlu0 %3865
      %v3867 = vsel %vm1108, %v3763, -inf
      %3868 = vmax.xlane.f32.xlu0 %v3867
      %v3869 = vpop.xlane.xlu0 %3868
      %v3870 = vsel %vm1108, %v3766, -inf
      %3871 = vmax.xlane.f32.xlu0 %v3870
      %v3872 = vpop.xlane.xlu0 %3871
      %v3873 = vsel %vm1108, %v3809, -inf
      %3874 = vmax.xlane.f32.xlu0 %v3873
      %v3875 = vpop.xlane.xlu0 %3874
      %v3876 = vsel %vm1108, %v3812, -inf
      %3877 = vmax.xlane.f32.xlu0 %v3876
      %v3878 = vpop.xlane.xlu0 %3877
      %v3879 = vsel %vm1108, %v3855, -inf
      %3880 = vmax.xlane.f32.xlu0 %v3879
      %v3881 = vpop.xlane.xlu0 %3880
      %v3882 = vsel %vm1108, %v3858, -inf
      %3883 = vmax.xlane.f32.xlu0 %v3882
      %v3884 = vpop.xlane.xlu0 %3883
      %v3885 = vsub.f32 %v3717, %v3863
      %v3886 = vsub.f32 %v3720, %v3866
      %v3887 = vsub.f32 %v3763, %v3869
      %v3888 = vsub.f32 %v3766, %v3872
      %v3889 = vsub.f32 %v3809, %v3875
      %v3890 = vsub.f32 %v3812, %v3878
      %v3891 = vsub.f32 %v3855, %v3881
      %v3892 = vsub.f32 %v3858, %v3884
      %v3893 = vmul.f32 %v3885, 1.442695
      %v3894 = vpow.pop %v3893
      %v3895 = vmul.f32 %v3886, 1.442695
      %v3896 = vpow.pop %v3895
      %v3897 = vmul.f32 %v3887, 1.442695
      %v3898 = vpow.pop %v3897
      %v3899 = vmul.f32 %v3888, 1.442695
      %v3900 = vpow.pop %v3899
      %v3901 = vmul.f32 %v3889, 1.442695
      %v3902 = vpow.pop %v3901
      %v3903 = vmul.f32 %v3890, 1.442695
      %v3904 = vpow.pop %v3903
      %v3905 = vmul.f32 %v3891, 1.442695
      %v3906 = vpow.pop %v3905
      %v3907 = vmul.f32 %v3892, 1.442695
      %v3908 = vpow.pop %v3907
      %v3909 = vsel %vm1108, %v3894, 0.0
      %3910 = vadd.xlane.f32.xlu0 %v3909
      %v3911 = vpop.xlane.xlu0 %3910
      %v3912 = vsel %vm1108, %v3896, 0.0
      %3913 = vadd.xlane.f32.xlu0 %v3912
      %v3914 = vpop.xlane.xlu0 %3913
      %v3915 = vsel %vm1108, %v3898, 0.0
      %3916 = vadd.xlane.f32.xlu0 %v3915
      %v3917 = vpop.xlane.xlu0 %3916
      %v3918 = vsel %vm1108, %v3900, 0.0
      %3919 = vadd.xlane.f32.xlu0 %v3918
      %v3920 = vpop.xlane.xlu0 %3919
      %v3921 = vsel %vm1108, %v3902, 0.0
      %3922 = vadd.xlane.f32.xlu0 %v3921
      %v3923 = vpop.xlane.xlu0 %3922
      %v3924 = vsel %vm1108, %v3904, 0.0
      %3925 = vadd.xlane.f32.xlu0 %v3924
      %v3926 = vpop.xlane.xlu0 %3925
      %v3927 = vsel %vm1108, %v3906, 0.0
      %3928 = vadd.xlane.f32.xlu0 %v3927
      %v3929 = vpop.xlane.xlu0 %3928
      %v3930 = vsel %vm1108, %v3908, 0.0
      %3931 = vadd.xlane.f32.xlu0 %v3930
      %v3932 = vpop.xlane.xlu0 %3931
      %v3933 = vrcp.pop %v3911
      %v3934 = vmul.f32 %v3894, %v3933
      %v3935 = vrcp.pop %v3914
      %v3936 = vmul.f32 %v3896, %v3935
      %v3937 = vrcp.pop %v3917
      %v3938 = vmul.f32 %v3898, %v3937
      %v3939 = vrcp.pop %v3920
      %v3940 = vmul.f32 %v3900, %v3939
      %v3941 = vrcp.pop %v3923
      %v3942 = vmul.f32 %v3902, %v3941
      %v3943 = vrcp.pop %v3926
      %v3944 = vmul.f32 %v3904, %v3943
      %v3945 = vrcp.pop %v3929
      %v3946 = vmul.f32 %v3906, %v3945
      %v3947 = vrcp.pop %v3932
      %v3948 = vmul.f32 %v3908, %v3947
      %v3949 = vpack.c.bf16 %v3936, %v3934
      %v3950 = vpack.c.bf16 %v3940, %v3938
      %v3951 = vpack.c.bf16 %v3944, %v3942
      %v3952 = vpack.c.bf16 %v3948, %v3946
      %v3954 = vsel %vm1108, %v3949, 0
      %3956 = vmatprep.subr.bf16.mxu0 0
      %3957 = vmatpush1.bf16.msra.mxu0 %v3490
      %3958 = vmatprep.subr.bf16.mxu0 0
      %3959 = vmatpush1.bf16.msra.mxu0 0
      %3960 = vmatprep.subr.bf16.mxu0 0
      %3961 = vmatpush1.bf16.msra.mxu0 0
      %3962 = vmatprep.subr.bf16.mxu0 0
      %3963 = vmatpush1.bf16.msra.mxu0 0
      %3964 = vmatprep.subr.bf16.mxu0 0
      %3965 = vmatpush1.bf16.msra.mxu0 0
      %3966 = vmatprep.subr.bf16.mxu0 0
      %3967 = vmatpush1.bf16.msra.mxu0 0
      %3968 = vmatprep.subr.bf16.mxu0 0
      %3969 = vmatpush1.bf16.msra.mxu0 0
      %3970 = vmatprep.subr.bf16.mxu0 0
      %3971 = vmatpush1.bf16.msra.mxu0 0
      %3972 = vmatprep.subr.bf16.mxu0 0
      %3973 = vmatpush1.bf16.msra.mxu0 0
      %3974 = vmatprep.subr.bf16.mxu0 0
      %3975 = vmatpush1.bf16.msra.mxu0 0
      %3976 = vmatprep.subr.bf16.mxu0 0
      %3977 = vmatpush1.bf16.msra.mxu0 0
      %3978 = vmatprep.subr.bf16.mxu0 0
      %3979 = vmatpush1.bf16.msra.mxu0 0
      %3980 = vmatprep.subr.bf16.mxu0 0
      %3981 = vmatpush1.bf16.msra.mxu0 0
      %3982 = vmatprep.subr.bf16.mxu0 0
      %3983 = vmatpush1.bf16.msra.mxu0 0
      %3984 = vmatprep.subr.bf16.mxu0 0
      %3985 = vmatpush1.bf16.msra.mxu0 0
      %3986 = vmatprep.subr.bf16.mxu0 0
      %3987 = vmatpush1.bf16.msra.mxu0 0
      %3988 = vmatprep.mubr.bf16.mxu0 0
      %3989 = vmatmul.mubr.bf16.gmra.mrb[0].mxu0 %v3954
      %v3990 = vpop.f32.mrb[0].mxu0
      %v3991 = vadd.f32 0.0, %v3990
      %v3992 = vpop.f32.mrb[0].mxu0
      %v3993 = vpop.f32.mrb[0].mxu0
      %v3994 = vadd.f32 0.0, %v3993
      %v3995 = vpop.f32.mrb[0].mxu0
      %3996 = vdwg.mxu0
      %v3998 = vsel %vm1108, %v3950, 0
      %4000 = vmatprep.subr.bf16.mxu0 0
      %4001 = vmatpush1.bf16.msra.mxu0 %v3537
      %4002 = vmatprep.subr.bf16.mxu0 0
      %4003 = vmatpush1.bf16.msra.mxu0 0
      %4004 = vmatprep.subr.bf16.mxu0 0
      %4005 = vmatpush1.bf16.msra.mxu0 0
      %4006 = vmatprep.subr.bf16.mxu0 0
      %4007 = vmatpush1.bf16.msra.mxu0 0
      %4008 = vmatprep.subr.bf16.mxu0 0
      %4009 = vmatpush1.bf16.msra.mxu0 0
      %4010 = vmatprep.subr.bf16.mxu0 0
      %4011 = vmatpush1.bf16.msra.mxu0 0
      %4012 = vmatprep.subr.bf16.mxu0 0
      %4013 = vmatpush1.bf16.msra.mxu0 0
      %4014 = vmatprep.subr.bf16.mxu0 0
      %4015 = vmatpush1.bf16.msra.mxu0 0
      %4016 = vmatprep.subr.bf16.mxu0 0
      %4017 = vmatpush1.bf16.msra.mxu0 0
      %4018 = vmatprep.subr.bf16.mxu0 0
      %4019 = vmatpush1.bf16.msra.mxu0 0
      %4020 = vmatprep.subr.bf16.mxu0 0
      %4021 = vmatpush1.bf16.msra.mxu0 0
      %4022 = vmatprep.subr.bf16.mxu0 0
      %4023 = vmatpush1.bf16.msra.mxu0 0
      %4024 = vmatprep.subr.bf16.mxu0 0
      %4025 = vmatpush1.bf16.msra.mxu0 0
      %4026 = vmatprep.subr.bf16.mxu0 0
      %4027 = vmatpush1.bf16.msra.mxu0 0
      %4028 = vmatprep.subr.bf16.mxu0 0
      %4029 = vmatpush1.bf16.msra.mxu0 0
      %4030 = vmatprep.subr.bf16.mxu0 0
      %4031 = vmatpush1.bf16.msra.mxu0 0
      %4032 = vmatprep.mubr.bf16.mxu0 0
      %4033 = vmatmul.mubr.bf16.gmra.mrb[0].mxu0 %v3998
      %v4034 = vpop.f32.mrb[0].mxu0
      %v4035 = vadd.f32 0.0, %v4034
      %v4036 = vpop.f32.mrb[0].mxu0
      %v4037 = vpop.f32.mrb[0].mxu0
      %v4038 = vadd.f32 0.0, %v4037
      %v4039 = vpop.f32.mrb[0].mxu0
      %4040 = vdwg.mxu0
      %v4042 = vsel %vm1108, %v3951, 0
      %4044 = vmatprep.subr.bf16.mxu0 0
      %4045 = vmatpush1.bf16.msra.mxu0 %v3584
      %4046 = vmatprep.subr.bf16.mxu0 0
      %4047 = vmatpush1.bf16.msra.mxu0 0
      %4048 = vmatprep.subr.bf16.mxu0 0
      %4049 = vmatpush1.bf16.msra.mxu0 0
      %4050 = vmatprep.subr.bf16.mxu0 0
      %4051 = vmatpush1.bf16.msra.mxu0 0
      %4052 = vmatprep.subr.bf16.mxu0 0
      %4053 = vmatpush1.bf16.msra.mxu0 0
      %4054 = vmatprep.subr.bf16.mxu0 0
      %4055 = vmatpush1.bf16.msra.mxu0 0
      %4056 = vmatprep.subr.bf16.mxu0 0
      %4057 = vmatpush1.bf16.msra.mxu0 0
      %4058 = vmatprep.subr.bf16.mxu0 0
      %4059 = vmatpush1.bf16.msra.mxu0 0
      %4060 = vmatprep.subr.bf16.mxu0 0
      %4061 = vmatpush1.bf16.msra.mxu0 0
      %4062 = vmatprep.subr.bf16.mxu0 0
      %4063 = vmatpush1.bf16.msra.mxu0 0
      %4064 = vmatprep.subr.bf16.mxu0 0
      %4065 = vmatpush1.bf16.msra.mxu0 0
      %4066 = vmatprep.subr.bf16.mxu0 0
      %4067 = vmatpush1.bf16.msra.mxu0 0
      %4068 = vmatprep.subr.bf16.mxu0 0
      %4069 = vmatpush1.bf16.msra.mxu0 0
      %4070 = vmatprep.subr.bf16.mxu0 0
      %4071 = vmatpush1.bf16.msra.mxu0 0
      %4072 = vmatprep.subr.bf16.mxu0 0
      %4073 = vmatpush1.bf16.msra.mxu0 0
      %4074 = vmatprep.subr.bf16.mxu0 0
      %4075 = vmatpush1.bf16.msra.mxu0 0
      %4076 = vmatprep.mubr.bf16.mxu0 0
      %4077 = vmatmul.mubr.bf16.gmra.mrb[0].mxu0 %v4042
      %v4078 = vpop.f32.mrb[0].mxu0
      %v4079 = vadd.f32 0.0, %v4078
      %v4080 = vpop.f32.mrb[0].mxu0
      %v4081 = vpop.f32.mrb[0].mxu0
      %v4082 = vadd.f32 0.0, %v4081
      %v4083 = vpop.f32.mrb[0].mxu0
      %4084 = vdwg.mxu0
      %v4086 = vsel %vm1108, %v3952, 0
      %4088 = vmatprep.subr.bf16.mxu0 0
      %4089 = vmatpush1.bf16.msra.mxu0 %v3631
      %4090 = vmatprep.subr.bf16.mxu0 0
      %4091 = vmatpush1.bf16.msra.mxu0 0
      %4092 = vmatprep.subr.bf16.mxu0 0
      %4093 = vmatpush1.bf16.msra.mxu0 0
      %4094 = vmatprep.subr.bf16.mxu0 0
      %4095 = vmatpush1.bf16.msra.mxu0 0
      %4096 = vmatprep.subr.bf16.mxu0 0
      %4097 = vmatpush1.bf16.msra.mxu0 0
      %4098 = vmatprep.subr.bf16.mxu0 0
      %4099 = vmatpush1.bf16.msra.mxu0 0
      %4100 = vmatprep.subr.bf16.mxu0 0
      %4101 = vmatpush1.bf16.msra.mxu0 0
      %4102 = vmatprep.subr.bf16.mxu0 0
      %4103 = vmatpush1.bf16.msra.mxu0 0
      %4104 = vmatprep.subr.bf16.mxu0 0
      %4105 = vmatpush1.bf16.msra.mxu0 0
      %4106 = vmatprep.subr.bf16.mxu0 0
      %4107 = vmatpush1.bf16.msra.mxu0 0
      %4108 = vmatprep.subr.bf16.mxu0 0
      %4109 = vmatpush1.bf16.msra.mxu0 0
      %4110 = vmatprep.subr.bf16.mxu0 0
      %4111 = vmatpush1.bf16.msra.mxu0 0
      %4112 = vmatprep.subr.bf16.mxu0 0
      %4113 = vmatpush1.bf16.msra.mxu0 0
      %4114 = vmatprep.subr.bf16.mxu0 0
      %4115 = vmatpush1.bf16.msra.mxu0 0
      %4116 = vmatprep.subr.bf16.mxu0 0
      %4117 = vmatpush1.bf16.msra.mxu0 0
      %4118 = vmatprep.subr.bf16.mxu0 0
      %4119 = vmatpush1.bf16.msra.mxu0 0
      %4120 = vmatprep.mubr.bf16.mxu0 0
      %4121 = vmatmul.mubr.bf16.gmra.mrb[0].mxu0 %v4086
      %v4122 = vpop.f32.mrb[0].mxu0
      %v4123 = vadd.f32 0.0, %v4122
      %v4124 = vpop.f32.mrb[0].mxu0
      %v4125 = vpop.f32.mrb[0].mxu0
      %v4126 = vadd.f32 0.0, %v4125
      %v4127 = vpop.f32.mrb[0].mxu0
      %4128 = vdwg.mxu0
      %4137 = vrot.lane.b32.xlu0 %v3055, 8
      %v4138 = vpop.permute.xlu0 %4137
      %4139 = vrot.lane.b32.xlu0 %v3058, 8
      %v4140 = vpop.permute.xlu0 %4139
      %4141 = vrot.lane.b32.xlu0 %v3099, 8
      %v4142 = vpop.permute.xlu0 %4141
      %4143 = vrot.lane.b32.xlu0 %v3102, 8
      %v4144 = vpop.permute.xlu0 %4143
      %4145 = vrot.lane.b32.xlu0 %v3143, 8
      %v4146 = vpop.permute.xlu0 %4145
      %4147 = vrot.lane.b32.xlu0 %v3146, 8
      %v4148 = vpop.permute.xlu0 %4147
      %4149 = vrot.lane.b32.xlu0 %v3187, 8
      %v4150 = vpop.permute.xlu0 %4149
      %4151 = vrot.lane.b32.xlu0 %v3190, 8
      %v4152 = vpop.permute.xlu0 %4151
      %4169 = vrot.lane.b32.xlu0 %v3530, 16
      %v4170 = vpop.permute.xlu0 %4169
      %4171 = vrot.lane.b32.xlu0 %v3533, 16
      %v4172 = vpop.permute.xlu0 %4171
      %4173 = vrot.lane.b32.xlu0 %v3577, 16
      %v4174 = vpop.permute.xlu0 %4173
      %4175 = vrot.lane.b32.xlu0 %v3580, 16
      %v4176 = vpop.permute.xlu0 %4175
      %4177 = vrot.lane.b32.xlu0 %v3624, 16
      %v4178 = vpop.permute.xlu0 %4177
      %4179 = vrot.lane.b32.xlu0 %v3627, 16
      %v4180 = vpop.permute.xlu0 %4179
      %4181 = vrot.lane.b32.xlu0 %v3671, 16
      %v4182 = vpop.permute.xlu0 %4181
      %4183 = vrot.lane.b32.xlu0 %v3674, 16
      %v4184 = vpop.permute.xlu0 %4183
      %4201 = vrot.lane.b32.xlu0 %v3991, 24
      %v4202 = vpop.permute.xlu0 %4201
      %4203 = vrot.lane.b32.xlu0 %v3994, 24
      %v4204 = vpop.permute.xlu0 %4203
      %4205 = vrot.lane.b32.xlu0 %v4035, 24
      %v4206 = vpop.permute.xlu0 %4205
      %4207 = vrot.lane.b32.xlu0 %v4038, 24
      %v4208 = vpop.permute.xlu0 %4207
      %4209 = vrot.lane.b32.xlu0 %v4079, 24
      %v4210 = vpop.permute.xlu0 %4209
      %4211 = vrot.lane.b32.xlu0 %v4082, 24
      %v4212 = vpop.permute.xlu0 %4211
      %4213 = vrot.lane.b32.xlu0 %v4123, 24
      %v4214 = vpop.permute.xlu0 %4213
      %4215 = vrot.lane.b32.xlu0 %v4126, 24
      %v4216 = vpop.permute.xlu0 %4215
      %v4225 = vsel %vm2259, %v2590, %v4138
      %v4226 = vsel %vm2259, %v2593, %v4140
      %v4227 = vsel %vm2259, %v2637, %v4142
      %v4228 = vsel %vm2259, %v2640, %v4144
      %v4229 = vsel %vm2259, %v2684, %v4146
      %v4230 = vsel %vm2259, %v2687, %v4148
      %v4231 = vsel %vm2259, %v2731, %v4150
      %v4232 = vsel %vm2259, %v2734, %v4152
      %v4233 = vsel %vm1108, %v4225, %v4170
      %v4234 = vsel %vm1108, %v4226, %v4172
      %v4235 = vsel %vm1108, %v4227, %v4174
      %v4236 = vsel %vm1108, %v4228, %v4176
      %v4237 = vsel %vm1108, %v4229, %v4178
      %v4238 = vsel %vm1108, %v4230, %v4180
      %v4239 = vsel %vm1108, %v4231, %v4182
      %v4240 = vsel %vm1108, %v4232, %v4184
      %vm4241 = vcmask 195584
      %v4242 = vsel %vm4241, %v4233, %v4202
      %v4243 = vsel %vm4241, %v4234, %v4204
      %v4244 = vsel %vm4241, %v4235, %v4206
      %v4245 = vsel %vm4241, %v4236, %v4208
      %v4246 = vsel %vm4241, %v4237, %v4210
      %v4247 = vsel %vm4241, %v4238, %v4212
      %v4248 = vsel %vm4241, %v4239, %v4214
      %v4249 = vsel %vm4241, %v4240, %v4216
      %v4250 = vpack.c.bf16 %v4243, %v4242
      %v4251 = vpack.c.bf16 %v4245, %v4244
      %v4252 = vpack.c.bf16 %v4247, %v4246
      %v4253 = vpack.c.bf16 %v4249, %v4248
      %v4254 = vld [vmem:[%s21] sm:$0xf]
      %v4255 = vld [vmem:[%s21 + $0x4] sm:$0xf]
      %v4256 = vld [vmem:[%s21 + $0x8] sm:$0xf]
      %v4257 = vld [vmem:[%s21 + $0xc] sm:$0xf]
      %v4258 = vld [vmem:[%s22] sm:$0x1]
      %v4260 = vlaneseq
      %v4261 = vshrl.u32 %v4260, 7
      %v4262 = vsub.s32 0, %v4261
      %v4263 = vrot.slane %v4258, %v4262
      %v4269 = vunpack.c.l.b16 %v4254
      %v4270 = vunpack.c.l.b16 %v4255
      %v4271 = vunpack.c.l.b16 %v4256
      %v4272 = vunpack.c.l.b16 %v4257
      %v4273 = vpack.c.b16 %v4270, %v4269
      %v4274 = vpack.c.b16 %v4272, %v4271
      %v4278 = vsel %vm864, %v4250, 0
      %v4281 = vsel %vm864, %v4251, 0
      %v4284 = vsel %vm864, %v4252, 0
      %v4287 = vsel %vm864, %v4253, 0
      %4289 = vmatprep.subr.bf16.mxu0 0
      %4290 = vmatpush1.bf16.msra.mxu0 %v4273
      %4291 = vmatprep.subr.bf16.mxu0 0
      %4292 = vmatpush1.bf16.msra.mxu0 %v4274
      %4293 = vmatprep.subr.bf16.mxu0 0
      %4294 = vmatpush1.bf16.msra.mxu0 0
      %4295 = vmatprep.subr.bf16.mxu0 0
      %4296 = vmatpush1.bf16.msra.mxu0 0
      %4297 = vmatprep.subr.bf16.mxu0 0
      %4298 = vmatpush1.bf16.msra.mxu0 0
      %4299 = vmatprep.subr.bf16.mxu0 0
      %4300 = vmatpush1.bf16.msra.mxu0 0
      %4301 = vmatprep.subr.bf16.mxu0 0
      %4302 = vmatpush1.bf16.msra.mxu0 0
      %4303 = vmatprep.subr.bf16.mxu0 0
      %4304 = vmatpush1.bf16.msra.mxu0 0
      %4305 = vmatprep.subr.bf16.mxu0 0
      %4306 = vmatpush1.bf16.msra.mxu0 0
      %4307 = vmatprep.subr.bf16.mxu0 0
      %4308 = vmatpush1.bf16.msra.mxu0 0
      %4309 = vmatprep.subr.bf16.mxu0 0
      %4310 = vmatpush1.bf16.msra.mxu0 0
      %4311 = vmatprep.subr.bf16.mxu0 0
      %4312 = vmatpush1.bf16.msra.mxu0 0
      %4313 = vmatprep.subr.bf16.mxu0 0
      %4314 = vmatpush1.bf16.msra.mxu0 0
      %4315 = vmatprep.subr.bf16.mxu0 0
      %4316 = vmatpush1.bf16.msra.mxu0 0
      %4317 = vmatprep.subr.bf16.mxu0 0
      %4318 = vmatpush1.bf16.msra.mxu0 0
      %4319 = vmatprep.subr.bf16.mxu0 0
      %4320 = vmatpush1.bf16.msra.mxu0 0
      %4321 = vmatprep.mubr.bf16.mxu0 0
      %4322 = vmatmul.mubr.bf16.gmra.mrb[0].mxu0 %v4278
      %v4323 = vpop.f32.mrb[0].mxu0
      %v4324 = vadd.f32 %v4263, %v4323
      %v4325 = vpop.f32.mrb[0].mxu0
      %v4326 = vpop.f32.mrb[0].mxu0
      %v4327 = vadd.f32 %v4263, %v4326
      %v4328 = vpop.f32.mrb[0].mxu0
      %4329 = vmatprep.mubr.bf16.mxu0 0
      %4330 = vmatmul.mubr.bf16.gmra.mrb[0].mxu0 %v4281
      %v4331 = vpop.f32.mrb[0].mxu0
      %v4332 = vadd.f32 %v4263, %v4331
      %v4333 = vpop.f32.mrb[0].mxu0
      %v4334 = vpop.f32.mrb[0].mxu0
      %v4335 = vadd.f32 %v4263, %v4334
      %v4336 = vpop.f32.mrb[0].mxu0
      %4337 = vmatprep.mubr.bf16.mxu0 0
      %4338 = vmatmul.mubr.bf16.gmra.mrb[0].mxu0 %v4284
      %v4339 = vpop.f32.mrb[0].mxu0
      %v4340 = vadd.f32 %v4263, %v4339
      %v4341 = vpop.f32.mrb[0].mxu0
      %v4342 = vpop.f32.mrb[0].mxu0
      %v4343 = vadd.f32 %v4263, %v4342
      %v4344 = vpop.f32.mrb[0].mxu0
      %4345 = vmatprep.mubr.bf16.mxu0 0
      %4346 = vmatmul.mubr.bf16.gmra.mrb[0].mxu0 %v4287
      %v4347 = vpop.f32.mrb[0].mxu0
      %v4348 = vadd.f32 %v4263, %v4347
      %v4349 = vpop.f32.mrb[0].mxu0
      %v4350 = vpop.f32.mrb[0].mxu0
      %v4351 = vadd.f32 %v4263, %v4350
      %v4352 = vpop.f32.mrb[0].mxu0
      %4353 = vdwg.mxu0
      %v4354 = vadd.f32 %v4324, %v2103
      %v4355 = vadd.f32 %v4327, %v2104
      %v4356 = vadd.f32 %v4332, %v849
      %v4357 = vadd.f32 %v4335, %v850
      %v4358 = vadd.f32 %v4340, %v851
      %v4359 = vadd.f32 %v4343, %v852
      %v4360 = vadd.f32 %v4348, %v853
      %v4361 = vadd.f32 %v4351, %v854
      %v4362 = vpack.c.bf16 %v4355, %v4354
      %v4363 = vpack.c.bf16 %v4357, %v4356
      %v4364 = vpack.c.bf16 %v4359, %v4358
      %v4365 = vpack.c.bf16 %v4361, %v4360
      %v4366 = vld [vmem:[%s23] sm:$0xf]
      %v4367 = vld [vmem:[%s23 + $0x4] sm:$0xf]
      %v4368 = vld [vmem:[%s23 + $0x8] sm:$0xf]
      %v4369 = vld [vmem:[%s23 + $0xc] sm:$0xf]
      %v4370 = vld [vmem:[%s24] sm:$0x1]
      %v4372 = vlaneseq
      %v4373 = vshrl.u32 %v4372, 7
      %v4374 = vsub.s32 0, %v4373
      %v4375 = vrot.slane %v4370, %v4374
      %v4381 = vunpack.c.l.b16 %v4366
      %v4382 = vunpack.c.l.b16 %v4367
      %v4383 = vunpack.c.l.b16 %v4368
      %v4384 = vunpack.c.l.b16 %v4369
      %v4385 = vpack.c.b16 %v4382, %v4381
      %v4386 = vpack.c.b16 %v4384, %v4383
      %v4390 = vsel %vm864, %v4362, 0
      %v4393 = vsel %vm864, %v4363, 0
      %v4396 = vsel %vm864, %v4364, 0
      %v4399 = vsel %vm864, %v4365, 0
      %4401 = vmatprep.subr.bf16.mxu0 0
      %4402 = vmatpush1.bf16.msra.mxu0 %v4385
      %4403 = vmatprep.subr.bf16.mxu0 0
      %4404 = vmatpush1.bf16.msra.mxu0 %v4386
      %4405 = vmatprep.subr.bf16.mxu0 0
      %4406 = vmatpush1.bf16.msra.mxu0 0
      %4407 = vmatprep.subr.bf16.mxu0 0
      %4408 = vmatpush1.bf16.msra.mxu0 0
      %4409 = vmatprep.subr.bf16.mxu0 0
      %4410 = vmatpush1.bf16.msra.mxu0 0
      %4411 = vmatprep.subr.bf16.mxu0 0
      %4412 = vmatpush1.bf16.msra.mxu0 0
      %4413 = vmatprep.subr.bf16.mxu0 0
      %4414 = vmatpush1.bf16.msra.mxu0 0
      %4415 = vmatprep.subr.bf16.mxu0 0
      %4416 = vmatpush1.bf16.msra.mxu0 0
      %4417 = vmatprep.subr.bf16.mxu0 0
      %4418 = vmatpush1.bf16.msra.mxu0 0
      %4419 = vmatprep.subr.bf16.mxu0 0
      %4420 = vmatpush1.bf16.msra.mxu0 0
      %4421 = vmatprep.subr.bf16.mxu0 0
      %4422 = vmatpush1.bf16.msra.mxu0 0
      %4423 = vmatprep.subr.bf16.mxu0 0
      %4424 = vmatpush1.bf16.msra.mxu0 0
      %4425 = vmatprep.subr.bf16.mxu0 0
      %4426 = vmatpush1.bf16.msra.mxu0 0
      %4427 = vmatprep.subr.bf16.mxu0 0
      %4428 = vmatpush1.bf16.msra.mxu0 0
      %4429 = vmatprep.subr.bf16.mxu0 0
      %4430 = vmatpush1.bf16.msra.mxu0 0
      %4431 = vmatprep.subr.bf16.mxu0 0
      %4432 = vmatpush1.bf16.msra.mxu0 0
      %4433 = vmatprep.mubr.bf16.mxu0 0
      %4434 = vmatmul.mubr.bf16.gmra.mrb[0].mxu0 %v4390
      %v4435 = vpop.f32.mrb[0].mxu0
      %v4436 = vadd.f32 %v4375, %v4435
      %v4437 = vpop.f32.mrb[0].mxu0
      %v4438 = vpop.f32.mrb[0].mxu0
      %v4439 = vadd.f32 %v4375, %v4438
      %v4440 = vpop.f32.mrb[0].mxu0
      %4441 = vmatprep.mubr.bf16.mxu0 0
      %4442 = vmatmul.mubr.bf16.gmra.mrb[0].mxu0 %v4393
      %v4443 = vpop.f32.mrb[0].mxu0
      %v4444 = vadd.f32 %v4375, %v4443
      %v4445 = vpop.f32.mrb[0].mxu0
      %v4446 = vpop.f32.mrb[0].mxu0
      %v4447 = vadd.f32 %v4375, %v4446
      %v4448 = vpop.f32.mrb[0].mxu0
      %4449 = vmatprep.mubr.bf16.mxu0 0
      %4450 = vmatmul.mubr.bf16.gmra.mrb[0].mxu0 %v4396
      %v4451 = vpop.f32.mrb[0].mxu0
      %v4452 = vadd.f32 %v4375, %v4451
      %v4453 = vpop.f32.mrb[0].mxu0
      %v4454 = vpop.f32.mrb[0].mxu0
      %v4455 = vadd.f32 %v4375, %v4454
      %v4456 = vpop.f32.mrb[0].mxu0
      %4457 = vmatprep.mubr.bf16.mxu0 0
      %4458 = vmatmul.mubr.bf16.gmra.mrb[0].mxu0 %v4399
      %v4459 = vpop.f32.mrb[0].mxu0
      %v4460 = vadd.f32 %v4375, %v4459
      %v4461 = vpop.f32.mrb[0].mxu0
      %v4462 = vpop.f32.mrb[0].mxu0
      %v4463 = vadd.f32 %v4375, %v4462
      %v4464 = vpop.f32.mrb[0].mxu0
      %4465 = vdwg.mxu0
      %v4466 = vxor.u32 %v4436, 2147483648
      %v4467 = vxor.u32 %v4439, 2147483648
      %v4468 = vxor.u32 %v4444, 2147483648
      %v4469 = vxor.u32 %v4447, 2147483648
      %v4470 = vxor.u32 %v4452, 2147483648
      %v4471 = vxor.u32 %v4455, 2147483648
      %v4472 = vxor.u32 %v4460, 2147483648
      %v4473 = vxor.u32 %v4463, 2147483648
      %v4474 = vmul.f32 %v4466, 1.442695
      %v4475 = vpow.pop %v4474
      %v4476 = vmul.f32 %v4467, 1.442695
      %v4477 = vpow.pop %v4476
      %v4478 = vmul.f32 %v4468, 1.442695
      %v4479 = vpow.pop %v4478
      %v4480 = vmul.f32 %v4469, 1.442695
      %v4481 = vpow.pop %v4480
      %v4482 = vmul.f32 %v4470, 1.442695
      %v4483 = vpow.pop %v4482
      %v4484 = vmul.f32 %v4471, 1.442695
      %v4485 = vpow.pop %v4484
      %v4486 = vmul.f32 %v4472, 1.442695
      %v4487 = vpow.pop %v4486
      %v4488 = vmul.f32 %v4473, 1.442695
      %v4489 = vpow.pop %v4488
      %v4490 = vadd.f32 %v4475, 1.0
      %v4491 = vadd.f32 %v4477, 1.0
      %v4492 = vadd.f32 %v4479, 1.0
      %v4493 = vadd.f32 %v4481, 1.0
      %v4494 = vadd.f32 %v4483, 1.0
      %v4495 = vadd.f32 %v4485, 1.0
      %v4496 = vadd.f32 %v4487, 1.0
      %v4497 = vadd.f32 %v4489, 1.0
      %v4498 = vrcp.pop %v4490
      %v4499 = vmul.f32 1.0, %v4498
      %v4500 = vrcp.pop %v4491
      %v4501 = vmul.f32 1.0, %v4500
      %v4502 = vrcp.pop %v4492
      %v4503 = vmul.f32 1.0, %v4502
      %v4504 = vrcp.pop %v4493
      %v4505 = vmul.f32 1.0, %v4504
      %v4506 = vrcp.pop %v4494
      %v4507 = vmul.f32 1.0, %v4506
      %v4508 = vrcp.pop %v4495
      %v4509 = vmul.f32 1.0, %v4508
      %v4510 = vrcp.pop %v4496
      %v4511 = vmul.f32 1.0, %v4510
      %v4512 = vrcp.pop %v4497
      %v4513 = vmul.f32 1.0, %v4512
      %v4514 = vmul.f32 %v4436, %v4499
      %v4515 = vmul.f32 %v4439, %v4501
      %v4516 = vmul.f32 %v4444, %v4503
      %v4517 = vmul.f32 %v4447, %v4505
      %v4518 = vmul.f32 %v4452, %v4507
      %v4519 = vmul.f32 %v4455, %v4509
      %v4520 = vmul.f32 %v4460, %v4511
      %v4521 = vmul.f32 %v4463, %v4513
      %v4522 = vpack.c.bf16 %v4515, %v4514
      %v4523 = vpack.c.bf16 %v4517, %v4516
      %v4524 = vpack.c.bf16 %v4519, %v4518
      %v4525 = vpack.c.bf16 %v4521, %v4520
      %v4526 = vld [vmem:[%s25] sm:$0xf]
      %v4527 = vld [vmem:[%s25 + $0x4] sm:$0xf]
      %v4528 = vld [vmem:[%s25 + $0x8] sm:$0xf]
      %v4529 = vld [vmem:[%s25 + $0xc] sm:$0xf]
      %v4530 = vld [vmem:[%s25 + $0x10] sm:$0xf]
      %v4531 = vld [vmem:[%s25 + $0x14] sm:$0xf]
      %v4532 = vld [vmem:[%s25 + $0x18] sm:$0xf]
      %v4533 = vld [vmem:[%s25 + $0x1c] sm:$0xf]
      %v4534 = vld [vmem:[%s25 + $0x20] sm:$0xf]
      %v4535 = vld [vmem:[%s25 + $0x24] sm:$0xf]
      %v4536 = vld [vmem:[%s25 + $0x28] sm:$0xf]
      %v4537 = vld [vmem:[%s25 + $0x2c] sm:$0xf]
      %v4538 = vld [vmem:[%s25 + $0x30] sm:$0xf]
      %v4539 = vld [vmem:[%s25 + $0x34] sm:$0xf]
      %v4540 = vld [vmem:[%s25 + $0x38] sm:$0xf]
      %v4541 = vld [vmem:[%s25 + $0x3c] sm:$0xf]
      %v4542 = vld [vmem:[%s26] sm:$0x1]
      %v4544 = vlaneseq
      %v4545 = vshrl.u32 %v4544, 7
      %v4546 = vsub.s32 0, %v4545
      %v4547 = vrot.slane %v4542, %v4546
      %v4565 = vunpack.c.l.b16 %v4526
      %v4566 = vunpack.c.l.b16 %v4527
      %v4567 = vunpack.c.l.b16 %v4528
      %v4568 = vunpack.c.l.b16 %v4529
      %v4569 = vunpack.c.l.b16 %v4530
      %v4570 = vunpack.c.l.b16 %v4531
      %v4571 = vunpack.c.l.b16 %v4532
      %v4572 = vunpack.c.l.b16 %v4533
      %v4573 = vunpack.c.l.b16 %v4534
      %v4574 = vunpack.c.l.b16 %v4535
      %v4575 = vunpack.c.l.b16 %v4536
      %v4576 = vunpack.c.l.b16 %v4537
      %v4577 = vunpack.c.l.b16 %v4538
      %v4578 = vunpack.c.l.b16 %v4539
      %v4579 = vunpack.c.l.b16 %v4540
      %v4580 = vunpack.c.l.b16 %v4541
      %v4581 = vpack.c.b16 %v4566, %v4565
      %v4582 = vpack.c.b16 %v4568, %v4567
      %v4583 = vpack.c.b16 %v4570, %v4569
      %v4584 = vpack.c.b16 %v4572, %v4571
      %v4585 = vpack.c.b16 %v4574, %v4573
      %v4586 = vpack.c.b16 %v4576, %v4575
      %v4587 = vpack.c.b16 %v4578, %v4577
      %v4588 = vpack.c.b16 %v4580, %v4579
      %4597 = vmatprep.subr.bf16.mxu0 0
      %4598 = vmatpush1.bf16.msra.mxu0 %v4581
      %4599 = vmatprep.subr.bf16.mxu0 0
      %4600 = vmatpush1.bf16.msra.mxu0 %v4582
      %4601 = vmatprep.subr.bf16.mxu0 0
      %4602 = vmatpush1.bf16.msra.mxu0 %v4583
      %4603 = vmatprep.subr.bf16.mxu0 0
      %4604 = vmatpush1.bf16.msra.mxu0 %v4584
      %4605 = vmatprep.subr.bf16.mxu0 0
      %4606 = vmatpush1.bf16.msra.mxu0 %v4585
      %4607 = vmatprep.subr.bf16.mxu0 0
      %4608 = vmatpush1.bf16.msra.mxu0 %v4586
      %4609 = vmatprep.subr.bf16.mxu0 0
      %4610 = vmatpush1.bf16.msra.mxu0 %v4587
      %4611 = vmatprep.subr.bf16.mxu0 0
      %4612 = vmatpush1.bf16.msra.mxu0 %v4588
      %4613 = vmatprep.subr.bf16.mxu0 0
      %4614 = vmatpush1.bf16.msra.mxu0 0
      %4615 = vmatprep.subr.bf16.mxu0 0
      %4616 = vmatpush1.bf16.msra.mxu0 0
      %4617 = vmatprep.subr.bf16.mxu0 0
      %4618 = vmatpush1.bf16.msra.mxu0 0
      %4619 = vmatprep.subr.bf16.mxu0 0
      %4620 = vmatpush1.bf16.msra.mxu0 0
      %4621 = vmatprep.subr.bf16.mxu0 0
      %4622 = vmatpush1.bf16.msra.mxu0 0
      %4623 = vmatprep.subr.bf16.mxu0 0
      %4624 = vmatpush1.bf16.msra.mxu0 0
      %4625 = vmatprep.subr.bf16.mxu0 0
      %4626 = vmatpush1.bf16.msra.mxu0 0
      %4627 = vmatprep.subr.bf16.mxu0 0
      %4628 = vmatpush1.bf16.msra.mxu0 0
      %4629 = vmatprep.mubr.bf16.mxu0 0
      %4630 = vmatmul.mubr.bf16.gmra.mrb[0].mxu0 %v4522
      %v4631 = vpop.f32.mrb[0].mxu0
      %v4632 = vadd.f32 %v4547, %v4631
      %v4633 = vpop.f32.mrb[0].mxu0
      %v4634 = vpop.f32.mrb[0].mxu0
      %v4635 = vadd.f32 %v4547, %v4634
      %v4636 = vpop.f32.mrb[0].mxu0
      %4637 = vmatprep.mubr.bf16.mxu0 0
      %4638 = vmatmul.mubr.bf16.gmra.mrb[0].mxu0 %v4523
      %v4639 = vpop.f32.mrb[0].mxu0
      %v4640 = vadd.f32 %v4547, %v4639
      %v4641 = vpop.f32.mrb[0].mxu0
      %v4642 = vpop.f32.mrb[0].mxu0
      %v4643 = vadd.f32 %v4547, %v4642
      %v4644 = vpop.f32.mrb[0].mxu0
      %4645 = vmatprep.mubr.bf16.mxu0 0
      %4646 = vmatmul.mubr.bf16.gmra.mrb[0].mxu0 %v4524
      %v4647 = vpop.f32.mrb[0].mxu0
      %v4648 = vadd.f32 %v4547, %v4647
      %v4649 = vpop.f32.mrb[0].mxu0
      %v4650 = vpop.f32.mrb[0].mxu0
      %v4651 = vadd.f32 %v4547, %v4650
      %v4652 = vpop.f32.mrb[0].mxu0
      %4653 = vmatprep.mubr.bf16.mxu0 0
      %4654 = vmatmul.mubr.bf16.gmra.mrb[0].mxu0 %v4525
      %v4655 = vpop.f32.mrb[0].mxu0
      %v4656 = vadd.f32 %v4547, %v4655
      %v4657 = vpop.f32.mrb[0].mxu0
      %v4658 = vpop.f32.mrb[0].mxu0
      %v4659 = vadd.f32 %v4547, %v4658
      %v4660 = vpop.f32.mrb[0].mxu0
      %4661 = vdwg.mxu0
      %v4662 = vadd.f32 %v4632, %v4354
      %v4663 = vadd.f32 %v4635, %v4355
      %v4664 = vadd.f32 %v4640, %v4356
      %v4665 = vadd.f32 %v4643, %v4357
      %v4666 = vadd.f32 %v4648, %v4358
      %v4667 = vadd.f32 %v4651, %v4359
      %v4668 = vadd.f32 %v4656, %v4360
      %v4669 = vadd.f32 %v4659, %v4361
      %v4670 = vld [vmem:[%s27] sm:$0x1]
      %v4671 = vmul.f32 %v4662, %v4662
      %v4672 = vmul.f32 %v4663, %v4663
      %v4673 = vmul.f32 %v4664, %v4664
      %v4674 = vmul.f32 %v4665, %v4665
      %v4675 = vmul.f32 %v4666, %v4666
      %v4676 = vmul.f32 %v4667, %v4667
      %v4677 = vmul.f32 %v4668, %v4668
      %v4678 = vmul.f32 %v4669, %v4669
      %v4679 = vsel %vm864, %v4671, 0.0
      %4680 = vadd.xlane.f32.xlu0 %v4679
      %v4681 = vpop.xlane.xlu0 %4680
      %v4682 = vsel %vm864, %v4672, 0.0
      %4683 = vadd.xlane.f32.xlu0 %v4682
      %v4684 = vpop.xlane.xlu0 %4683
      %v4685 = vsel %vm864, %v4673, 0.0
      %4686 = vadd.xlane.f32.xlu0 %v4685
      %v4687 = vpop.xlane.xlu0 %4686
      %v4688 = vsel %vm864, %v4674, 0.0
      %4689 = vadd.xlane.f32.xlu0 %v4688
      %v4690 = vpop.xlane.xlu0 %4689
      %v4691 = vsel %vm864, %v4675, 0.0
      %4692 = vadd.xlane.f32.xlu0 %v4691
      %v4693 = vpop.xlane.xlu0 %4692
      %v4694 = vsel %vm864, %v4676, 0.0
      %4695 = vadd.xlane.f32.xlu0 %v4694
      %v4696 = vpop.xlane.xlu0 %4695
      %v4697 = vsel %vm864, %v4677, 0.0
      %4698 = vadd.xlane.f32.xlu0 %v4697
      %v4699 = vpop.xlane.xlu0 %4698
      %v4700 = vsel %vm864, %v4678, 0.0
      %4701 = vadd.xlane.f32.xlu0 %v4700
      %v4702 = vpop.xlane.xlu0 %4701
      %v4703 = vmul.f32 %v4681, %v889
      %v4704 = vmul.f32 %v4684, %v889
      %v4705 = vmul.f32 %v4687, %v889
      %v4706 = vmul.f32 %v4690, %v889
      %v4707 = vmul.f32 %v4693, %v889
      %v4708 = vmul.f32 %v4696, %v889
      %v4709 = vmul.f32 %v4699, %v889
      %v4710 = vmul.f32 %v4702, %v889
      %v4711 = vadd.f32 %v4703, 1e-06
      %v4712 = vadd.f32 %v4704, 1e-06
      %v4713 = vadd.f32 %v4705, 1e-06
      %v4714 = vadd.f32 %v4706, 1e-06
      %v4715 = vadd.f32 %v4707, 1e-06
      %v4716 = vadd.f32 %v4708, 1e-06
      %v4717 = vadd.f32 %v4709, 1e-06
      %v4718 = vadd.f32 %v4710, 1e-06
      %v4719 = vrsqrt.pop %v4711
      %v4720 = vrsqrt.pop %v4712
      %v4721 = vrsqrt.pop %v4713
      %v4722 = vrsqrt.pop %v4714
      %v4723 = vrsqrt.pop %v4715
      %v4724 = vrsqrt.pop %v4716
      %v4725 = vrsqrt.pop %v4717
      %v4726 = vrsqrt.pop %v4718
      %v4727 = vmul.f32 %v4662, %v4719
      %v4728 = vmul.f32 %v4663, %v4720
      %v4729 = vmul.f32 %v4664, %v4721
      %v4730 = vmul.f32 %v4665, %v4722
      %v4731 = vmul.f32 %v4666, %v4723
      %v4732 = vmul.f32 %v4667, %v4724
      %v4733 = vmul.f32 %v4668, %v4725
      %v4734 = vmul.f32 %v4669, %v4726
      %v4736 = vlaneseq
      %v4737 = vshrl.u32 %v4736, 7
      %v4738 = vsub.s32 0, %v4737
      %v4739 = vrot.slane %v4670, %v4738
      %v4741 = vmul.f32 %v4727, %v4739
      %v4742 = vmul.f32 %v4728, %v4739
      %v4743 = vmul.f32 %v4729, %v4739
      %v4744 = vmul.f32 %v4730, %v4739
      %v4745 = vmul.f32 %v4731, %v4739
      %v4746 = vmul.f32 %v4732, %v4739
      %v4747 = vmul.f32 %v4733, %v4739
      %v4748 = vmul.f32 %v4734, %v4739
      %4749 = vst.msk [vmem:[%s845] sm:$0xff] %vm864, %v4741
      %4750 = vst.msk [vmem:[%s845 + $0x8] sm:$0xff] %vm864, %v4742
      %4751 = vst.msk [vmem:[%s845 + $0x10] sm:$0xff] %vm864, %v4743
      %4752 = vst.msk [vmem:[%s845 + $0x18] sm:$0xff] %vm864, %v4744
      %4753 = vst.msk [vmem:[%s845 + $0x20] sm:$0xff] %vm864, %v4745
      %4754 = vst.msk [vmem:[%s845 + $0x28] sm:$0xff] %vm864, %v4746
      %4755 = vst.msk [vmem:[%s845 + $0x30] sm:$0xff] %vm864, %v4747
      %4756 = vst.msk [vmem:[%s845 + $0x38] sm:$0xff] %vm864, %v4748
      %p4757 = scmp.lt.s32.totalorder %s39, 1
      %s4758 = scalar_select %p4757, %s39, 1
      %s4759 = smul.addr %s4758, 8
      %s4760 = smul.addr %s4759, 8
      %s4761 = scalar_lea.vmem %s28, %s4760
      // Predicated region
      $region133: #{model_forward.3} parent=131 // pred_check
        %p4762 = pneg %p650
      $region134: #{model_forward.3} parent=131 // pred_check_branch
        %4764 = sbr.rel (%p4762) target = $region136
      $region135: #{model_forward.3} parent=131 // pred_region
        _
      $region136: #{model_forward.3} parent=131 // pred_fallthru
        _
    $region132: #{model_forward.3} parent=5 // pred_fallthru
      _
    %p4765 = scmp.le.s32.totalorder 2, %s34
    // Predicated region
    $region137: #{model_forward.3} parent=5 // pred_check
      %p4766 = pneg %p4765
    $region138: #{model_forward.3} parent=5 // pred_check_branch
      %4768 = sbr.rel (%p4766) target = $region140
    $region139: #{model_forward.3} parent=5 // pred_region
      %s4769 = ssub.s32 %s34, 2
      // Predicated region
      $region141: #{model_forward.3} parent=139 // pred_check
        %p4770 = pneg %p656
      $region142: #{model_forward.3} parent=139 // pred_check_branch
        %4772 = sbr.rel (%p4770) target = $region144
      $region143: #{model_forward.3} parent=139 // pred_region
        %p4773 = scmp.lt.s32.totalorder %s40, 1
        %s4774 = scalar_select %p4773, %s40, 1
        %s4775 = smul.addr %s4774, 8
        %s4776 = smul.addr %s4775, 8
        %s4777 = scalar_lea.vmem %s28, %s4776
      $region144: #{model_forward.3} parent=139 // pred_fallthru
        _
    $region140: #{model_forward.3} parent=5 // pred_fallthru
      _
  $region6: #{model_forward.3} parent=0 // loop_footer
    %s38 = sadd.s32 1, %s34
  $region7: #{model_forward.3} parent=0 // loop_footer_branch
    %33 = sbr.rel target = $region3
  $region8: #{model_forward.3} parent=0 // loop_exit
    _

</llo_original>
